<compile_context>
chip_gen: v5e
topology: v5e:2x2
jax: 0.10.0
libtpu: 0.0.40
codegen_flags: <defaults>
</compile_context>

<pallas_src>
import functools

import jax
import jax.numpy as jnp
from jax import lax
from jax.experimental import pallas as pl
from jax.experimental.pallas import tpu as pltpu


# -----------------------------------------------------------------------------
# Kernel (activations after layer 1 are (features, batch_tile) = lane-dense)
# -----------------------------------------------------------------------------
def _disc_kernel(x_ref,
                 w1_ref, b1_ref,
                 w2_ref, b2_ref,
                 w3_ref, b3_ref,
                 w4_ref, b4_ref,
                 o_ref):
    # Layer 1: W1 (1024, D) contracted with x (tb, D) over D -> (1024, tb).
    # (in-kernel "transpose" of the small x tile via dot_general dimension numbers)
    h = lax.dot_general(
        w1_ref[...], x_ref[...],
        dimension_numbers=(((1,), (1,)), ((), ())),
        preferred_element_type=jnp.float32)
    h = jnp.maximum(h + b1_ref[...], 0.0)                     # (1024, tb) fused bias+ReLU

    # Layer 2: (512, 1024) @ (1024, tb)
    h = jnp.dot(w2_ref[...], h, preferred_element_type=jnp.float32)
    h = jnp.maximum(h + b2_ref[...], 0.0)                     # (512, tb)

    # Layer 3: (256, 512) @ (512, tb); fold the layer-4 weight multiply into the
    # epilogue so the (256, tb) tensor only gets one VPU pass.
    h = jnp.dot(w3_ref[...], h, preferred_element_type=jnp.float32)
    h = jnp.maximum(h + b3_ref[...], 0.0) * w4_ref[...]       # (256, tb)

    # Layer 4 finish: sublane reduction (XLU) -> lane-dense (1, tb) logits row.
    logits = jnp.sum(h, axis=0, keepdims=True) + b4_ref[...]  # (1, tb)

    # Sigmoid (exp on the EUP; divide is cheap on a (1, tb) row).
    probs = 1.0 / (1.0 + jnp.exp(-logits))
    o_ref[...] = probs.astype(o_ref.dtype)


# -----------------------------------------------------------------------------
# Tiling helpers
# -----------------------------------------------------------------------------
def _round_up(x, m):
    return (x + m - 1) // m * m


def _choose_tile(batch, tile_b):
    """Pick (tile, padded_batch).

    * tiny batch   -> single grid step, tile = 8-padded batch.
    * batch >= 256 -> at least two 128-aligned tiles so the parallel grid axis
                      can shard across both v7x TensorCores.
    * large batch  -> 128-aligned tiles of size ~tile_b.
    """
    b8 = _round_up(batch, 8)
    if b8 <= tile_b:
        if b8 >= 256:
            tb = _round_up(max(128, b8 // 2), 128)
            return tb, _round_up(b8, tb)
        return b8, b8
    tb = max(128, (tile_b // 128) * 128)
    return tb, _round_up(batch, tb)


# -----------------------------------------------------------------------------
# Wrapper
# -----------------------------------------------------------------------------
@functools.partial(jax.jit, static_argnames=("tile_b",))
def discriminator_forward(x, params, *, tile_b=512):
    """x: (B, input_dim) float32.  Returns (B, 1) float32 in [0, 1]."""
    (w1, b1), (w2, b2), (w3, b3), (w4, b4) = params
    B, D = x.shape
    tb, Bp = _choose_tile(B, tile_b)
    num_tiles = Bp // tb

    x = x.astype(jnp.float32)
    if Bp != B:                                   # cheap row pad only when needed
        x = jnp.pad(x, ((0, Bp - B), (0, 0)))     # (Bp, D)

    # Weights in (out_features, in_features), f32 (env rejects bf16 MXU dots).
    w1t = w1.T.astype(jnp.float32)                # (1024, D)
    w2t = w2.T.astype(jnp.float32)                # (512, 1024)
    w3t = w3.T.astype(jnp.float32)                # (256, 512)
    w4c = w4.astype(jnp.float32)                  # (256, 1)   (VPU/XLU path)
    b1t = b1.reshape(-1, 1).astype(jnp.float32)   # (1024, 1)
    b2t = b2.reshape(-1, 1).astype(jnp.float32)   # (512, 1)
    b3t = b3.reshape(-1, 1).astype(jnp.float32)   # (256, 1)
    b4t = b4.reshape(1, 1).astype(jnp.float32)    # (1, 1)

    def resident(arr):   # same (full) block every grid step -> stays in VMEM
        return pl.BlockSpec(arr.shape, lambda i: (0, 0))

    # VMEM budget: weights + per-tile activations, doubled for pipelining /
    # compiler scratch, clamped to [32 MiB, 48 MiB] (headroom on v7x's 64 MiB).
    weight_bytes = 4 * (1024 * D + 1024 + 512 * 1024 + 512
                        + 256 * 512 + 256 + 256 + 1)
    act_bytes = 4 * tb * (D + 1024 + 512 + 256 + 1)
    vmem_limit = int(min(48 * 1024 * 1024,
                         max(32 * 1024 * 1024, 2 * (weight_bytes + act_bytes))))

    cost = pl.CostEstimate(
        flops=2 * Bp * (D * 1024 + 1024 * 512 + 512 * 256 + 256),
        transcendentals=Bp,
        bytes_accessed=Bp * D * 4 + weight_bytes + Bp * 4,
    )

    out_row = pl.pallas_call(
        _disc_kernel,
        out_shape=jax.ShapeDtypeStruct((1, Bp), jnp.float32),
        grid_spec=pltpu.PrefetchScalarGridSpec(
            num_scalar_prefetch=0,
            grid=(num_tiles,),
            in_specs=[
                pl.BlockSpec((tb, D), lambda i: (i, 0)),        # x tile, native layout
                resident(w1t), resident(b1t),
                resident(w2t), resident(b2t),
                resident(w3t), resident(b3t),
                resident(w4c), resident(b4t),
            ],
            out_specs=pl.BlockSpec((1, tb), lambda i: (0, i)),  # lane-dense output row
        ),
        compiler_params=pltpu.CompilerParams(
            dimension_semantics=("parallel",),
            vmem_limit_bytes=vmem_limit,
        ),
        cost_estimate=cost,
    )(x, w1t, b1t, w2t, b2t, w3t, b3t, w4c, b4t)

    # (1, Bp) -> (Bp, 1) -> drop padding.
    return out_row.reshape(Bp, 1)[:B]


# -----------------------------------------------------------------------------
# Deterministic parameter init (PyTorch nn.Linear default: U(-1/sqrt(fan_in), +))
# -----------------------------------------------------------------------------
def init_params(key, input_dim):
    dims = [input_dim, 1024, 512, 256, 1]
    params = []
    for fan_in, fan_out in zip(dims[:-1], dims[1:]):
        key, kw, kb = jax.random.split(key, 3)
        bound = 1.0 / jnp.sqrt(fan_in)
        w = jax.random.uniform(kw, (fan_in, fan_out), jnp.float32, -bound, bound)
        b = jax.random.uniform(kb, (1, fan_out), jnp.float32, -bound, bound)
        params.append((w, b))
    return params


def reference_forward(x, params):
    h = x
    for i, (w, b) in enumerate(params):
        h = h @ w + b
        if i < len(params) - 1:
            h = jnp.maximum(h, 0.0)
    return jax.nn.sigmoid(h)


# -----------------------------------------------------------------------------
if __name__ == "__main__":
    key = jax.random.PRNGKey(0)
    k_x, k_p, k_x2 = jax.random.split(key, 3)

    input_dim = 64
    params = init_params(k_p, input_dim)

    # Small batch: single grid step (padded to sublane multiple).
    x_small = jax.random.normal(k_x, (8, input_dim), jnp.float32)
    out_small = jax.block_until_ready(discriminator_forward(x_small, params))
    ref_small = reference_forward(x_small, params)
    assert out_small.shape == (8, 1)
    assert jnp.max(jnp.abs(out_small - ref_small)) < 1e-3, "mismatch (small batch)"

    # Larger, non-multiple batch: exercises padding + multi-tile parallel grid.
    x_big = jax.random.normal(k_x2, (300, input_dim), jnp.float32)
    out_big = jax.block_until_ready(discriminator_forward(x_big, params))
    ref_big = reference_forward(x_big, params)
    assert out_big.shape == (300, 1)
    assert jnp.max(jnp.abs(out_big - ref_big)) < 1e-3, "mismatch (large batch)"

    print("KERNEL_OK")
</pallas_src>

<mosaic_0001>
module attributes {stable_mosaic.version = 11 : i64} {
  func.func @_disc_kernel(%arg0: i32, %arg1: memref<8x64xf32, #tpu.memory_space<vmem>>, %arg2: memref<1024x64xf32, #tpu.memory_space<vmem>>, %arg3: memref<1024x1xf32, #tpu.memory_space<vmem>>, %arg4: memref<512x1024xf32, #tpu.memory_space<vmem>>, %arg5: memref<512x1xf32, #tpu.memory_space<vmem>>, %arg6: memref<256x512xf32, #tpu.memory_space<vmem>>, %arg7: memref<256x1xf32, #tpu.memory_space<vmem>>, %arg8: memref<256x1xf32, #tpu.memory_space<vmem>>, %arg9: memref<1x1xf32, #tpu.memory_space<vmem>>, %arg10: memref<1x8xf32, #tpu.memory_space<vmem>>) attributes {dimension_semantics = [#tpu.dimension_semantics<parallel>], iteration_bounds = array<i64: 1>, scalar_prefetch = 0 : i64, scratch_operands = 0 : i64, tpu.core_type = #tpu.core_type<tc>, window_params = [{transform_indices = @transform_0, window_bounds = array<i64: 8, 64>}, {pipeline_mode = #tpu.pipeline_mode<synchronous>, transform_indices = @transform_1, window_bounds = array<i64: 1024, 64>}, {pipeline_mode = #tpu.pipeline_mode<synchronous>, transform_indices = @transform_2, window_bounds = array<i64: 1024, 1>}, {pipeline_mode = #tpu.pipeline_mode<synchronous>, transform_indices = @transform_3, window_bounds = array<i64: 512, 1024>}, {pipeline_mode = #tpu.pipeline_mode<synchronous>, transform_indices = @transform_4, window_bounds = array<i64: 512, 1>}, {pipeline_mode = #tpu.pipeline_mode<synchronous>, transform_indices = @transform_5, window_bounds = array<i64: 256, 512>}, {pipeline_mode = #tpu.pipeline_mode<synchronous>, transform_indices = @transform_6, window_bounds = array<i64: 256, 1>}, {pipeline_mode = #tpu.pipeline_mode<synchronous>, transform_indices = @transform_7, window_bounds = array<i64: 256, 1>}, {pipeline_mode = #tpu.pipeline_mode<synchronous>, transform_indices = @transform_8, window_bounds = array<i64: 1, 1>}, {transform_indices = @transform_9, window_bounds = array<i64: 1, 8>}]} {
    %c0 = arith.constant 0 : index
    %c0_0 = arith.constant 0 : index
    %0 = vector.load %arg2[%c0, %c0_0] : memref<1024x64xf32, #tpu.memory_space<vmem>>, vector<1024x64xf32>
    %c0_1 = arith.constant 0 : index
    %c0_2 = arith.constant 0 : index
    %1 = vector.load %arg1[%c0_1, %c0_2] : memref<8x64xf32, #tpu.memory_space<vmem>>, vector<8x64xf32>
    %cst = arith.constant dense<0.000000e+00> : vector<1024x8xf32>
    %2 = tpu.matmul %0, %1, %cst {dimension_numbers = #tpu.dot_dimension_numbers<[1], [1], [0], [0], [0, 0, 1, 0], [], []>} : vector<1024x64xf32>, vector<8x64xf32>, vector<1024x8xf32> -> vector<1024x8xf32>
    %c0_3 = arith.constant 0 : index
    %c0_4 = arith.constant 0 : index
    %3 = vector.load %arg3[%c0_3, %c0_4] : memref<1024x1xf32, #tpu.memory_space<vmem>>, vector<1024x1xf32>
    %4 = vector.broadcast %3 : vector<1024x1xf32> to vector<1024x8xf32>
    %5 = arith.addf %2, %4 : vector<1024x8xf32>
    %cst_5 = arith.constant 0.000000e+00 : f32
    %6 = vector.broadcast %cst_5 : f32 to vector<1024x8xf32>
    %7 = arith.maximumf %5, %6 : vector<1024x8xf32>
    %c0_6 = arith.constant 0 : index
    %c0_7 = arith.constant 0 : index
    %8 = vector.load %arg4[%c0_6, %c0_7] : memref<512x1024xf32, #tpu.memory_space<vmem>>, vector<512x1024xf32>
    %cst_8 = arith.constant dense<0.000000e+00> : vector<512x8xf32>
    %9 = tpu.matmul %8, %7, %cst_8 {dimension_numbers = #tpu.dot_dimension_numbers<[1], [0], [0], [1], [0, 0, 1, 1], [], []>} : vector<512x1024xf32>, vector<1024x8xf32>, vector<512x8xf32> -> vector<512x8xf32>
    %c0_9 = arith.constant 0 : index
    %c0_10 = arith.constant 0 : index
    %10 = vector.load %arg5[%c0_9, %c0_10] : memref<512x1xf32, #tpu.memory_space<vmem>>, vector<512x1xf32>
    %11 = vector.broadcast %10 : vector<512x1xf32> to vector<512x8xf32>
    %12 = arith.addf %9, %11 : vector<512x8xf32>
    %cst_11 = arith.constant 0.000000e+00 : f32
    %13 = vector.broadcast %cst_11 : f32 to vector<512x8xf32>
    %14 = arith.maximumf %12, %13 : vector<512x8xf32>
    %c0_12 = arith.constant 0 : index
    %c0_13 = arith.constant 0 : index
    %15 = vector.load %arg6[%c0_12, %c0_13] : memref<256x512xf32, #tpu.memory_space<vmem>>, vector<256x512xf32>
    %cst_14 = arith.constant dense<0.000000e+00> : vector<256x8xf32>
    %16 = tpu.matmul %15, %14, %cst_14 {dimension_numbers = #tpu.dot_dimension_numbers<[1], [0], [0], [1], [0, 0, 1, 1], [], []>} : vector<256x512xf32>, vector<512x8xf32>, vector<256x8xf32> -> vector<256x8xf32>
    %c0_15 = arith.constant 0 : index
    %c0_16 = arith.constant 0 : index
    %17 = vector.load %arg7[%c0_15, %c0_16] : memref<256x1xf32, #tpu.memory_space<vmem>>, vector<256x1xf32>
    %18 = vector.broadcast %17 : vector<256x1xf32> to vector<256x8xf32>
    %19 = arith.addf %16, %18 : vector<256x8xf32>
    %cst_17 = arith.constant 0.000000e+00 : f32
    %20 = vector.broadcast %cst_17 : f32 to vector<256x8xf32>
    %21 = arith.maximumf %19, %20 : vector<256x8xf32>
    %c0_18 = arith.constant 0 : index
    %c0_19 = arith.constant 0 : index
    %22 = vector.load %arg8[%c0_18, %c0_19] : memref<256x1xf32, #tpu.memory_space<vmem>>, vector<256x1xf32>
    %23 = vector.broadcast %22 : vector<256x1xf32> to vector<256x8xf32>
    %24 = arith.mulf %21, %23 : vector<256x8xf32>
    %cst_20 = arith.constant dense<0.000000e+00> : vector<8xf32>
    %25 = vector.multi_reduction <add>, %24, %cst_20 [0] : vector<256x8xf32> to vector<8xf32>
    %26 = vector.shape_cast %25 : vector<8xf32> to vector<1x8xf32>
    %c0_21 = arith.constant 0 : index
    %c0_22 = arith.constant 0 : index
    %27 = vector.load %arg9[%c0_21, %c0_22] : memref<1x1xf32, #tpu.memory_space<vmem>>, vector<1x1xf32>
    %28 = vector.broadcast %27 : vector<1x1xf32> to vector<1x8xf32>
    %29 = arith.addf %26, %28 : vector<1x8xf32>
    %cst_23 = arith.constant 0.000000e+00 : f32
    %30 = vector.broadcast %cst_23 : f32 to vector<1x8xf32>
    %31 = arith.subf %30, %29 : vector<1x8xf32>
    %32 = math.exp %31 : vector<1x8xf32>
    %cst_24 = arith.constant 1.000000e+00 : f32
    %33 = vector.broadcast %cst_24 : f32 to vector<1x8xf32>
    %34 = arith.addf %33, %32 : vector<1x8xf32>
    %cst_25 = arith.constant 1.000000e+00 : f32
    %35 = vector.broadcast %cst_25 : f32 to vector<1x8xf32>
    %36 = arith.divf %35, %34 : vector<1x8xf32>
    %c0_26 = arith.constant 0 : index
    %c0_27 = arith.constant 0 : index
    %37 = vector.load %arg10[%c0_26, %c0_27] : memref<1x8xf32, #tpu.memory_space<vmem>>, vector<1x8xf32>
    tpu.vector_store %arg10[%c0_26, %c0_27], %36 {strides = array<i32>} : memref<1x8xf32, #tpu.memory_space<vmem>>, vector<1x8xf32>,
    return
  }
  func.func @transform_0(%arg0: i32) -> (i32, i32) {
    %c0_i32 = arith.constant 0 : i32
    %c0_i32_0 = arith.constant 0 : i32
    return %arg0, %c0_i32 : i32, i32
  }
  func.func @transform_1(%arg0: i32) -> (i32, i32) {
    %c0_i32 = arith.constant 0 : i32
    %c0_i32_0 = arith.constant 0 : i32
    %c0_i32_1 = arith.constant 0 : i32
    return %c0_i32, %c0_i32_0 : i32, i32
  }
  func.func @transform_2(%arg0: i32) -> (i32, i32) {
    %c0_i32 = arith.constant 0 : i32
    %c0_i32_0 = arith.constant 0 : i32
    %c0_i32_1 = arith.constant 0 : i32
    return %c0_i32, %c0_i32_0 : i32, i32
  }
  func.func @transform_3(%arg0: i32) -> (i32, i32) {
    %c0_i32 = arith.constant 0 : i32
    %c0_i32_0 = arith.constant 0 : i32
    %c0_i32_1 = arith.constant 0 : i32
    return %c0_i32, %c0_i32_0 : i32, i32
  }
  func.func @transform_4(%arg0: i32) -> (i32, i32) {
    %c0_i32 = arith.constant 0 : i32
    %c0_i32_0 = arith.constant 0 : i32
    %c0_i32_1 = arith.constant 0 : i32
    return %c0_i32, %c0_i32_0 : i32, i32
  }
  func.func @transform_5(%arg0: i32) -> (i32, i32) {
    %c0_i32 = arith.constant 0 : i32
    %c0_i32_0 = arith.constant 0 : i32
    %c0_i32_1 = arith.constant 0 : i32
    return %c0_i32, %c0_i32_0 : i32, i32
  }
  func.func @transform_6(%arg0: i32) -> (i32, i32) {
    %c0_i32 = arith.constant 0 : i32
    %c0_i32_0 = arith.constant 0 : i32
    %c0_i32_1 = arith.constant 0 : i32
    return %c0_i32, %c0_i32_0 : i32, i32
  }
  func.func @transform_7(%arg0: i32) -> (i32, i32) {
    %c0_i32 = arith.constant 0 : i32
    %c0_i32_0 = arith.constant 0 : i32
    %c0_i32_1 = arith.constant 0 : i32
    return %c0_i32, %c0_i32_0 : i32, i32
  }
  func.func @transform_8(%arg0: i32) -> (i32, i32) {
    %c0_i32 = arith.constant 0 : i32
    %c0_i32_0 = arith.constant 0 : i32
    %c0_i32_1 = arith.constant 0 : i32
    return %c0_i32, %c0_i32_0 : i32, i32
  }
  func.func @transform_9(%arg0: i32) -> (i32, i32) {
    %c0_i32 = arith.constant 0 : i32
    %c0_i32_0 = arith.constant 0 : i32
    return %c0_i32, %arg0 : i32, i32
  }
}

</mosaic_0001>

<llo_original>
// kernel: discriminator_forward.1
$region0: #{discriminator_forward.1}
  #allocation0 [shape = 'u32[]', space=smem, size = 0x4, offset = 0x4, fixed_abs, tag = 'smem constant byte address 0x4 - core index']
  #allocation1 [shape = 'u32[72,128]{1,0:T(1,128)}', space=vmem, size = 0x9000, scoped, tag = 'internal scratch']
  #allocation2 [shape = 'f32[1,1]{1,0:T(1,128)S(1)}', space=vmem, size = 0x200, scoped, tag = 'scoped memory for discriminator_forward.1']
  %s0 = inlined_call_operand.vmem [shape: f32[8,64], index: 0, kind: input, shape index: {}]
  %s1 = inlined_call_operand.vmem [shape: f32[1024,64], index: 1, kind: input, shape index: {}]
  %s2 = inlined_call_operand.vmem [shape: f32[1024,1], index: 2, kind: input, shape index: {}]
  %s3 = inlined_call_operand.vmem [shape: f32[512,1024], index: 3, kind: input, shape index: {}]
  %s4 = inlined_call_operand.vmem [shape: f32[512,1], index: 4, kind: input, shape index: {}]
  %s5 = inlined_call_operand.vmem [shape: f32[256,512], index: 5, kind: input, shape index: {}]
  %s6 = inlined_call_operand.vmem [shape: f32[256,1], index: 6, kind: input, shape index: {}]
  %s7 = inlined_call_operand.vmem [shape: f32[256,1], index: 7, kind: input, shape index: {}]
  %s8 = inlined_call_operand.<no memory space> [shape: f32[1,1], index: 8, kind: input, shape index: {}]
  %s9 = inlined_call_operand.hbm [shape: f32[1,8], index: 9, kind: output, shape index: {}]
  %s10 = sld [smem:[#allocation0]]
  $region46: #{discriminator_forward.1} parent=0
    _
  %s12 = ssub.s32 1, %s10
  %s13 = scalar_select 0, %s12, %s10
  %v14 = vstv %s8
  %15 = vst [vmem:[#allocation2] sm:$0x1] %v14
  $region1: #{discriminator_forward.1} parent=0
    #allocation3 [shape = 'u8[512]{0}', space=vmem, size = 0x400, scoped, tag = 'output window, operand 0, single buffered']
    #allocation4 [shape = 's32[1]{0}', space=sflag, size = 0x4, scoped, tag = 'scoped memory for discriminator_forward.1']
    %16 = vsyncpa [#allocation4], 0
    // Predicated region
    $region2: #{discriminator_forward.1} parent=1 // pred_check
      _
    $region3: #{discriminator_forward.1} parent=1 // pred_check_branch
      %18 = sbr.rel (0) target = $region5
    $region4: #{discriminator_forward.1} parent=1 // pred_region
      _
    $region5: #{discriminator_forward.1} parent=1 // pred_fallthru
      _
    // Predicated region
    $region6: #{discriminator_forward.1} parent=1 // pred_check
      _
    $region7: #{discriminator_forward.1} parent=1 // pred_check_branch
      %20 = sbr.rel (0) target = $region9
    $region8: #{discriminator_forward.1} parent=1 // pred_region
      _
    $region9: #{discriminator_forward.1} parent=1 // pred_fallthru
      _
    // Predicated region
    $region10: #{discriminator_forward.1} parent=1 // pred_check
      _
    $region11: #{discriminator_forward.1} parent=1 // pred_check_branch
      %22 = sbr.rel (0) target = $region13
    $region12: #{discriminator_forward.1} parent=1 // pred_region
      _
    $region13: #{discriminator_forward.1} parent=1 // pred_fallthru
      _
    // Predicated region
    $region14: #{discriminator_forward.1} parent=1 // pred_check
      _
    $region15: #{discriminator_forward.1} parent=1 // pred_check_branch
      %24 = sbr.rel (0) target = $region17
    $region16: #{discriminator_forward.1} parent=1 // pred_region
      _
    $region17: #{discriminator_forward.1} parent=1 // pred_fallthru
      _
    // Predicated region
    $region18: #{discriminator_forward.1} parent=1 // pred_check
      _
    $region19: #{discriminator_forward.1} parent=1 // pred_check_branch
      %26 = sbr.rel (0) target = $region21
    $region20: #{discriminator_forward.1} parent=1 // pred_region
      _
    $region21: #{discriminator_forward.1} parent=1 // pred_fallthru
      _
    // Predicated region
    $region22: #{discriminator_forward.1} parent=1 // pred_check
      _
    $region23: #{discriminator_forward.1} parent=1 // pred_check_branch
      %28 = sbr.rel (0) target = $region25
    $region24: #{discriminator_forward.1} parent=1 // pred_region
      _
    $region25: #{discriminator_forward.1} parent=1 // pred_fallthru
      _
    // Predicated region
    $region26: #{discriminator_forward.1} parent=1 // pred_check
      _
    $region27: #{discriminator_forward.1} parent=1 // pred_check_branch
      %30 = sbr.rel (0) target = $region29
    $region28: #{discriminator_forward.1} parent=1 // pred_region
      _
    $region29: #{discriminator_forward.1} parent=1 // pred_fallthru
      _
    // Predicated region
    $region30: #{discriminator_forward.1} parent=1 // pred_check
      _
    $region31: #{discriminator_forward.1} parent=1 // pred_check_branch
      %32 = sbr.rel (0) target = $region33
    $region32: #{discriminator_forward.1} parent=1 // pred_region
      _
    $region33: #{discriminator_forward.1} parent=1 // pred_fallthru
      _
    // Predicated region
    $region34: #{discriminator_forward.1} parent=1 // pred_check
      _
    $region35: #{discriminator_forward.1} parent=1 // pred_check_branch
      %34 = sbr.rel (0) target = $region37
    $region36: #{discriminator_forward.1} parent=1 // pred_region
      _
    $region37: #{discriminator_forward.1} parent=1 // pred_fallthru
      _
    %v35 = vld [vmem:[%s1] sm:$0xff]
    %v36 = vld [vmem:[%s1 + $0x8] sm:$0xff]
    %v37 = vld [vmem:[%s1 + $0x10] sm:$0xff]
    %v38 = vld [vmem:[%s1 + $0x18] sm:$0xff]
    %v39 = vld [vmem:[%s1 + $0x20] sm:$0xff]
    %v40 = vld [vmem:[%s1 + $0x28] sm:$0xff]
    %v41 = vld [vmem:[%s1 + $0x30] sm:$0xff]
    %v42 = vld [vmem:[%s1 + $0x38] sm:$0xff]
    %v43 = vld [vmem:[%s1 + $0x40] sm:$0xff]
    %v44 = vld [vmem:[%s1 + $0x48] sm:$0xff]
    %v45 = vld [vmem:[%s1 + $0x50] sm:$0xff]
    %v46 = vld [vmem:[%s1 + $0x58] sm:$0xff]
    %v47 = vld [vmem:[%s1 + $0x60] sm:$0xff]
    %v48 = vld [vmem:[%s1 + $0x68] sm:$0xff]
    %v49 = vld [vmem:[%s1 + $0x70] sm:$0xff]
    %v50 = vld [vmem:[%s1 + $0x78] sm:$0xff]
    %v51 = vld [vmem:[%s1 + $0x80] sm:$0xff]
    %v52 = vld [vmem:[%s1 + $0x88] sm:$0xff]
    %v53 = vld [vmem:[%s1 + $0x90] sm:$0xff]
    %v54 = vld [vmem:[%s1 + $0x98] sm:$0xff]
    %v55 = vld [vmem:[%s1 + $0xa0] sm:$0xff]
    %v56 = vld [vmem:[%s1 + $0xa8] sm:$0xff]
    %v57 = vld [vmem:[%s1 + $0xb0] sm:$0xff]
    %v58 = vld [vmem:[%s1 + $0xb8] sm:$0xff]
    %v59 = vld [vmem:[%s1 + $0xc0] sm:$0xff]
    %v60 = vld [vmem:[%s1 + $0xc8] sm:$0xff]
    %v61 = vld [vmem:[%s1 + $0xd0] sm:$0xff]
    %v62 = vld [vmem:[%s1 + $0xd8] sm:$0xff]
    %v63 = vld [vmem:[%s1 + $0xe0] sm:$0xff]
    %v64 = vld [vmem:[%s1 + $0xe8] sm:$0xff]
    %v65 = vld [vmem:[%s1 + $0xf0] sm:$0xff]
    %v66 = vld [vmem:[%s1 + $0xf8] sm:$0xff]
    %v67 = vld [vmem:[%s1 + $0x100] sm:$0xff]
    %v68 = vld [vmem:[%s1 + $0x108] sm:$0xff]
    %v69 = vld [vmem:[%s1 + $0x110] sm:$0xff]
    %v70 = vld [vmem:[%s1 + $0x118] sm:$0xff]
    %v71 = vld [vmem:[%s1 + $0x120] sm:$0xff]
    %v72 = vld [vmem:[%s1 + $0x128] sm:$0xff]
    %v73 = vld [vmem:[%s1 + $0x130] sm:$0xff]
    %v74 = vld [vmem:[%s1 + $0x138] sm:$0xff]
    %v75 = vld [vmem:[%s1 + $0x140] sm:$0xff]
    %v76 = vld [vmem:[%s1 + $0x148] sm:$0xff]
    %v77 = vld [vmem:[%s1 + $0x150] sm:$0xff]
    %v78 = vld [vmem:[%s1 + $0x158] sm:$0xff]
    %v79 = vld [vmem:[%s1 + $0x160] sm:$0xff]
    %v80 = vld [vmem:[%s1 + $0x168] sm:$0xff]
    %v81 = vld [vmem:[%s1 + $0x170] sm:$0xff]
    %v82 = vld [vmem:[%s1 + $0x178] sm:$0xff]
    %v83 = vld [vmem:[%s1 + $0x180] sm:$0xff]
    %v84 = vld [vmem:[%s1 + $0x188] sm:$0xff]
    %v85 = vld [vmem:[%s1 + $0x190] sm:$0xff]
    %v86 = vld [vmem:[%s1 + $0x198] sm:$0xff]
    %v87 = vld [vmem:[%s1 + $0x1a0] sm:$0xff]
    %v88 = vld [vmem:[%s1 + $0x1a8] sm:$0xff]
    %v89 = vld [vmem:[%s1 + $0x1b0] sm:$0xff]
    %v90 = vld [vmem:[%s1 + $0x1b8] sm:$0xff]
    %v91 = vld [vmem:[%s1 + $0x1c0] sm:$0xff]
    %v92 = vld [vmem:[%s1 + $0x1c8] sm:$0xff]
    %v93 = vld [vmem:[%s1 + $0x1d0] sm:$0xff]
    %v94 = vld [vmem:[%s1 + $0x1d8] sm:$0xff]
    %v95 = vld [vmem:[%s1 + $0x1e0] sm:$0xff]
    %v96 = vld [vmem:[%s1 + $0x1e8] sm:$0xff]
    %v97 = vld [vmem:[%s1 + $0x1f0] sm:$0xff]
    %v98 = vld [vmem:[%s1 + $0x1f8] sm:$0xff]
    %v99 = vld [vmem:[%s1 + $0x200] sm:$0xff]
    %v100 = vld [vmem:[%s1 + $0x208] sm:$0xff]
    %v101 = vld [vmem:[%s1 + $0x210] sm:$0xff]
    %v102 = vld [vmem:[%s1 + $0x218] sm:$0xff]
    %v103 = vld [vmem:[%s1 + $0x220] sm:$0xff]
    %v104 = vld [vmem:[%s1 + $0x228] sm:$0xff]
    %v105 = vld [vmem:[%s1 + $0x230] sm:$0xff]
    %v106 = vld [vmem:[%s1 + $0x238] sm:$0xff]
    %v107 = vld [vmem:[%s1 + $0x240] sm:$0xff]
    %v108 = vld [vmem:[%s1 + $0x248] sm:$0xff]
    %v109 = vld [vmem:[%s1 + $0x250] sm:$0xff]
    %v110 = vld [vmem:[%s1 + $0x258] sm:$0xff]
    %v111 = vld [vmem:[%s1 + $0x260] sm:$0xff]
    %v112 = vld [vmem:[%s1 + $0x268] sm:$0xff]
    %v113 = vld [vmem:[%s1 + $0x270] sm:$0xff]
    %v114 = vld [vmem:[%s1 + $0x278] sm:$0xff]
    %v115 = vld [vmem:[%s1 + $0x280] sm:$0xff]
    %v116 = vld [vmem:[%s1 + $0x288] sm:$0xff]
    %v117 = vld [vmem:[%s1 + $0x290] sm:$0xff]
    %v118 = vld [vmem:[%s1 + $0x298] sm:$0xff]
    %v119 = vld [vmem:[%s1 + $0x2a0] sm:$0xff]
    %v120 = vld [vmem:[%s1 + $0x2a8] sm:$0xff]
    %v121 = vld [vmem:[%s1 + $0x2b0] sm:$0xff]
    %v122 = vld [vmem:[%s1 + $0x2b8] sm:$0xff]
    %v123 = vld [vmem:[%s1 + $0x2c0] sm:$0xff]
    %v124 = vld [vmem:[%s1 + $0x2c8] sm:$0xff]
    %v125 = vld [vmem:[%s1 + $0x2d0] sm:$0xff]
    %v126 = vld [vmem:[%s1 + $0x2d8] sm:$0xff]
    %v127 = vld [vmem:[%s1 + $0x2e0] sm:$0xff]
    %v128 = vld [vmem:[%s1 + $0x2e8] sm:$0xff]
    %v129 = vld [vmem:[%s1 + $0x2f0] sm:$0xff]
    %v130 = vld [vmem:[%s1 + $0x2f8] sm:$0xff]
    %v131 = vld [vmem:[%s1 + $0x300] sm:$0xff]
    %v132 = vld [vmem:[%s1 + $0x308] sm:$0xff]
    %v133 = vld [vmem:[%s1 + $0x310] sm:$0xff]
    %v134 = vld [vmem:[%s1 + $0x318] sm:$0xff]
    %v135 = vld [vmem:[%s1 + $0x320] sm:$0xff]
    %v136 = vld [vmem:[%s1 + $0x328] sm:$0xff]
    %v137 = vld [vmem:[%s1 + $0x330] sm:$0xff]
    %v138 = vld [vmem:[%s1 + $0x338] sm:$0xff]
    %v139 = vld [vmem:[%s1 + $0x340] sm:$0xff]
    %v140 = vld [vmem:[%s1 + $0x348] sm:$0xff]
    %v141 = vld [vmem:[%s1 + $0x350] sm:$0xff]
    %v142 = vld [vmem:[%s1 + $0x358] sm:$0xff]
    %v143 = vld [vmem:[%s1 + $0x360] sm:$0xff]
    %v144 = vld [vmem:[%s1 + $0x368] sm:$0xff]
    %v145 = vld [vmem:[%s1 + $0x370] sm:$0xff]
    %v146 = vld [vmem:[%s1 + $0x378] sm:$0xff]
    %v147 = vld [vmem:[%s1 + $0x380] sm:$0xff]
    %v148 = vld [vmem:[%s1 + $0x388] sm:$0xff]
    %v149 = vld [vmem:[%s1 + $0x390] sm:$0xff]
    %v150 = vld [vmem:[%s1 + $0x398] sm:$0xff]
    %v151 = vld [vmem:[%s1 + $0x3a0] sm:$0xff]
    %v152 = vld [vmem:[%s1 + $0x3a8] sm:$0xff]
    %v153 = vld [vmem:[%s1 + $0x3b0] sm:$0xff]
    %v154 = vld [vmem:[%s1 + $0x3b8] sm:$0xff]
    %v155 = vld [vmem:[%s1 + $0x3c0] sm:$0xff]
    %v156 = vld [vmem:[%s1 + $0x3c8] sm:$0xff]
    %v157 = vld [vmem:[%s1 + $0x3d0] sm:$0xff]
    %v158 = vld [vmem:[%s1 + $0x3d8] sm:$0xff]
    %v159 = vld [vmem:[%s1 + $0x3e0] sm:$0xff]
    %v160 = vld [vmem:[%s1 + $0x3e8] sm:$0xff]
    %v161 = vld [vmem:[%s1 + $0x3f0] sm:$0xff]
    %v162 = vld [vmem:[%s1 + $0x3f8] sm:$0xff]
    %v163 = vld [vmem:[%s0] sm:$0xff]
    %v164 = vld [vmem:[%s2] sm:$0xff]
    %v165 = vld [vmem:[%s2 + $0x8] sm:$0xff]
    %v166 = vld [vmem:[%s2 + $0x10] sm:$0xff]
    %v167 = vld [vmem:[%s2 + $0x18] sm:$0xff]
    %v168 = vld [vmem:[%s2 + $0x20] sm:$0xff]
    %v169 = vld [vmem:[%s2 + $0x28] sm:$0xff]
    %v170 = vld [vmem:[%s2 + $0x30] sm:$0xff]
    %v171 = vld [vmem:[%s2 + $0x38] sm:$0xff]
    %v172 = vld [vmem:[%s2 + $0x40] sm:$0xff]
    %v173 = vld [vmem:[%s2 + $0x48] sm:$0xff]
    %v174 = vld [vmem:[%s2 + $0x50] sm:$0xff]
    %v175 = vld [vmem:[%s2 + $0x58] sm:$0xff]
    %v176 = vld [vmem:[%s2 + $0x60] sm:$0xff]
    %v177 = vld [vmem:[%s2 + $0x68] sm:$0xff]
    %v178 = vld [vmem:[%s2 + $0x70] sm:$0xff]
    %v179 = vld [vmem:[%s2 + $0x78] sm:$0xff]
    %v180 = vld [vmem:[%s2 + $0x80] sm:$0xff]
    %v181 = vld [vmem:[%s2 + $0x88] sm:$0xff]
    %v182 = vld [vmem:[%s2 + $0x90] sm:$0xff]
    %v183 = vld [vmem:[%s2 + $0x98] sm:$0xff]
    %v184 = vld [vmem:[%s2 + $0xa0] sm:$0xff]
    %v185 = vld [vmem:[%s2 + $0xa8] sm:$0xff]
    %v186 = vld [vmem:[%s2 + $0xb0] sm:$0xff]
    %v187 = vld [vmem:[%s2 + $0xb8] sm:$0xff]
    %v188 = vld [vmem:[%s2 + $0xc0] sm:$0xff]
    %v189 = vld [vmem:[%s2 + $0xc8] sm:$0xff]
    %v190 = vld [vmem:[%s2 + $0xd0] sm:$0xff]
    %v191 = vld [vmem:[%s2 + $0xd8] sm:$0xff]
    %v192 = vld [vmem:[%s2 + $0xe0] sm:$0xff]
    %v193 = vld [vmem:[%s2 + $0xe8] sm:$0xff]
    %v194 = vld [vmem:[%s2 + $0xf0] sm:$0xff]
    %v195 = vld [vmem:[%s2 + $0xf8] sm:$0xff]
    %v196 = vld [vmem:[%s2 + $0x100] sm:$0xff]
    %v197 = vld [vmem:[%s2 + $0x108] sm:$0xff]
    %v198 = vld [vmem:[%s2 + $0x110] sm:$0xff]
    %v199 = vld [vmem:[%s2 + $0x118] sm:$0xff]
    %v200 = vld [vmem:[%s2 + $0x120] sm:$0xff]
    %v201 = vld [vmem:[%s2 + $0x128] sm:$0xff]
    %v202 = vld [vmem:[%s2 + $0x130] sm:$0xff]
    %v203 = vld [vmem:[%s2 + $0x138] sm:$0xff]
    %v204 = vld [vmem:[%s2 + $0x140] sm:$0xff]
    %v205 = vld [vmem:[%s2 + $0x148] sm:$0xff]
    %v206 = vld [vmem:[%s2 + $0x150] sm:$0xff]
    %v207 = vld [vmem:[%s2 + $0x158] sm:$0xff]
    %v208 = vld [vmem:[%s2 + $0x160] sm:$0xff]
    %v209 = vld [vmem:[%s2 + $0x168] sm:$0xff]
    %v210 = vld [vmem:[%s2 + $0x170] sm:$0xff]
    %v211 = vld [vmem:[%s2 + $0x178] sm:$0xff]
    %v212 = vld [vmem:[%s2 + $0x180] sm:$0xff]
    %v213 = vld [vmem:[%s2 + $0x188] sm:$0xff]
    %v214 = vld [vmem:[%s2 + $0x190] sm:$0xff]
    %v215 = vld [vmem:[%s2 + $0x198] sm:$0xff]
    %v216 = vld [vmem:[%s2 + $0x1a0] sm:$0xff]
    %v217 = vld [vmem:[%s2 + $0x1a8] sm:$0xff]
    %v218 = vld [vmem:[%s2 + $0x1b0] sm:$0xff]
    %v219 = vld [vmem:[%s2 + $0x1b8] sm:$0xff]
    %v220 = vld [vmem:[%s2 + $0x1c0] sm:$0xff]
    %v221 = vld [vmem:[%s2 + $0x1c8] sm:$0xff]
    %v222 = vld [vmem:[%s2 + $0x1d0] sm:$0xff]
    %v223 = vld [vmem:[%s2 + $0x1d8] sm:$0xff]
    %v224 = vld [vmem:[%s2 + $0x1e0] sm:$0xff]
    %v225 = vld [vmem:[%s2 + $0x1e8] sm:$0xff]
    %v226 = vld [vmem:[%s2 + $0x1f0] sm:$0xff]
    %v227 = vld [vmem:[%s2 + $0x1f8] sm:$0xff]
    %v228 = vld [vmem:[%s2 + $0x200] sm:$0xff]
    %v229 = vld [vmem:[%s2 + $0x208] sm:$0xff]
    %v230 = vld [vmem:[%s2 + $0x210] sm:$0xff]
    %v231 = vld [vmem:[%s2 + $0x218] sm:$0xff]
    %v232 = vld [vmem:[%s2 + $0x220] sm:$0xff]
    %v233 = vld [vmem:[%s2 + $0x228] sm:$0xff]
    %v234 = vld [vmem:[%s2 + $0x230] sm:$0xff]
    %v235 = vld [vmem:[%s2 + $0x238] sm:$0xff]
    %v236 = vld [vmem:[%s2 + $0x240] sm:$0xff]
    %v237 = vld [vmem:[%s2 + $0x248] sm:$0xff]
    %v238 = vld [vmem:[%s2 + $0x250] sm:$0xff]
    %v239 = vld [vmem:[%s2 + $0x258] sm:$0xff]
    %v240 = vld [vmem:[%s2 + $0x260] sm:$0xff]
    %v241 = vld [vmem:[%s2 + $0x268] sm:$0xff]
    %v242 = vld [vmem:[%s2 + $0x270] sm:$0xff]
    %v243 = vld [vmem:[%s2 + $0x278] sm:$0xff]
    %v244 = vld [vmem:[%s2 + $0x280] sm:$0xff]
    %v245 = vld [vmem:[%s2 + $0x288] sm:$0xff]
    %v246 = vld [vmem:[%s2 + $0x290] sm:$0xff]
    %v247 = vld [vmem:[%s2 + $0x298] sm:$0xff]
    %v248 = vld [vmem:[%s2 + $0x2a0] sm:$0xff]
    %v249 = vld [vmem:[%s2 + $0x2a8] sm:$0xff]
    %v250 = vld [vmem:[%s2 + $0x2b0] sm:$0xff]
    %v251 = vld [vmem:[%s2 + $0x2b8] sm:$0xff]
    %v252 = vld [vmem:[%s2 + $0x2c0] sm:$0xff]
    %v253 = vld [vmem:[%s2 + $0x2c8] sm:$0xff]
    %v254 = vld [vmem:[%s2 + $0x2d0] sm:$0xff]
    %v255 = vld [vmem:[%s2 + $0x2d8] sm:$0xff]
    %v256 = vld [vmem:[%s2 + $0x2e0] sm:$0xff]
    %v257 = vld [vmem:[%s2 + $0x2e8] sm:$0xff]
    %v258 = vld [vmem:[%s2 + $0x2f0] sm:$0xff]
    %v259 = vld [vmem:[%s2 + $0x2f8] sm:$0xff]
    %v260 = vld [vmem:[%s2 + $0x300] sm:$0xff]
    %v261 = vld [vmem:[%s2 + $0x308] sm:$0xff]
    %v262 = vld [vmem:[%s2 + $0x310] sm:$0xff]
    %v263 = vld [vmem:[%s2 + $0x318] sm:$0xff]
    %v264 = vld [vmem:[%s2 + $0x320] sm:$0xff]
    %v265 = vld [vmem:[%s2 + $0x328] sm:$0xff]
    %v266 = vld [vmem:[%s2 + $0x330] sm:$0xff]
    %v267 = vld [vmem:[%s2 + $0x338] sm:$0xff]
    %v268 = vld [vmem:[%s2 + $0x340] sm:$0xff]
    %v269 = vld [vmem:[%s2 + $0x348] sm:$0xff]
    %v270 = vld [vmem:[%s2 + $0x350] sm:$0xff]
    %v271 = vld [vmem:[%s2 + $0x358] sm:$0xff]
    %v272 = vld [vmem:[%s2 + $0x360] sm:$0xff]
    %v273 = vld [vmem:[%s2 + $0x368] sm:$0xff]
    %v274 = vld [vmem:[%s2 + $0x370] sm:$0xff]
    %v275 = vld [vmem:[%s2 + $0x378] sm:$0xff]
    %v276 = vld [vmem:[%s2 + $0x380] sm:$0xff]
    %v277 = vld [vmem:[%s2 + $0x388] sm:$0xff]
    %v278 = vld [vmem:[%s2 + $0x390] sm:$0xff]
    %v279 = vld [vmem:[%s2 + $0x398] sm:$0xff]
    %v280 = vld [vmem:[%s2 + $0x3a0] sm:$0xff]
    %v281 = vld [vmem:[%s2 + $0x3a8] sm:$0xff]
    %v282 = vld [vmem:[%s2 + $0x3b0] sm:$0xff]
    %v283 = vld [vmem:[%s2 + $0x3b8] sm:$0xff]
    %v284 = vld [vmem:[%s2 + $0x3c0] sm:$0xff]
    %v285 = vld [vmem:[%s2 + $0x3c8] sm:$0xff]
    %v286 = vld [vmem:[%s2 + $0x3d0] sm:$0xff]
    %v287 = vld [vmem:[%s2 + $0x3d8] sm:$0xff]
    %v288 = vld [vmem:[%s2 + $0x3e0] sm:$0xff]
    %v289 = vld [vmem:[%s2 + $0x3e8] sm:$0xff]
    %v290 = vld [vmem:[%s2 + $0x3f0] sm:$0xff]
    %v291 = vld [vmem:[%s2 + $0x3f8] sm:$0xff]
    %293 = vset.pattern.permute.xlu0 0
    %294 = vperm.xlu0 %293, %v164
    %v295 = vpop.permute.xlu0 %294
    %298 = vset.pattern.permute.xlu0 0
    %299 = vperm.xlu0 %298, %v165
    %v300 = vpop.permute.xlu0 %299
    %303 = vset.pattern.permute.xlu0 0
    %304 = vperm.xlu0 %303, %v166
    %v305 = vpop.permute.xlu0 %304
    %308 = vset.pattern.permute.xlu0 0
    %309 = vperm.xlu0 %308, %v167
    %v310 = vpop.permute.xlu0 %309
    %313 = vset.pattern.permute.xlu0 0
    %314 = vperm.xlu0 %313, %v168
    %v315 = vpop.permute.xlu0 %314
    %318 = vset.pattern.permute.xlu0 0
    %319 = vperm.xlu0 %318, %v169
    %v320 = vpop.permute.xlu0 %319
    %323 = vset.pattern.permute.xlu0 0
    %324 = vperm.xlu0 %323, %v170
    %v325 = vpop.permute.xlu0 %324
    %328 = vset.pattern.permute.xlu0 0
    %329 = vperm.xlu0 %328, %v171
    %v330 = vpop.permute.xlu0 %329
    %333 = vset.pattern.permute.xlu0 0
    %334 = vperm.xlu0 %333, %v172
    %v335 = vpop.permute.xlu0 %334
    %338 = vset.pattern.permute.xlu0 0
    %339 = vperm.xlu0 %338, %v173
    %v340 = vpop.permute.xlu0 %339
    %343 = vset.pattern.permute.xlu0 0
    %344 = vperm.xlu0 %343, %v174
    %v345 = vpop.permute.xlu0 %344
    %348 = vset.pattern.permute.xlu0 0
    %349 = vperm.xlu0 %348, %v175
    %v350 = vpop.permute.xlu0 %349
    %353 = vset.pattern.permute.xlu0 0
    %354 = vperm.xlu0 %353, %v176
    %v355 = vpop.permute.xlu0 %354
    %358 = vset.pattern.permute.xlu0 0
    %359 = vperm.xlu0 %358, %v177
    %v360 = vpop.permute.xlu0 %359
    %363 = vset.pattern.permute.xlu0 0
    %364 = vperm.xlu0 %363, %v178
    %v365 = vpop.permute.xlu0 %364
    %368 = vset.pattern.permute.xlu0 0
    %369 = vperm.xlu0 %368, %v179
    %v370 = vpop.permute.xlu0 %369
    %373 = vset.pattern.permute.xlu0 0
    %374 = vperm.xlu0 %373, %v180
    %v375 = vpop.permute.xlu0 %374
    %378 = vset.pattern.permute.xlu0 0
    %379 = vperm.xlu0 %378, %v181
    %v380 = vpop.permute.xlu0 %379
    %383 = vset.pattern.permute.xlu0 0
    %384 = vperm.xlu0 %383, %v182
    %v385 = vpop.permute.xlu0 %384
    %388 = vset.pattern.permute.xlu0 0
    %389 = vperm.xlu0 %388, %v183
    %v390 = vpop.permute.xlu0 %389
    %393 = vset.pattern.permute.xlu0 0
    %394 = vperm.xlu0 %393, %v184
    %v395 = vpop.permute.xlu0 %394
    %398 = vset.pattern.permute.xlu0 0
    %399 = vperm.xlu0 %398, %v185
    %v400 = vpop.permute.xlu0 %399
    %403 = vset.pattern.permute.xlu0 0
    %404 = vperm.xlu0 %403, %v186
    %v405 = vpop.permute.xlu0 %404
    %408 = vset.pattern.permute.xlu0 0
    %409 = vperm.xlu0 %408, %v187
    %v410 = vpop.permute.xlu0 %409
    %413 = vset.pattern.permute.xlu0 0
    %414 = vperm.xlu0 %413, %v188
    %v415 = vpop.permute.xlu0 %414
    %418 = vset.pattern.permute.xlu0 0
    %419 = vperm.xlu0 %418, %v189
    %v420 = vpop.permute.xlu0 %419
    %423 = vset.pattern.permute.xlu0 0
    %424 = vperm.xlu0 %423, %v190
    %v425 = vpop.permute.xlu0 %424
    %428 = vset.pattern.permute.xlu0 0
    %429 = vperm.xlu0 %428, %v191
    %v430 = vpop.permute.xlu0 %429
    %433 = vset.pattern.permute.xlu0 0
    %434 = vperm.xlu0 %433, %v192
    %v435 = vpop.permute.xlu0 %434
    %438 = vset.pattern.permute.xlu0 0
    %439 = vperm.xlu0 %438, %v193
    %v440 = vpop.permute.xlu0 %439
    %443 = vset.pattern.permute.xlu0 0
    %444 = vperm.xlu0 %443, %v194
    %v445 = vpop.permute.xlu0 %444
    %448 = vset.pattern.permute.xlu0 0
    %449 = vperm.xlu0 %448, %v195
    %v450 = vpop.permute.xlu0 %449
    %453 = vset.pattern.permute.xlu0 0
    %454 = vperm.xlu0 %453, %v196
    %v455 = vpop.permute.xlu0 %454
    %458 = vset.pattern.permute.xlu0 0
    %459 = vperm.xlu0 %458, %v197
    %v460 = vpop.permute.xlu0 %459
    %463 = vset.pattern.permute.xlu0 0
    %464 = vperm.xlu0 %463, %v198
    %v465 = vpop.permute.xlu0 %464
    %468 = vset.pattern.permute.xlu0 0
    %469 = vperm.xlu0 %468, %v199
    %v470 = vpop.permute.xlu0 %469
    %473 = vset.pattern.permute.xlu0 0
    %474 = vperm.xlu0 %473, %v200
    %v475 = vpop.permute.xlu0 %474
    %478 = vset.pattern.permute.xlu0 0
    %479 = vperm.xlu0 %478, %v201
    %v480 = vpop.permute.xlu0 %479
    %483 = vset.pattern.permute.xlu0 0
    %484 = vperm.xlu0 %483, %v202
    %v485 = vpop.permute.xlu0 %484
    %488 = vset.pattern.permute.xlu0 0
    %489 = vperm.xlu0 %488, %v203
    %v490 = vpop.permute.xlu0 %489
    %493 = vset.pattern.permute.xlu0 0
    %494 = vperm.xlu0 %493, %v204
    %v495 = vpop.permute.xlu0 %494
    %498 = vset.pattern.permute.xlu0 0
    %499 = vperm.xlu0 %498, %v205
    %v500 = vpop.permute.xlu0 %499
    %503 = vset.pattern.permute.xlu0 0
    %504 = vperm.xlu0 %503, %v206
    %v505 = vpop.permute.xlu0 %504
    %508 = vset.pattern.permute.xlu0 0
    %509 = vperm.xlu0 %508, %v207
    %v510 = vpop.permute.xlu0 %509
    %513 = vset.pattern.permute.xlu0 0
    %514 = vperm.xlu0 %513, %v208
    %v515 = vpop.permute.xlu0 %514
    %518 = vset.pattern.permute.xlu0 0
    %519 = vperm.xlu0 %518, %v209
    %v520 = vpop.permute.xlu0 %519
    %523 = vset.pattern.permute.xlu0 0
    %524 = vperm.xlu0 %523, %v210
    %v525 = vpop.permute.xlu0 %524
    %528 = vset.pattern.permute.xlu0 0
    %529 = vperm.xlu0 %528, %v211
    %v530 = vpop.permute.xlu0 %529
    %533 = vset.pattern.permute.xlu0 0
    %534 = vperm.xlu0 %533, %v212
    %v535 = vpop.permute.xlu0 %534
    %538 = vset.pattern.permute.xlu0 0
    %539 = vperm.xlu0 %538, %v213
    %v540 = vpop.permute.xlu0 %539
    %543 = vset.pattern.permute.xlu0 0
    %544 = vperm.xlu0 %543, %v214
    %v545 = vpop.permute.xlu0 %544
    %548 = vset.pattern.permute.xlu0 0
    %549 = vperm.xlu0 %548, %v215
    %v550 = vpop.permute.xlu0 %549
    %553 = vset.pattern.permute.xlu0 0
    %554 = vperm.xlu0 %553, %v216
    %v555 = vpop.permute.xlu0 %554
    %558 = vset.pattern.permute.xlu0 0
    %559 = vperm.xlu0 %558, %v217
    %v560 = vpop.permute.xlu0 %559
    %563 = vset.pattern.permute.xlu0 0
    %564 = vperm.xlu0 %563, %v218
    %v565 = vpop.permute.xlu0 %564
    %568 = vset.pattern.permute.xlu0 0
    %569 = vperm.xlu0 %568, %v219
    %v570 = vpop.permute.xlu0 %569
    %573 = vset.pattern.permute.xlu0 0
    %574 = vperm.xlu0 %573, %v220
    %v575 = vpop.permute.xlu0 %574
    %578 = vset.pattern.permute.xlu0 0
    %579 = vperm.xlu0 %578, %v221
    %v580 = vpop.permute.xlu0 %579
    %583 = vset.pattern.permute.xlu0 0
    %584 = vperm.xlu0 %583, %v222
    %v585 = vpop.permute.xlu0 %584
    %588 = vset.pattern.permute.xlu0 0
    %589 = vperm.xlu0 %588, %v223
    %v590 = vpop.permute.xlu0 %589
    %593 = vset.pattern.permute.xlu0 0
    %594 = vperm.xlu0 %593, %v224
    %v595 = vpop.permute.xlu0 %594
    %598 = vset.pattern.permute.xlu0 0
    %599 = vperm.xlu0 %598, %v225
    %v600 = vpop.permute.xlu0 %599
    %603 = vset.pattern.permute.xlu0 0
    %604 = vperm.xlu0 %603, %v226
    %v605 = vpop.permute.xlu0 %604
    %608 = vset.pattern.permute.xlu0 0
    %609 = vperm.xlu0 %608, %v227
    %v610 = vpop.permute.xlu0 %609
    %613 = vset.pattern.permute.xlu0 0
    %614 = vperm.xlu0 %613, %v228
    %v615 = vpop.permute.xlu0 %614
    %618 = vset.pattern.permute.xlu0 0
    %619 = vperm.xlu0 %618, %v229
    %v620 = vpop.permute.xlu0 %619
    %623 = vset.pattern.permute.xlu0 0
    %624 = vperm.xlu0 %623, %v230
    %v625 = vpop.permute.xlu0 %624
    %628 = vset.pattern.permute.xlu0 0
    %629 = vperm.xlu0 %628, %v231
    %v630 = vpop.permute.xlu0 %629
    %633 = vset.pattern.permute.xlu0 0
    %634 = vperm.xlu0 %633, %v232
    %v635 = vpop.permute.xlu0 %634
    %638 = vset.pattern.permute.xlu0 0
    %639 = vperm.xlu0 %638, %v233
    %v640 = vpop.permute.xlu0 %639
    %643 = vset.pattern.permute.xlu0 0
    %644 = vperm.xlu0 %643, %v234
    %v645 = vpop.permute.xlu0 %644
    %648 = vset.pattern.permute.xlu0 0
    %649 = vperm.xlu0 %648, %v235
    %v650 = vpop.permute.xlu0 %649
    %653 = vset.pattern.permute.xlu0 0
    %654 = vperm.xlu0 %653, %v236
    %v655 = vpop.permute.xlu0 %654
    %658 = vset.pattern.permute.xlu0 0
    %659 = vperm.xlu0 %658, %v237
    %v660 = vpop.permute.xlu0 %659
    %663 = vset.pattern.permute.xlu0 0
    %664 = vperm.xlu0 %663, %v238
    %v665 = vpop.permute.xlu0 %664
    %668 = vset.pattern.permute.xlu0 0
    %669 = vperm.xlu0 %668, %v239
    %v670 = vpop.permute.xlu0 %669
    %673 = vset.pattern.permute.xlu0 0
    %674 = vperm.xlu0 %673, %v240
    %v675 = vpop.permute.xlu0 %674
    %678 = vset.pattern.permute.xlu0 0
    %679 = vperm.xlu0 %678, %v241
    %v680 = vpop.permute.xlu0 %679
    %683 = vset.pattern.permute.xlu0 0
    %684 = vperm.xlu0 %683, %v242
    %v685 = vpop.permute.xlu0 %684
    %688 = vset.pattern.permute.xlu0 0
    %689 = vperm.xlu0 %688, %v243
    %v690 = vpop.permute.xlu0 %689
    %693 = vset.pattern.permute.xlu0 0
    %694 = vperm.xlu0 %693, %v244
    %v695 = vpop.permute.xlu0 %694
    %698 = vset.pattern.permute.xlu0 0
    %699 = vperm.xlu0 %698, %v245
    %v700 = vpop.permute.xlu0 %699
    %703 = vset.pattern.permute.xlu0 0
    %704 = vperm.xlu0 %703, %v246
    %v705 = vpop.permute.xlu0 %704
    %708 = vset.pattern.permute.xlu0 0
    %709 = vperm.xlu0 %708, %v247
    %v710 = vpop.permute.xlu0 %709
    %713 = vset.pattern.permute.xlu0 0
    %714 = vperm.xlu0 %713, %v248
    %v715 = vpop.permute.xlu0 %714
    %718 = vset.pattern.permute.xlu0 0
    %719 = vperm.xlu0 %718, %v249
    %v720 = vpop.permute.xlu0 %719
    %723 = vset.pattern.permute.xlu0 0
    %724 = vperm.xlu0 %723, %v250
    %v725 = vpop.permute.xlu0 %724
    %728 = vset.pattern.permute.xlu0 0
    %729 = vperm.xlu0 %728, %v251
    %v730 = vpop.permute.xlu0 %729
    %733 = vset.pattern.permute.xlu0 0
    %734 = vperm.xlu0 %733, %v252
    %v735 = vpop.permute.xlu0 %734
    %738 = vset.pattern.permute.xlu0 0
    %739 = vperm.xlu0 %738, %v253
    %v740 = vpop.permute.xlu0 %739
    %743 = vset.pattern.permute.xlu0 0
    %744 = vperm.xlu0 %743, %v254
    %v745 = vpop.permute.xlu0 %744
    %748 = vset.pattern.permute.xlu0 0
    %749 = vperm.xlu0 %748, %v255
    %v750 = vpop.permute.xlu0 %749
    %753 = vset.pattern.permute.xlu0 0
    %754 = vperm.xlu0 %753, %v256
    %v755 = vpop.permute.xlu0 %754
    %758 = vset.pattern.permute.xlu0 0
    %759 = vperm.xlu0 %758, %v257
    %v760 = vpop.permute.xlu0 %759
    %763 = vset.pattern.permute.xlu0 0
    %764 = vperm.xlu0 %763, %v258
    %v765 = vpop.permute.xlu0 %764
    %768 = vset.pattern.permute.xlu0 0
    %769 = vperm.xlu0 %768, %v259
    %v770 = vpop.permute.xlu0 %769
    %773 = vset.pattern.permute.xlu0 0
    %774 = vperm.xlu0 %773, %v260
    %v775 = vpop.permute.xlu0 %774
    %778 = vset.pattern.permute.xlu0 0
    %779 = vperm.xlu0 %778, %v261
    %v780 = vpop.permute.xlu0 %779
    %783 = vset.pattern.permute.xlu0 0
    %784 = vperm.xlu0 %783, %v262
    %v785 = vpop.permute.xlu0 %784
    %788 = vset.pattern.permute.xlu0 0
    %789 = vperm.xlu0 %788, %v263
    %v790 = vpop.permute.xlu0 %789
    %793 = vset.pattern.permute.xlu0 0
    %794 = vperm.xlu0 %793, %v264
    %v795 = vpop.permute.xlu0 %794
    %798 = vset.pattern.permute.xlu0 0
    %799 = vperm.xlu0 %798, %v265
    %v800 = vpop.permute.xlu0 %799
    %803 = vset.pattern.permute.xlu0 0
    %804 = vperm.xlu0 %803, %v266
    %v805 = vpop.permute.xlu0 %804
    %808 = vset.pattern.permute.xlu0 0
    %809 = vperm.xlu0 %808, %v267
    %v810 = vpop.permute.xlu0 %809
    %813 = vset.pattern.permute.xlu0 0
    %814 = vperm.xlu0 %813, %v268
    %v815 = vpop.permute.xlu0 %814
    %818 = vset.pattern.permute.xlu0 0
    %819 = vperm.xlu0 %818, %v269
    %v820 = vpop.permute.xlu0 %819
    %823 = vset.pattern.permute.xlu0 0
    %824 = vperm.xlu0 %823, %v270
    %v825 = vpop.permute.xlu0 %824
    %828 = vset.pattern.permute.xlu0 0
    %829 = vperm.xlu0 %828, %v271
    %v830 = vpop.permute.xlu0 %829
    %833 = vset.pattern.permute.xlu0 0
    %834 = vperm.xlu0 %833, %v272
    %v835 = vpop.permute.xlu0 %834
    %838 = vset.pattern.permute.xlu0 0
    %839 = vperm.xlu0 %838, %v273
    %v840 = vpop.permute.xlu0 %839
    %843 = vset.pattern.permute.xlu0 0
    %844 = vperm.xlu0 %843, %v274
    %v845 = vpop.permute.xlu0 %844
    %848 = vset.pattern.permute.xlu0 0
    %849 = vperm.xlu0 %848, %v275
    %v850 = vpop.permute.xlu0 %849
    %853 = vset.pattern.permute.xlu0 0
    %854 = vperm.xlu0 %853, %v276
    %v855 = vpop.permute.xlu0 %854
    %858 = vset.pattern.permute.xlu0 0
    %859 = vperm.xlu0 %858, %v277
    %v860 = vpop.permute.xlu0 %859
    %863 = vset.pattern.permute.xlu0 0
    %864 = vperm.xlu0 %863, %v278
    %v865 = vpop.permute.xlu0 %864
    %868 = vset.pattern.permute.xlu0 0
    %869 = vperm.xlu0 %868, %v279
    %v870 = vpop.permute.xlu0 %869
    %873 = vset.pattern.permute.xlu0 0
    %874 = vperm.xlu0 %873, %v280
    %v875 = vpop.permute.xlu0 %874
    %878 = vset.pattern.permute.xlu0 0
    %879 = vperm.xlu0 %878, %v281
    %v880 = vpop.permute.xlu0 %879
    %883 = vset.pattern.permute.xlu0 0
    %884 = vperm.xlu0 %883, %v282
    %v885 = vpop.permute.xlu0 %884
    %888 = vset.pattern.permute.xlu0 0
    %889 = vperm.xlu0 %888, %v283
    %v890 = vpop.permute.xlu0 %889
    %893 = vset.pattern.permute.xlu0 0
    %894 = vperm.xlu0 %893, %v284
    %v895 = vpop.permute.xlu0 %894
    %898 = vset.pattern.permute.xlu0 0
    %899 = vperm.xlu0 %898, %v285
    %v900 = vpop.permute.xlu0 %899
    %903 = vset.pattern.permute.xlu0 0
    %904 = vperm.xlu0 %903, %v286
    %v905 = vpop.permute.xlu0 %904
    %908 = vset.pattern.permute.xlu0 0
    %909 = vperm.xlu0 %908, %v287
    %v910 = vpop.permute.xlu0 %909
    %913 = vset.pattern.permute.xlu0 0
    %914 = vperm.xlu0 %913, %v288
    %v915 = vpop.permute.xlu0 %914
    %918 = vset.pattern.permute.xlu0 0
    %919 = vperm.xlu0 %918, %v289
    %v920 = vpop.permute.xlu0 %919
    %923 = vset.pattern.permute.xlu0 0
    %924 = vperm.xlu0 %923, %v290
    %v925 = vpop.permute.xlu0 %924
    %928 = vset.pattern.permute.xlu0 0
    %929 = vperm.xlu0 %928, %v291
    %v930 = vpop.permute.xlu0 %929
    %vm932 = vcmask 523264
    %v934 = vsel %vm932, %v35, 0
    %v937 = vsel %vm932, %v36, 0
    %v940 = vsel %vm932, %v37, 0
    %v943 = vsel %vm932, %v38, 0
    %v946 = vsel %vm932, %v39, 0
    %v949 = vsel %vm932, %v40, 0
    %v952 = vsel %vm932, %v41, 0
    %v955 = vsel %vm932, %v42, 0
    %v958 = vsel %vm932, %v43, 0
    %v961 = vsel %vm932, %v44, 0
    %v964 = vsel %vm932, %v45, 0
    %v967 = vsel %vm932, %v46, 0
    %v970 = vsel %vm932, %v47, 0
    %v973 = vsel %vm932, %v48, 0
    %v976 = vsel %vm932, %v49, 0
    %v979 = vsel %vm932, %v50, 0
    %v982 = vsel %vm932, %v51, 0
    %v985 = vsel %vm932, %v52, 0
    %v988 = vsel %vm932, %v53, 0
    %v991 = vsel %vm932, %v54, 0
    %v994 = vsel %vm932, %v55, 0
    %v997 = vsel %vm932, %v56, 0
    %v1000 = vsel %vm932, %v57, 0
    %v1003 = vsel %vm932, %v58, 0
    %v1006 = vsel %vm932, %v59, 0
    %v1009 = vsel %vm932, %v60, 0
    %v1012 = vsel %vm932, %v61, 0
    %v1015 = vsel %vm932, %v62, 0
    %v1018 = vsel %vm932, %v63, 0
    %v1021 = vsel %vm932, %v64, 0
    %v1024 = vsel %vm932, %v65, 0
    %v1027 = vsel %vm932, %v66, 0
    %v1030 = vsel %vm932, %v67, 0
    %v1033 = vsel %vm932, %v68, 0
    %v1036 = vsel %vm932, %v69, 0
    %v1039 = vsel %vm932, %v70, 0
    %v1042 = vsel %vm932, %v71, 0
    %v1045 = vsel %vm932, %v72, 0
    %v1048 = vsel %vm932, %v73, 0
    %v1051 = vsel %vm932, %v74, 0
    %v1054 = vsel %vm932, %v75, 0
    %v1057 = vsel %vm932, %v76, 0
    %v1060 = vsel %vm932, %v77, 0
    %v1063 = vsel %vm932, %v78, 0
    %v1066 = vsel %vm932, %v79, 0
    %v1069 = vsel %vm932, %v80, 0
    %v1072 = vsel %vm932, %v81, 0
    %v1075 = vsel %vm932, %v82, 0
    %v1078 = vsel %vm932, %v83, 0
    %v1081 = vsel %vm932, %v84, 0
    %v1084 = vsel %vm932, %v85, 0
    %v1087 = vsel %vm932, %v86, 0
    %v1090 = vsel %vm932, %v87, 0
    %v1093 = vsel %vm932, %v88, 0
    %v1096 = vsel %vm932, %v89, 0
    %v1099 = vsel %vm932, %v90, 0
    %v1102 = vsel %vm932, %v91, 0
    %v1105 = vsel %vm932, %v92, 0
    %v1108 = vsel %vm932, %v93, 0
    %v1111 = vsel %vm932, %v94, 0
    %v1114 = vsel %vm932, %v95, 0
    %v1117 = vsel %vm932, %v96, 0
    %v1120 = vsel %vm932, %v97, 0
    %v1123 = vsel %vm932, %v98, 0
    %v1126 = vsel %vm932, %v99, 0
    %v1129 = vsel %vm932, %v100, 0
    %v1132 = vsel %vm932, %v101, 0
    %v1135 = vsel %vm932, %v102, 0
    %v1138 = vsel %vm932, %v103, 0
    %v1141 = vsel %vm932, %v104, 0
    %v1144 = vsel %vm932, %v105, 0
    %v1147 = vsel %vm932, %v106, 0
    %v1150 = vsel %vm932, %v107, 0
    %v1153 = vsel %vm932, %v108, 0
    %v1156 = vsel %vm932, %v109, 0
    %v1159 = vsel %vm932, %v110, 0
    %v1162 = vsel %vm932, %v111, 0
    %v1165 = vsel %vm932, %v112, 0
    %v1168 = vsel %vm932, %v113, 0
    %v1171 = vsel %vm932, %v114, 0
    %v1174 = vsel %vm932, %v115, 0
    %v1177 = vsel %vm932, %v116, 0
    %v1180 = vsel %vm932, %v117, 0
    %v1183 = vsel %vm932, %v118, 0
    %v1186 = vsel %vm932, %v119, 0
    %v1189 = vsel %vm932, %v120, 0
    %v1192 = vsel %vm932, %v121, 0
    %v1195 = vsel %vm932, %v122, 0
    %v1198 = vsel %vm932, %v123, 0
    %v1201 = vsel %vm932, %v124, 0
    %v1204 = vsel %vm932, %v125, 0
    %v1207 = vsel %vm932, %v126, 0
    %v1210 = vsel %vm932, %v127, 0
    %v1213 = vsel %vm932, %v128, 0
    %v1216 = vsel %vm932, %v129, 0
    %v1219 = vsel %vm932, %v130, 0
    %v1222 = vsel %vm932, %v131, 0
    %v1225 = vsel %vm932, %v132, 0
    %v1228 = vsel %vm932, %v133, 0
    %v1231 = vsel %vm932, %v134, 0
    %v1234 = vsel %vm932, %v135, 0
    %v1237 = vsel %vm932, %v136, 0
    %v1240 = vsel %vm932, %v137, 0
    %v1243 = vsel %vm932, %v138, 0
    %v1246 = vsel %vm932, %v139, 0
    %v1249 = vsel %vm932, %v140, 0
    %v1252 = vsel %vm932, %v141, 0
    %v1255 = vsel %vm932, %v142, 0
    %v1258 = vsel %vm932, %v143, 0
    %v1261 = vsel %vm932, %v144, 0
    %v1264 = vsel %vm932, %v145, 0
    %v1267 = vsel %vm932, %v146, 0
    %v1270 = vsel %vm932, %v147, 0
    %v1273 = vsel %vm932, %v148, 0
    %v1276 = vsel %vm932, %v149, 0
    %v1279 = vsel %vm932, %v150, 0
    %v1282 = vsel %vm932, %v151, 0
    %v1285 = vsel %vm932, %v152, 0
    %v1288 = vsel %vm932, %v153, 0
    %v1291 = vsel %vm932, %v154, 0
    %v1294 = vsel %vm932, %v155, 0
    %v1297 = vsel %vm932, %v156, 0
    %v1300 = vsel %vm932, %v157, 0
    %v1303 = vsel %vm932, %v158, 0
    %v1306 = vsel %vm932, %v159, 0
    %v1309 = vsel %vm932, %v160, 0
    %v1312 = vsel %vm932, %v161, 0
    %v1315 = vsel %vm932, %v162, 0
    %v1318 = vsel %vm932, %v163, 0
    %1320 = vmatpush.xpose.msra.mxu0 0.0
    %1321 = vmatpush.xpose.msra.mxu0 0.0
    %1322 = vmatpush.xpose.msra.mxu0 0.0
    %1323 = vmatpush.xpose.msra.mxu0 0.0
    %1324 = vmatpush.xpose.msra.mxu0 0.0
    %1325 = vmatpush.xpose.msra.mxu0 0.0
    %1326 = vmatpush.xpose.msra.mxu0 0.0
    %1327 = vmatpush.xpose.msra.mxu0 0.0
    %1328 = vmatpush.xpose.msra.mxu0 0.0
    %1329 = vmatpush.xpose.msra.mxu0 0.0
    %1330 = vmatpush.xpose.msra.mxu0 0.0
    %1331 = vmatpush.xpose.msra.mxu0 0.0
    %1332 = vmatpush.xpose.msra.mxu0 0.0
    %1333 = vmatpush.xpose.msra.mxu0 0.0
    %1334 = vmatpush.xpose.msra.mxu0 0.0
    %1335 = vmatpush.xpose.msra.mxu0 %v1318
    %1336 = vmatmul.f32.gmra.mxu0 %v934
    %v1337 = vpop.f32.mrf.mxu0
    %v1338 = vadd.f32 %v295, %v1337
    %1339 = vmatmul.f32.gmra.mxu0 %v937
    %v1340 = vpop.f32.mrf.mxu0
    %v1341 = vadd.f32 %v300, %v1340
    %1342 = vmatmul.f32.gmra.mxu0 %v940
    %v1343 = vpop.f32.mrf.mxu0
    %v1344 = vadd.f32 %v305, %v1343
    %1345 = vmatmul.f32.gmra.mxu0 %v943
    %v1346 = vpop.f32.mrf.mxu0
    %v1347 = vadd.f32 %v310, %v1346
    %1348 = vmatmul.f32.gmra.mxu0 %v946
    %v1349 = vpop.f32.mrf.mxu0
    %v1350 = vadd.f32 %v315, %v1349
    %1351 = vmatmul.f32.gmra.mxu0 %v949
    %v1352 = vpop.f32.mrf.mxu0
    %v1353 = vadd.f32 %v320, %v1352
    %1354 = vmatmul.f32.gmra.mxu0 %v952
    %v1355 = vpop.f32.mrf.mxu0
    %v1356 = vadd.f32 %v325, %v1355
    %1357 = vmatmul.f32.gmra.mxu0 %v955
    %v1358 = vpop.f32.mrf.mxu0
    %v1359 = vadd.f32 %v330, %v1358
    %1360 = vmatmul.f32.gmra.mxu0 %v958
    %v1361 = vpop.f32.mrf.mxu0
    %v1362 = vadd.f32 %v335, %v1361
    %1363 = vmatmul.f32.gmra.mxu0 %v961
    %v1364 = vpop.f32.mrf.mxu0
    %v1365 = vadd.f32 %v340, %v1364
    %1366 = vmatmul.f32.gmra.mxu0 %v964
    %v1367 = vpop.f32.mrf.mxu0
    %v1368 = vadd.f32 %v345, %v1367
    %1369 = vmatmul.f32.gmra.mxu0 %v967
    %v1370 = vpop.f32.mrf.mxu0
    %v1371 = vadd.f32 %v350, %v1370
    %1372 = vmatmul.f32.gmra.mxu0 %v970
    %v1373 = vpop.f32.mrf.mxu0
    %v1374 = vadd.f32 %v355, %v1373
    %1375 = vmatmul.f32.gmra.mxu0 %v973
    %v1376 = vpop.f32.mrf.mxu0
    %v1377 = vadd.f32 %v360, %v1376
    %1378 = vmatmul.f32.gmra.mxu0 %v976
    %v1379 = vpop.f32.mrf.mxu0
    %v1380 = vadd.f32 %v365, %v1379
    %1381 = vmatmul.f32.gmra.mxu0 %v979
    %v1382 = vpop.f32.mrf.mxu0
    %v1383 = vadd.f32 %v370, %v1382
    %1384 = vmatmul.f32.gmra.mxu0 %v982
    %v1385 = vpop.f32.mrf.mxu0
    %v1386 = vadd.f32 %v375, %v1385
    %1387 = vmatmul.f32.gmra.mxu0 %v985
    %v1388 = vpop.f32.mrf.mxu0
    %v1389 = vadd.f32 %v380, %v1388
    %1390 = vmatmul.f32.gmra.mxu0 %v988
    %v1391 = vpop.f32.mrf.mxu0
    %v1392 = vadd.f32 %v385, %v1391
    %1393 = vmatmul.f32.gmra.mxu0 %v991
    %v1394 = vpop.f32.mrf.mxu0
    %v1395 = vadd.f32 %v390, %v1394
    %1396 = vmatmul.f32.gmra.mxu0 %v994
    %v1397 = vpop.f32.mrf.mxu0
    %v1398 = vadd.f32 %v395, %v1397
    %1399 = vmatmul.f32.gmra.mxu0 %v997
    %v1400 = vpop.f32.mrf.mxu0
    %v1401 = vadd.f32 %v400, %v1400
    %1402 = vmatmul.f32.gmra.mxu0 %v1000
    %v1403 = vpop.f32.mrf.mxu0
    %v1404 = vadd.f32 %v405, %v1403
    %1405 = vmatmul.f32.gmra.mxu0 %v1003
    %v1406 = vpop.f32.mrf.mxu0
    %v1407 = vadd.f32 %v410, %v1406
    %1408 = vmatmul.f32.gmra.mxu0 %v1006
    %v1409 = vpop.f32.mrf.mxu0
    %v1410 = vadd.f32 %v415, %v1409
    %1411 = vmatmul.f32.gmra.mxu0 %v1009
    %v1412 = vpop.f32.mrf.mxu0
    %v1413 = vadd.f32 %v420, %v1412
    %1414 = vmatmul.f32.gmra.mxu0 %v1012
    %v1415 = vpop.f32.mrf.mxu0
    %v1416 = vadd.f32 %v425, %v1415
    %1417 = vmatmul.f32.gmra.mxu0 %v1015
    %v1418 = vpop.f32.mrf.mxu0
    %v1419 = vadd.f32 %v430, %v1418
    %1420 = vmatmul.f32.gmra.mxu0 %v1018
    %v1421 = vpop.f32.mrf.mxu0
    %v1422 = vadd.f32 %v435, %v1421
    %1423 = vmatmul.f32.gmra.mxu0 %v1021
    %v1424 = vpop.f32.mrf.mxu0
    %v1425 = vadd.f32 %v440, %v1424
    %1426 = vmatmul.f32.gmra.mxu0 %v1024
    %v1427 = vpop.f32.mrf.mxu0
    %v1428 = vadd.f32 %v445, %v1427
    %1429 = vmatmul.f32.gmra.mxu0 %v1027
    %v1430 = vpop.f32.mrf.mxu0
    %v1431 = vadd.f32 %v450, %v1430
    %1432 = vmatmul.f32.gmra.mxu0 %v1030
    %v1433 = vpop.f32.mrf.mxu0
    %v1434 = vadd.f32 %v455, %v1433
    %1435 = vmatmul.f32.gmra.mxu0 %v1033
    %v1436 = vpop.f32.mrf.mxu0
    %v1437 = vadd.f32 %v460, %v1436
    %1438 = vmatmul.f32.gmra.mxu0 %v1036
    %v1439 = vpop.f32.mrf.mxu0
    %v1440 = vadd.f32 %v465, %v1439
    %1441 = vmatmul.f32.gmra.mxu0 %v1039
    %v1442 = vpop.f32.mrf.mxu0
    %v1443 = vadd.f32 %v470, %v1442
    %1444 = vmatmul.f32.gmra.mxu0 %v1042
    %v1445 = vpop.f32.mrf.mxu0
    %v1446 = vadd.f32 %v475, %v1445
    %1447 = vmatmul.f32.gmra.mxu0 %v1045
    %v1448 = vpop.f32.mrf.mxu0
    %v1449 = vadd.f32 %v480, %v1448
    %1450 = vmatmul.f32.gmra.mxu0 %v1048
    %v1451 = vpop.f32.mrf.mxu0
    %v1452 = vadd.f32 %v485, %v1451
    %1453 = vmatmul.f32.gmra.mxu0 %v1051
    %v1454 = vpop.f32.mrf.mxu0
    %v1455 = vadd.f32 %v490, %v1454
    %1456 = vmatmul.f32.gmra.mxu0 %v1054
    %v1457 = vpop.f32.mrf.mxu0
    %v1458 = vadd.f32 %v495, %v1457
    %1459 = vmatmul.f32.gmra.mxu0 %v1057
    %v1460 = vpop.f32.mrf.mxu0
    %v1461 = vadd.f32 %v500, %v1460
    %1462 = vmatmul.f32.gmra.mxu0 %v1060
    %v1463 = vpop.f32.mrf.mxu0
    %v1464 = vadd.f32 %v505, %v1463
    %1465 = vmatmul.f32.gmra.mxu0 %v1063
    %v1466 = vpop.f32.mrf.mxu0
    %v1467 = vadd.f32 %v510, %v1466
    %1468 = vmatmul.f32.gmra.mxu0 %v1066
    %v1469 = vpop.f32.mrf.mxu0
    %v1470 = vadd.f32 %v515, %v1469
    %1471 = vmatmul.f32.gmra.mxu0 %v1069
    %v1472 = vpop.f32.mrf.mxu0
    %v1473 = vadd.f32 %v520, %v1472
    %1474 = vmatmul.f32.gmra.mxu0 %v1072
    %v1475 = vpop.f32.mrf.mxu0
    %v1476 = vadd.f32 %v525, %v1475
    %1477 = vmatmul.f32.gmra.mxu0 %v1075
    %v1478 = vpop.f32.mrf.mxu0
    %v1479 = vadd.f32 %v530, %v1478
    %1480 = vmatmul.f32.gmra.mxu0 %v1078
    %v1481 = vpop.f32.mrf.mxu0
    %v1482 = vadd.f32 %v535, %v1481
    %1483 = vmatmul.f32.gmra.mxu0 %v1081
    %v1484 = vpop.f32.mrf.mxu0
    %v1485 = vadd.f32 %v540, %v1484
    %1486 = vmatmul.f32.gmra.mxu0 %v1084
    %v1487 = vpop.f32.mrf.mxu0
    %v1488 = vadd.f32 %v545, %v1487
    %1489 = vmatmul.f32.gmra.mxu0 %v1087
    %v1490 = vpop.f32.mrf.mxu0
    %v1491 = vadd.f32 %v550, %v1490
    %1492 = vmatmul.f32.gmra.mxu0 %v1090
    %v1493 = vpop.f32.mrf.mxu0
    %v1494 = vadd.f32 %v555, %v1493
    %1495 = vmatmul.f32.gmra.mxu0 %v1093
    %v1496 = vpop.f32.mrf.mxu0
    %v1497 = vadd.f32 %v560, %v1496
    %1498 = vmatmul.f32.gmra.mxu0 %v1096
    %v1499 = vpop.f32.mrf.mxu0
    %v1500 = vadd.f32 %v565, %v1499
    %1501 = vmatmul.f32.gmra.mxu0 %v1099
    %v1502 = vpop.f32.mrf.mxu0
    %v1503 = vadd.f32 %v570, %v1502
    %1504 = vmatmul.f32.gmra.mxu0 %v1102
    %v1505 = vpop.f32.mrf.mxu0
    %v1506 = vadd.f32 %v575, %v1505
    %1507 = vmatmul.f32.gmra.mxu0 %v1105
    %v1508 = vpop.f32.mrf.mxu0
    %v1509 = vadd.f32 %v580, %v1508
    %1510 = vmatmul.f32.gmra.mxu0 %v1108
    %v1511 = vpop.f32.mrf.mxu0
    %v1512 = vadd.f32 %v585, %v1511
    %1513 = vmatmul.f32.gmra.mxu0 %v1111
    %v1514 = vpop.f32.mrf.mxu0
    %v1515 = vadd.f32 %v590, %v1514
    %1516 = vmatmul.f32.gmra.mxu0 %v1114
    %v1517 = vpop.f32.mrf.mxu0
    %v1518 = vadd.f32 %v595, %v1517
    %1519 = vmatmul.f32.gmra.mxu0 %v1117
    %v1520 = vpop.f32.mrf.mxu0
    %v1521 = vadd.f32 %v600, %v1520
    %1522 = vmatmul.f32.gmra.mxu0 %v1120
    %v1523 = vpop.f32.mrf.mxu0
    %v1524 = vadd.f32 %v605, %v1523
    %1525 = vmatmul.f32.gmra.mxu0 %v1123
    %v1526 = vpop.f32.mrf.mxu0
    %v1527 = vadd.f32 %v610, %v1526
    %1528 = vmatmul.f32.gmra.mxu0 %v1126
    %v1529 = vpop.f32.mrf.mxu0
    %v1530 = vadd.f32 %v615, %v1529
    %1531 = vmatmul.f32.gmra.mxu0 %v1129
    %v1532 = vpop.f32.mrf.mxu0
    %v1533 = vadd.f32 %v620, %v1532
    %1534 = vmatmul.f32.gmra.mxu0 %v1132
    %v1535 = vpop.f32.mrf.mxu0
    %v1536 = vadd.f32 %v625, %v1535
    %1537 = vmatmul.f32.gmra.mxu0 %v1135
    %v1538 = vpop.f32.mrf.mxu0
    %v1539 = vadd.f32 %v630, %v1538
    %1540 = vmatmul.f32.gmra.mxu0 %v1138
    %v1541 = vpop.f32.mrf.mxu0
    %v1542 = vadd.f32 %v635, %v1541
    %1543 = vmatmul.f32.gmra.mxu0 %v1141
    %v1544 = vpop.f32.mrf.mxu0
    %v1545 = vadd.f32 %v640, %v1544
    %1546 = vmatmul.f32.gmra.mxu0 %v1144
    %v1547 = vpop.f32.mrf.mxu0
    %v1548 = vadd.f32 %v645, %v1547
    %1549 = vmatmul.f32.gmra.mxu0 %v1147
    %v1550 = vpop.f32.mrf.mxu0
    %v1551 = vadd.f32 %v650, %v1550
    %1552 = vmatmul.f32.gmra.mxu0 %v1150
    %v1553 = vpop.f32.mrf.mxu0
    %v1554 = vadd.f32 %v655, %v1553
    %1555 = vmatmul.f32.gmra.mxu0 %v1153
    %v1556 = vpop.f32.mrf.mxu0
    %v1557 = vadd.f32 %v660, %v1556
    %1558 = vmatmul.f32.gmra.mxu0 %v1156
    %v1559 = vpop.f32.mrf.mxu0
    %v1560 = vadd.f32 %v665, %v1559
    %1561 = vmatmul.f32.gmra.mxu0 %v1159
    %v1562 = vpop.f32.mrf.mxu0
    %v1563 = vadd.f32 %v670, %v1562
    %1564 = vmatmul.f32.gmra.mxu0 %v1162
    %v1565 = vpop.f32.mrf.mxu0
    %v1566 = vadd.f32 %v675, %v1565
    %1567 = vmatmul.f32.gmra.mxu0 %v1165
    %v1568 = vpop.f32.mrf.mxu0
    %v1569 = vadd.f32 %v680, %v1568
    %1570 = vmatmul.f32.gmra.mxu0 %v1168
    %v1571 = vpop.f32.mrf.mxu0
    %v1572 = vadd.f32 %v685, %v1571
    %1573 = vmatmul.f32.gmra.mxu0 %v1171
    %v1574 = vpop.f32.mrf.mxu0
    %v1575 = vadd.f32 %v690, %v1574
    %1576 = vmatmul.f32.gmra.mxu0 %v1174
    %v1577 = vpop.f32.mrf.mxu0
    %v1578 = vadd.f32 %v695, %v1577
    %1579 = vmatmul.f32.gmra.mxu0 %v1177
    %v1580 = vpop.f32.mrf.mxu0
    %v1581 = vadd.f32 %v700, %v1580
    %1582 = vmatmul.f32.gmra.mxu0 %v1180
    %v1583 = vpop.f32.mrf.mxu0
    %v1584 = vadd.f32 %v705, %v1583
    %1585 = vmatmul.f32.gmra.mxu0 %v1183
    %v1586 = vpop.f32.mrf.mxu0
    %v1587 = vadd.f32 %v710, %v1586
    %1588 = vmatmul.f32.gmra.mxu0 %v1186
    %v1589 = vpop.f32.mrf.mxu0
    %v1590 = vadd.f32 %v715, %v1589
    %1591 = vmatmul.f32.gmra.mxu0 %v1189
    %v1592 = vpop.f32.mrf.mxu0
    %v1593 = vadd.f32 %v720, %v1592
    %1594 = vmatmul.f32.gmra.mxu0 %v1192
    %v1595 = vpop.f32.mrf.mxu0
    %v1596 = vadd.f32 %v725, %v1595
    %1597 = vmatmul.f32.gmra.mxu0 %v1195
    %v1598 = vpop.f32.mrf.mxu0
    %v1599 = vadd.f32 %v730, %v1598
    %1600 = vmatmul.f32.gmra.mxu0 %v1198
    %v1601 = vpop.f32.mrf.mxu0
    %v1602 = vadd.f32 %v735, %v1601
    %1603 = vmatmul.f32.gmra.mxu0 %v1201
    %v1604 = vpop.f32.mrf.mxu0
    %v1605 = vadd.f32 %v740, %v1604
    %1606 = vmatmul.f32.gmra.mxu0 %v1204
    %v1607 = vpop.f32.mrf.mxu0
    %v1608 = vadd.f32 %v745, %v1607
    %1609 = vmatmul.f32.gmra.mxu0 %v1207
    %v1610 = vpop.f32.mrf.mxu0
    %v1611 = vadd.f32 %v750, %v1610
    %1612 = vmatmul.f32.gmra.mxu0 %v1210
    %v1613 = vpop.f32.mrf.mxu0
    %v1614 = vadd.f32 %v755, %v1613
    %1615 = vmatmul.f32.gmra.mxu0 %v1213
    %v1616 = vpop.f32.mrf.mxu0
    %v1617 = vadd.f32 %v760, %v1616
    %1618 = vmatmul.f32.gmra.mxu0 %v1216
    %v1619 = vpop.f32.mrf.mxu0
    %v1620 = vadd.f32 %v765, %v1619
    %1621 = vmatmul.f32.gmra.mxu0 %v1219
    %v1622 = vpop.f32.mrf.mxu0
    %v1623 = vadd.f32 %v770, %v1622
    %1624 = vmatmul.f32.gmra.mxu0 %v1222
    %v1625 = vpop.f32.mrf.mxu0
    %v1626 = vadd.f32 %v775, %v1625
    %1627 = vmatmul.f32.gmra.mxu0 %v1225
    %v1628 = vpop.f32.mrf.mxu0
    %v1629 = vadd.f32 %v780, %v1628
    %1630 = vmatmul.f32.gmra.mxu0 %v1228
    %v1631 = vpop.f32.mrf.mxu0
    %v1632 = vadd.f32 %v785, %v1631
    %1633 = vmatmul.f32.gmra.mxu0 %v1231
    %v1634 = vpop.f32.mrf.mxu0
    %v1635 = vadd.f32 %v790, %v1634
    %1636 = vmatmul.f32.gmra.mxu0 %v1234
    %v1637 = vpop.f32.mrf.mxu0
    %v1638 = vadd.f32 %v795, %v1637
    %1639 = vmatmul.f32.gmra.mxu0 %v1237
    %v1640 = vpop.f32.mrf.mxu0
    %v1641 = vadd.f32 %v800, %v1640
    %1642 = vmatmul.f32.gmra.mxu0 %v1240
    %v1643 = vpop.f32.mrf.mxu0
    %v1644 = vadd.f32 %v805, %v1643
    %1645 = vmatmul.f32.gmra.mxu0 %v1243
    %v1646 = vpop.f32.mrf.mxu0
    %v1647 = vadd.f32 %v810, %v1646
    %1648 = vmatmul.f32.gmra.mxu0 %v1246
    %v1649 = vpop.f32.mrf.mxu0
    %v1650 = vadd.f32 %v815, %v1649
    %1651 = vmatmul.f32.gmra.mxu0 %v1249
    %v1652 = vpop.f32.mrf.mxu0
    %v1653 = vadd.f32 %v820, %v1652
    %1654 = vmatmul.f32.gmra.mxu0 %v1252
    %v1655 = vpop.f32.mrf.mxu0
    %v1656 = vadd.f32 %v825, %v1655
    %1657 = vmatmul.f32.gmra.mxu0 %v1255
    %v1658 = vpop.f32.mrf.mxu0
    %v1659 = vadd.f32 %v830, %v1658
    %1660 = vmatmul.f32.gmra.mxu0 %v1258
    %v1661 = vpop.f32.mrf.mxu0
    %v1662 = vadd.f32 %v835, %v1661
    %1663 = vmatmul.f32.gmra.mxu0 %v1261
    %v1664 = vpop.f32.mrf.mxu0
    %v1665 = vadd.f32 %v840, %v1664
    %1666 = vmatmul.f32.gmra.mxu0 %v1264
    %v1667 = vpop.f32.mrf.mxu0
    %v1668 = vadd.f32 %v845, %v1667
    %1669 = vmatmul.f32.gmra.mxu0 %v1267
    %v1670 = vpop.f32.mrf.mxu0
    %v1671 = vadd.f32 %v850, %v1670
    %1672 = vmatmul.f32.gmra.mxu0 %v1270
    %v1673 = vpop.f32.mrf.mxu0
    %v1674 = vadd.f32 %v855, %v1673
    %1675 = vmatmul.f32.gmra.mxu0 %v1273
    %v1676 = vpop.f32.mrf.mxu0
    %v1677 = vadd.f32 %v860, %v1676
    %1678 = vmatmul.f32.gmra.mxu0 %v1276
    %v1679 = vpop.f32.mrf.mxu0
    %v1680 = vadd.f32 %v865, %v1679
    %1681 = vmatmul.f32.gmra.mxu0 %v1279
    %v1682 = vpop.f32.mrf.mxu0
    %v1683 = vadd.f32 %v870, %v1682
    %1684 = vmatmul.f32.gmra.mxu0 %v1282
    %v1685 = vpop.f32.mrf.mxu0
    %v1686 = vadd.f32 %v875, %v1685
    %1687 = vmatmul.f32.gmra.mxu0 %v1285
    %v1688 = vpop.f32.mrf.mxu0
    %v1689 = vadd.f32 %v880, %v1688
    %1690 = vmatmul.f32.gmra.mxu0 %v1288
    %v1691 = vpop.f32.mrf.mxu0
    %v1692 = vadd.f32 %v885, %v1691
    %1693 = vmatmul.f32.gmra.mxu0 %v1291
    %v1694 = vpop.f32.mrf.mxu0
    %v1695 = vadd.f32 %v890, %v1694
    %1696 = vmatmul.f32.gmra.mxu0 %v1294
    %v1697 = vpop.f32.mrf.mxu0
    %v1698 = vadd.f32 %v895, %v1697
    %1699 = vmatmul.f32.gmra.mxu0 %v1297
    %v1700 = vpop.f32.mrf.mxu0
    %v1701 = vadd.f32 %v900, %v1700
    %1702 = vmatmul.f32.gmra.mxu0 %v1300
    %v1703 = vpop.f32.mrf.mxu0
    %v1704 = vadd.f32 %v905, %v1703
    %1705 = vmatmul.f32.gmra.mxu0 %v1303
    %v1706 = vpop.f32.mrf.mxu0
    %v1707 = vadd.f32 %v910, %v1706
    %1708 = vmatmul.f32.gmra.mxu0 %v1306
    %v1709 = vpop.f32.mrf.mxu0
    %v1710 = vadd.f32 %v915, %v1709
    %1711 = vmatmul.f32.gmra.mxu0 %v1309
    %v1712 = vpop.f32.mrf.mxu0
    %v1713 = vadd.f32 %v920, %v1712
    %1714 = vmatmul.f32.gmra.mxu0 %v1312
    %v1715 = vpop.f32.mrf.mxu0
    %v1716 = vadd.f32 %v925, %v1715
    %1717 = vmatmul.f32.gmra.mxu0 %v1315
    %v1718 = vpop.f32.mrf.mxu0
    %v1719 = vadd.f32 %v930, %v1718
    %1720 = vdwg.mxu0
    %v1721 = vmax.f32 %v1338, 0.0
    %v1722 = vmax.f32 %v1341, 0.0
    %v1723 = vmax.f32 %v1344, 0.0
    %v1724 = vmax.f32 %v1347, 0.0
    %v1725 = vmax.f32 %v1350, 0.0
    %v1726 = vmax.f32 %v1353, 0.0
    %v1727 = vmax.f32 %v1356, 0.0
    %v1728 = vmax.f32 %v1359, 0.0
    %v1729 = vmax.f32 %v1362, 0.0
    %v1730 = vmax.f32 %v1365, 0.0
    %v1731 = vmax.f32 %v1368, 0.0
    %v1732 = vmax.f32 %v1371, 0.0
    %v1733 = vmax.f32 %v1374, 0.0
    %v1734 = vmax.f32 %v1377, 0.0
    %v1735 = vmax.f32 %v1380, 0.0
    %v1736 = vmax.f32 %v1383, 0.0
    %v1737 = vmax.f32 %v1386, 0.0
    %v1738 = vmax.f32 %v1389, 0.0
    %v1739 = vmax.f32 %v1392, 0.0
    %v1740 = vmax.f32 %v1395, 0.0
    %v1741 = vmax.f32 %v1398, 0.0
    %v1742 = vmax.f32 %v1401, 0.0
    %v1743 = vmax.f32 %v1404, 0.0
    %v1744 = vmax.f32 %v1407, 0.0
    %v1745 = vmax.f32 %v1410, 0.0
    %v1746 = vmax.f32 %v1413, 0.0
    %v1747 = vmax.f32 %v1416, 0.0
    %v1748 = vmax.f32 %v1419, 0.0
    %v1749 = vmax.f32 %v1422, 0.0
    %v1750 = vmax.f32 %v1425, 0.0
    %v1751 = vmax.f32 %v1428, 0.0
    %v1752 = vmax.f32 %v1431, 0.0
    %v1753 = vmax.f32 %v1434, 0.0
    %v1754 = vmax.f32 %v1437, 0.0
    %v1755 = vmax.f32 %v1440, 0.0
    %v1756 = vmax.f32 %v1443, 0.0
    %v1757 = vmax.f32 %v1446, 0.0
    %v1758 = vmax.f32 %v1449, 0.0
    %v1759 = vmax.f32 %v1452, 0.0
    %v1760 = vmax.f32 %v1455, 0.0
    %v1761 = vmax.f32 %v1458, 0.0
    %v1762 = vmax.f32 %v1461, 0.0
    %v1763 = vmax.f32 %v1464, 0.0
    %v1764 = vmax.f32 %v1467, 0.0
    %v1765 = vmax.f32 %v1470, 0.0
    %v1766 = vmax.f32 %v1473, 0.0
    %v1767 = vmax.f32 %v1476, 0.0
    %v1768 = vmax.f32 %v1479, 0.0
    %v1769 = vmax.f32 %v1482, 0.0
    %v1770 = vmax.f32 %v1485, 0.0
    %v1771 = vmax.f32 %v1488, 0.0
    %v1772 = vmax.f32 %v1491, 0.0
    %v1773 = vmax.f32 %v1494, 0.0
    %v1774 = vmax.f32 %v1497, 0.0
    %v1775 = vmax.f32 %v1500, 0.0
    %v1776 = vmax.f32 %v1503, 0.0
    %v1777 = vmax.f32 %v1506, 0.0
    %v1778 = vmax.f32 %v1509, 0.0
    %v1779 = vmax.f32 %v1512, 0.0
    %v1780 = vmax.f32 %v1515, 0.0
    %v1781 = vmax.f32 %v1518, 0.0
    %v1782 = vmax.f32 %v1521, 0.0
    %v1783 = vmax.f32 %v1524, 0.0
    %v1784 = vmax.f32 %v1527, 0.0
    %v1785 = vmax.f32 %v1530, 0.0
    %v1786 = vmax.f32 %v1533, 0.0
    %v1787 = vmax.f32 %v1536, 0.0
    %v1788 = vmax.f32 %v1539, 0.0
    %v1789 = vmax.f32 %v1542, 0.0
    %v1790 = vmax.f32 %v1545, 0.0
    %v1791 = vmax.f32 %v1548, 0.0
    %v1792 = vmax.f32 %v1551, 0.0
    %v1793 = vmax.f32 %v1554, 0.0
    %v1794 = vmax.f32 %v1557, 0.0
    %v1795 = vmax.f32 %v1560, 0.0
    %v1796 = vmax.f32 %v1563, 0.0
    %v1797 = vmax.f32 %v1566, 0.0
    %v1798 = vmax.f32 %v1569, 0.0
    %v1799 = vmax.f32 %v1572, 0.0
    %v1800 = vmax.f32 %v1575, 0.0
    %v1801 = vmax.f32 %v1578, 0.0
    %v1802 = vmax.f32 %v1581, 0.0
    %v1803 = vmax.f32 %v1584, 0.0
    %v1804 = vmax.f32 %v1587, 0.0
    %v1805 = vmax.f32 %v1590, 0.0
    %v1806 = vmax.f32 %v1593, 0.0
    %v1807 = vmax.f32 %v1596, 0.0
    %v1808 = vmax.f32 %v1599, 0.0
    %v1809 = vmax.f32 %v1602, 0.0
    %v1810 = vmax.f32 %v1605, 0.0
    %v1811 = vmax.f32 %v1608, 0.0
    %v1812 = vmax.f32 %v1611, 0.0
    %v1813 = vmax.f32 %v1614, 0.0
    %v1814 = vmax.f32 %v1617, 0.0
    %v1815 = vmax.f32 %v1620, 0.0
    %v1816 = vmax.f32 %v1623, 0.0
    %v1817 = vmax.f32 %v1626, 0.0
    %v1818 = vmax.f32 %v1629, 0.0
    %v1819 = vmax.f32 %v1632, 0.0
    %v1820 = vmax.f32 %v1635, 0.0
    %v1821 = vmax.f32 %v1638, 0.0
    %v1822 = vmax.f32 %v1641, 0.0
    %v1823 = vmax.f32 %v1644, 0.0
    %v1824 = vmax.f32 %v1647, 0.0
    %v1825 = vmax.f32 %v1650, 0.0
    %v1826 = vmax.f32 %v1653, 0.0
    %v1827 = vmax.f32 %v1656, 0.0
    %v1828 = vmax.f32 %v1659, 0.0
    %v1829 = vmax.f32 %v1662, 0.0
    %v1830 = vmax.f32 %v1665, 0.0
    %v1831 = vmax.f32 %v1668, 0.0
    %v1832 = vmax.f32 %v1671, 0.0
    %v1833 = vmax.f32 %v1674, 0.0
    %v1834 = vmax.f32 %v1677, 0.0
    %v1835 = vmax.f32 %v1680, 0.0
    %v1836 = vmax.f32 %v1683, 0.0
    %v1837 = vmax.f32 %v1686, 0.0
    %v1838 = vmax.f32 %v1689, 0.0
    %v1839 = vmax.f32 %v1692, 0.0
    %v1840 = vmax.f32 %v1695, 0.0
    %v1841 = vmax.f32 %v1698, 0.0
    %v1842 = vmax.f32 %v1701, 0.0
    %v1843 = vmax.f32 %v1704, 0.0
    %v1844 = vmax.f32 %v1707, 0.0
    %v1845 = vmax.f32 %v1710, 0.0
    %v1846 = vmax.f32 %v1713, 0.0
    %v1847 = vmax.f32 %v1716, 0.0
    %v1848 = vmax.f32 %v1719, 0.0
    %v1849 = vld [vmem:[%s3] sm:$0xff]
    %v1850 = vld [vmem:[%s3 + $0x8] sm:$0xff]
    %v1851 = vld [vmem:[%s3 + $0x10] sm:$0xff]
    %v1852 = vld [vmem:[%s3 + $0x18] sm:$0xff]
    %v1853 = vld [vmem:[%s3 + $0x20] sm:$0xff]
    %v1854 = vld [vmem:[%s3 + $0x28] sm:$0xff]
    %v1855 = vld [vmem:[%s3 + $0x30] sm:$0xff]
    %v1856 = vld [vmem:[%s3 + $0x38] sm:$0xff]
    %v1857 = vld [vmem:[%s3 + $0x40] sm:$0xff]
    %v1858 = vld [vmem:[%s3 + $0x48] sm:$0xff]
    %v1859 = vld [vmem:[%s3 + $0x50] sm:$0xff]
    %v1860 = vld [vmem:[%s3 + $0x58] sm:$0xff]
    %v1861 = vld [vmem:[%s3 + $0x60] sm:$0xff]
    %v1862 = vld [vmem:[%s3 + $0x68] sm:$0xff]
    %v1863 = vld [vmem:[%s3 + $0x70] sm:$0xff]
    %v1864 = vld [vmem:[%s3 + $0x78] sm:$0xff]
    %v1865 = vld [vmem:[%s3 + $0x80] sm:$0xff]
    %v1866 = vld [vmem:[%s3 + $0x88] sm:$0xff]
    %v1867 = vld [vmem:[%s3 + $0x90] sm:$0xff]
    %v1868 = vld [vmem:[%s3 + $0x98] sm:$0xff]
    %v1869 = vld [vmem:[%s3 + $0xa0] sm:$0xff]
    %v1870 = vld [vmem:[%s3 + $0xa8] sm:$0xff]
    %v1871 = vld [vmem:[%s3 + $0xb0] sm:$0xff]
    %v1872 = vld [vmem:[%s3 + $0xb8] sm:$0xff]
    %v1873 = vld [vmem:[%s3 + $0xc0] sm:$0xff]
    %v1874 = vld [vmem:[%s3 + $0xc8] sm:$0xff]
    %v1875 = vld [vmem:[%s3 + $0xd0] sm:$0xff]
    %v1876 = vld [vmem:[%s3 + $0xd8] sm:$0xff]
    %v1877 = vld [vmem:[%s3 + $0xe0] sm:$0xff]
    %v1878 = vld [vmem:[%s3 + $0xe8] sm:$0xff]
    %v1879 = vld [vmem:[%s3 + $0xf0] sm:$0xff]
    %v1880 = vld [vmem:[%s3 + $0xf8] sm:$0xff]
    %v1881 = vld [vmem:[%s3 + $0x100] sm:$0xff]
    %v1882 = vld [vmem:[%s3 + $0x108] sm:$0xff]
    %v1883 = vld [vmem:[%s3 + $0x110] sm:$0xff]
    %v1884 = vld [vmem:[%s3 + $0x118] sm:$0xff]
    %v1885 = vld [vmem:[%s3 + $0x120] sm:$0xff]
    %v1886 = vld [vmem:[%s3 + $0x128] sm:$0xff]
    %v1887 = vld [vmem:[%s3 + $0x130] sm:$0xff]
    %v1888 = vld [vmem:[%s3 + $0x138] sm:$0xff]
    %v1889 = vld [vmem:[%s3 + $0x140] sm:$0xff]
    %v1890 = vld [vmem:[%s3 + $0x148] sm:$0xff]
    %v1891 = vld [vmem:[%s3 + $0x150] sm:$0xff]
    %v1892 = vld [vmem:[%s3 + $0x158] sm:$0xff]
    %v1893 = vld [vmem:[%s3 + $0x160] sm:$0xff]
    %v1894 = vld [vmem:[%s3 + $0x168] sm:$0xff]
    %v1895 = vld [vmem:[%s3 + $0x170] sm:$0xff]
    %v1896 = vld [vmem:[%s3 + $0x178] sm:$0xff]
    %v1897 = vld [vmem:[%s3 + $0x180] sm:$0xff]
    %v1898 = vld [vmem:[%s3 + $0x188] sm:$0xff]
    %v1899 = vld [vmem:[%s3 + $0x190] sm:$0xff]
    %v1900 = vld [vmem:[%s3 + $0x198] sm:$0xff]
    %v1901 = vld [vmem:[%s3 + $0x1a0] sm:$0xff]
    %v1902 = vld [vmem:[%s3 + $0x1a8] sm:$0xff]
    %v1903 = vld [vmem:[%s3 + $0x1b0] sm:$0xff]
    %v1904 = vld [vmem:[%s3 + $0x1b8] sm:$0xff]
    %v1905 = vld [vmem:[%s3 + $0x1c0] sm:$0xff]
    %v1906 = vld [vmem:[%s3 + $0x1c8] sm:$0xff]
    %v1907 = vld [vmem:[%s3 + $0x1d0] sm:$0xff]
    %v1908 = vld [vmem:[%s3 + $0x1d8] sm:$0xff]
    %v1909 = vld [vmem:[%s3 + $0x1e0] sm:$0xff]
    %v1910 = vld [vmem:[%s3 + $0x1e8] sm:$0xff]
    %v1911 = vld [vmem:[%s3 + $0x1f0] sm:$0xff]
    %v1912 = vld [vmem:[%s3 + $0x1f8] sm:$0xff]
    %v1913 = vld [vmem:[%s3 + $0x200] sm:$0xff]
    %v1914 = vld [vmem:[%s3 + $0x208] sm:$0xff]
    %v1915 = vld [vmem:[%s3 + $0x210] sm:$0xff]
    %v1916 = vld [vmem:[%s3 + $0x218] sm:$0xff]
    %v1917 = vld [vmem:[%s3 + $0x220] sm:$0xff]
    %v1918 = vld [vmem:[%s3 + $0x228] sm:$0xff]
    %v1919 = vld [vmem:[%s3 + $0x230] sm:$0xff]
    %v1920 = vld [vmem:[%s3 + $0x238] sm:$0xff]
    %v1921 = vld [vmem:[%s3 + $0x240] sm:$0xff]
    %v1922 = vld [vmem:[%s3 + $0x248] sm:$0xff]
    %v1923 = vld [vmem:[%s3 + $0x250] sm:$0xff]
    %v1924 = vld [vmem:[%s3 + $0x258] sm:$0xff]
    %v1925 = vld [vmem:[%s3 + $0x260] sm:$0xff]
    %v1926 = vld [vmem:[%s3 + $0x268] sm:$0xff]
    %v1927 = vld [vmem:[%s3 + $0x270] sm:$0xff]
    %v1928 = vld [vmem:[%s3 + $0x278] sm:$0xff]
    %v1929 = vld [vmem:[%s3 + $0x280] sm:$0xff]
    %v1930 = vld [vmem:[%s3 + $0x288] sm:$0xff]
    %v1931 = vld [vmem:[%s3 + $0x290] sm:$0xff]
    %v1932 = vld [vmem:[%s3 + $0x298] sm:$0xff]
    %v1933 = vld [vmem:[%s3 + $0x2a0] sm:$0xff]
    %v1934 = vld [vmem:[%s3 + $0x2a8] sm:$0xff]
    %v1935 = vld [vmem:[%s3 + $0x2b0] sm:$0xff]
    %v1936 = vld [vmem:[%s3 + $0x2b8] sm:$0xff]
    %v1937 = vld [vmem:[%s3 + $0x2c0] sm:$0xff]
    %v1938 = vld [vmem:[%s3 + $0x2c8] sm:$0xff]
    %v1939 = vld [vmem:[%s3 + $0x2d0] sm:$0xff]
    %v1940 = vld [vmem:[%s3 + $0x2d8] sm:$0xff]
    %v1941 = vld [vmem:[%s3 + $0x2e0] sm:$0xff]
    %v1942 = vld [vmem:[%s3 + $0x2e8] sm:$0xff]
    %v1943 = vld [vmem:[%s3 + $0x2f0] sm:$0xff]
    %v1944 = vld [vmem:[%s3 + $0x2f8] sm:$0xff]
    %v1945 = vld [vmem:[%s3 + $0x300] sm:$0xff]
    %v1946 = vld [vmem:[%s3 + $0x308] sm:$0xff]
    %v1947 = vld [vmem:[%s3 + $0x310] sm:$0xff]
    %v1948 = vld [vmem:[%s3 + $0x318] sm:$0xff]
    %v1949 = vld [vmem:[%s3 + $0x320] sm:$0xff]
    %v1950 = vld [vmem:[%s3 + $0x328] sm:$0xff]
    %v1951 = vld [vmem:[%s3 + $0x330] sm:$0xff]
    %v1952 = vld [vmem:[%s3 + $0x338] sm:$0xff]
    %v1953 = vld [vmem:[%s3 + $0x340] sm:$0xff]
    %v1954 = vld [vmem:[%s3 + $0x348] sm:$0xff]
    %v1955 = vld [vmem:[%s3 + $0x350] sm:$0xff]
    %v1956 = vld [vmem:[%s3 + $0x358] sm:$0xff]
    %v1957 = vld [vmem:[%s3 + $0x360] sm:$0xff]
    %v1958 = vld [vmem:[%s3 + $0x368] sm:$0xff]
    %v1959 = vld [vmem:[%s3 + $0x370] sm:$0xff]
    %v1960 = vld [vmem:[%s3 + $0x378] sm:$0xff]
    %v1961 = vld [vmem:[%s3 + $0x380] sm:$0xff]
    %v1962 = vld [vmem:[%s3 + $0x388] sm:$0xff]
    %v1963 = vld [vmem:[%s3 + $0x390] sm:$0xff]
    %v1964 = vld [vmem:[%s3 + $0x398] sm:$0xff]
    %v1965 = vld [vmem:[%s3 + $0x3a0] sm:$0xff]
    %v1966 = vld [vmem:[%s3 + $0x3a8] sm:$0xff]
    %v1967 = vld [vmem:[%s3 + $0x3b0] sm:$0xff]
    %v1968 = vld [vmem:[%s3 + $0x3b8] sm:$0xff]
    %v1969 = vld [vmem:[%s3 + $0x3c0] sm:$0xff]
    %v1970 = vld [vmem:[%s3 + $0x3c8] sm:$0xff]
    %v1971 = vld [vmem:[%s3 + $0x3d0] sm:$0xff]
    %v1972 = vld [vmem:[%s3 + $0x3d8] sm:$0xff]
    %v1973 = vld [vmem:[%s3 + $0x3e0] sm:$0xff]
    %v1974 = vld [vmem:[%s3 + $0x3e8] sm:$0xff]
    %v1975 = vld [vmem:[%s3 + $0x3f0] sm:$0xff]
    %v1976 = vld [vmem:[%s3 + $0x3f8] sm:$0xff]
    %v1977 = vld [vmem:[%s3 + $0x400] sm:$0xff]
    %v1978 = vld [vmem:[%s3 + $0x408] sm:$0xff]
    %v1979 = vld [vmem:[%s3 + $0x410] sm:$0xff]
    %v1980 = vld [vmem:[%s3 + $0x418] sm:$0xff]
    %v1981 = vld [vmem:[%s3 + $0x420] sm:$0xff]
    %v1982 = vld [vmem:[%s3 + $0x428] sm:$0xff]
    %v1983 = vld [vmem:[%s3 + $0x430] sm:$0xff]
    %v1984 = vld [vmem:[%s3 + $0x438] sm:$0xff]
    %v1985 = vld [vmem:[%s3 + $0x440] sm:$0xff]
    %v1986 = vld [vmem:[%s3 + $0x448] sm:$0xff]
    %v1987 = vld [vmem:[%s3 + $0x450] sm:$0xff]
    %v1988 = vld [vmem:[%s3 + $0x458] sm:$0xff]
    %v1989 = vld [vmem:[%s3 + $0x460] sm:$0xff]
    %v1990 = vld [vmem:[%s3 + $0x468] sm:$0xff]
    %v1991 = vld [vmem:[%s3 + $0x470] sm:$0xff]
    %v1992 = vld [vmem:[%s3 + $0x478] sm:$0xff]
    %v1993 = vld [vmem:[%s3 + $0x480] sm:$0xff]
    %v1994 = vld [vmem:[%s3 + $0x488] sm:$0xff]
    %v1995 = vld [vmem:[%s3 + $0x490] sm:$0xff]
    %v1996 = vld [vmem:[%s3 + $0x498] sm:$0xff]
    %v1997 = vld [vmem:[%s3 + $0x4a0] sm:$0xff]
    %v1998 = vld [vmem:[%s3 + $0x4a8] sm:$0xff]
    %v1999 = vld [vmem:[%s3 + $0x4b0] sm:$0xff]
    %v2000 = vld [vmem:[%s3 + $0x4b8] sm:$0xff]
    %v2001 = vld [vmem:[%s3 + $0x4c0] sm:$0xff]
    %v2002 = vld [vmem:[%s3 + $0x4c8] sm:$0xff]
    %v2003 = vld [vmem:[%s3 + $0x4d0] sm:$0xff]
    %v2004 = vld [vmem:[%s3 + $0x4d8] sm:$0xff]
    %v2005 = vld [vmem:[%s3 + $0x4e0] sm:$0xff]
    %v2006 = vld [vmem:[%s3 + $0x4e8] sm:$0xff]
    %v2007 = vld [vmem:[%s3 + $0x4f0] sm:$0xff]
    %v2008 = vld [vmem:[%s3 + $0x4f8] sm:$0xff]
    %v2009 = vld [vmem:[%s3 + $0x500] sm:$0xff]
    %v2010 = vld [vmem:[%s3 + $0x508] sm:$0xff]
    %v2011 = vld [vmem:[%s3 + $0x510] sm:$0xff]
    %v2012 = vld [vmem:[%s3 + $0x518] sm:$0xff]
    %v2013 = vld [vmem:[%s3 + $0x520] sm:$0xff]
    %v2014 = vld [vmem:[%s3 + $0x528] sm:$0xff]
    %v2015 = vld [vmem:[%s3 + $0x530] sm:$0xff]
    %v2016 = vld [vmem:[%s3 + $0x538] sm:$0xff]
    %v2017 = vld [vmem:[%s3 + $0x540] sm:$0xff]
    %v2018 = vld [vmem:[%s3 + $0x548] sm:$0xff]
    %v2019 = vld [vmem:[%s3 + $0x550] sm:$0xff]
    %v2020 = vld [vmem:[%s3 + $0x558] sm:$0xff]
    %v2021 = vld [vmem:[%s3 + $0x560] sm:$0xff]
    %v2022 = vld [vmem:[%s3 + $0x568] sm:$0xff]
    %v2023 = vld [vmem:[%s3 + $0x570] sm:$0xff]
    %v2024 = vld [vmem:[%s3 + $0x578] sm:$0xff]
    %v2025 = vld [vmem:[%s3 + $0x580] sm:$0xff]
    %v2026 = vld [vmem:[%s3 + $0x588] sm:$0xff]
    %v2027 = vld [vmem:[%s3 + $0x590] sm:$0xff]
    %v2028 = vld [vmem:[%s3 + $0x598] sm:$0xff]
    %v2029 = vld [vmem:[%s3 + $0x5a0] sm:$0xff]
    %v2030 = vld [vmem:[%s3 + $0x5a8] sm:$0xff]
    %v2031 = vld [vmem:[%s3 + $0x5b0] sm:$0xff]
    %v2032 = vld [vmem:[%s3 + $0x5b8] sm:$0xff]
    %v2033 = vld [vmem:[%s3 + $0x5c0] sm:$0xff]
    %v2034 = vld [vmem:[%s3 + $0x5c8] sm:$0xff]
    %v2035 = vld [vmem:[%s3 + $0x5d0] sm:$0xff]
    %v2036 = vld [vmem:[%s3 + $0x5d8] sm:$0xff]
    %v2037 = vld [vmem:[%s3 + $0x5e0] sm:$0xff]
    %v2038 = vld [vmem:[%s3 + $0x5e8] sm:$0xff]
    %v2039 = vld [vmem:[%s3 + $0x5f0] sm:$0xff]
    %v2040 = vld [vmem:[%s3 + $0x5f8] sm:$0xff]
    %v2041 = vld [vmem:[%s3 + $0x600] sm:$0xff]
    %v2042 = vld [vmem:[%s3 + $0x608] sm:$0xff]
    %v2043 = vld [vmem:[%s3 + $0x610] sm:$0xff]
    %v2044 = vld [vmem:[%s3 + $0x618] sm:$0xff]
    %v2045 = vld [vmem:[%s3 + $0x620] sm:$0xff]
    %v2046 = vld [vmem:[%s3 + $0x628] sm:$0xff]
    %v2047 = vld [vmem:[%s3 + $0x630] sm:$0xff]
    %v2048 = vld [vmem:[%s3 + $0x638] sm:$0xff]
    %v2049 = vld [vmem:[%s3 + $0x640] sm:$0xff]
    %v2050 = vld [vmem:[%s3 + $0x648] sm:$0xff]
    %v2051 = vld [vmem:[%s3 + $0x650] sm:$0xff]
    %v2052 = vld [vmem:[%s3 + $0x658] sm:$0xff]
    %v2053 = vld [vmem:[%s3 + $0x660] sm:$0xff]
    %v2054 = vld [vmem:[%s3 + $0x668] sm:$0xff]
    %v2055 = vld [vmem:[%s3 + $0x670] sm:$0xff]
    %v2056 = vld [vmem:[%s3 + $0x678] sm:$0xff]
    %v2057 = vld [vmem:[%s3 + $0x680] sm:$0xff]
    %v2058 = vld [vmem:[%s3 + $0x688] sm:$0xff]
    %v2059 = vld [vmem:[%s3 + $0x690] sm:$0xff]
    %v2060 = vld [vmem:[%s3 + $0x698] sm:$0xff]
    %v2061 = vld [vmem:[%s3 + $0x6a0] sm:$0xff]
    %v2062 = vld [vmem:[%s3 + $0x6a8] sm:$0xff]
    %v2063 = vld [vmem:[%s3 + $0x6b0] sm:$0xff]
    %v2064 = vld [vmem:[%s3 + $0x6b8] sm:$0xff]
    %v2065 = vld [vmem:[%s3 + $0x6c0] sm:$0xff]
    %v2066 = vld [vmem:[%s3 + $0x6c8] sm:$0xff]
    %v2067 = vld [vmem:[%s3 + $0x6d0] sm:$0xff]
    %v2068 = vld [vmem:[%s3 + $0x6d8] sm:$0xff]
    %v2069 = vld [vmem:[%s3 + $0x6e0] sm:$0xff]
    %v2070 = vld [vmem:[%s3 + $0x6e8] sm:$0xff]
    %v2071 = vld [vmem:[%s3 + $0x6f0] sm:$0xff]
    %v2072 = vld [vmem:[%s3 + $0x6f8] sm:$0xff]
    %v2073 = vld [vmem:[%s3 + $0x700] sm:$0xff]
    %v2074 = vld [vmem:[%s3 + $0x708] sm:$0xff]
    %v2075 = vld [vmem:[%s3 + $0x710] sm:$0xff]
    %v2076 = vld [vmem:[%s3 + $0x718] sm:$0xff]
    %v2077 = vld [vmem:[%s3 + $0x720] sm:$0xff]
    %v2078 = vld [vmem:[%s3 + $0x728] sm:$0xff]
    %v2079 = vld [vmem:[%s3 + $0x730] sm:$0xff]
    %v2080 = vld [vmem:[%s3 + $0x738] sm:$0xff]
    %v2081 = vld [vmem:[%s3 + $0x740] sm:$0xff]
    %v2082 = vld [vmem:[%s3 + $0x748] sm:$0xff]
    %v2083 = vld [vmem:[%s3 + $0x750] sm:$0xff]
    %v2084 = vld [vmem:[%s3 + $0x758] sm:$0xff]
    %v2085 = vld [vmem:[%s3 + $0x760] sm:$0xff]
    %v2086 = vld [vmem:[%s3 + $0x768] sm:$0xff]
    %v2087 = vld [vmem:[%s3 + $0x770] sm:$0xff]
    %v2088 = vld [vmem:[%s3 + $0x778] sm:$0xff]
    %v2089 = vld [vmem:[%s3 + $0x780] sm:$0xff]
    %v2090 = vld [vmem:[%s3 + $0x788] sm:$0xff]
    %v2091 = vld [vmem:[%s3 + $0x790] sm:$0xff]
    %v2092 = vld [vmem:[%s3 + $0x798] sm:$0xff]
    %v2093 = vld [vmem:[%s3 + $0x7a0] sm:$0xff]
    %v2094 = vld [vmem:[%s3 + $0x7a8] sm:$0xff]
    %v2095 = vld [vmem:[%s3 + $0x7b0] sm:$0xff]
    %v2096 = vld [vmem:[%s3 + $0x7b8] sm:$0xff]
    %v2097 = vld [vmem:[%s3 + $0x7c0] sm:$0xff]
    %v2098 = vld [vmem:[%s3 + $0x7c8] sm:$0xff]
    %v2099 = vld [vmem:[%s3 + $0x7d0] sm:$0xff]
    %v2100 = vld [vmem:[%s3 + $0x7d8] sm:$0xff]
    %v2101 = vld [vmem:[%s3 + $0x7e0] sm:$0xff]
    %v2102 = vld [vmem:[%s3 + $0x7e8] sm:$0xff]
    %v2103 = vld [vmem:[%s3 + $0x7f0] sm:$0xff]
    %v2104 = vld [vmem:[%s3 + $0x7f8] sm:$0xff]
    %v2105 = vld [vmem:[%s3 + $0x800] sm:$0xff]
    %v2106 = vld [vmem:[%s3 + $0x808] sm:$0xff]
    %v2107 = vld [vmem:[%s3 + $0x810] sm:$0xff]
    %v2108 = vld [vmem:[%s3 + $0x818] sm:$0xff]
    %v2109 = vld [vmem:[%s3 + $0x820] sm:$0xff]
    %v2110 = vld [vmem:[%s3 + $0x828] sm:$0xff]
    %v2111 = vld [vmem:[%s3 + $0x830] sm:$0xff]
    %v2112 = vld [vmem:[%s3 + $0x838] sm:$0xff]
    %v2113 = vld [vmem:[%s3 + $0x840] sm:$0xff]
    %v2114 = vld [vmem:[%s3 + $0x848] sm:$0xff]
    %v2115 = vld [vmem:[%s3 + $0x850] sm:$0xff]
    %v2116 = vld [vmem:[%s3 + $0x858] sm:$0xff]
    %v2117 = vld [vmem:[%s3 + $0x860] sm:$0xff]
    %v2118 = vld [vmem:[%s3 + $0x868] sm:$0xff]
    %v2119 = vld [vmem:[%s3 + $0x870] sm:$0xff]
    %v2120 = vld [vmem:[%s3 + $0x878] sm:$0xff]
    %v2121 = vld [vmem:[%s3 + $0x880] sm:$0xff]
    %v2122 = vld [vmem:[%s3 + $0x888] sm:$0xff]
    %v2123 = vld [vmem:[%s3 + $0x890] sm:$0xff]
    %v2124 = vld [vmem:[%s3 + $0x898] sm:$0xff]
    %v2125 = vld [vmem:[%s3 + $0x8a0] sm:$0xff]
    %v2126 = vld [vmem:[%s3 + $0x8a8] sm:$0xff]
    %v2127 = vld [vmem:[%s3 + $0x8b0] sm:$0xff]
    %v2128 = vld [vmem:[%s3 + $0x8b8] sm:$0xff]
    %v2129 = vld [vmem:[%s3 + $0x8c0] sm:$0xff]
    %v2130 = vld [vmem:[%s3 + $0x8c8] sm:$0xff]
    %v2131 = vld [vmem:[%s3 + $0x8d0] sm:$0xff]
    %v2132 = vld [vmem:[%s3 + $0x8d8] sm:$0xff]
    %v2133 = vld [vmem:[%s3 + $0x8e0] sm:$0xff]
    %v2134 = vld [vmem:[%s3 + $0x8e8] sm:$0xff]
    %v2135 = vld [vmem:[%s3 + $0x8f0] sm:$0xff]
    %v2136 = vld [vmem:[%s3 + $0x8f8] sm:$0xff]
    %v2137 = vld [vmem:[%s3 + $0x900] sm:$0xff]
    %v2138 = vld [vmem:[%s3 + $0x908] sm:$0xff]
    %v2139 = vld [vmem:[%s3 + $0x910] sm:$0xff]
    %v2140 = vld [vmem:[%s3 + $0x918] sm:$0xff]
    %v2141 = vld [vmem:[%s3 + $0x920] sm:$0xff]
    %v2142 = vld [vmem:[%s3 + $0x928] sm:$0xff]
    %v2143 = vld [vmem:[%s3 + $0x930] sm:$0xff]
    %v2144 = vld [vmem:[%s3 + $0x938] sm:$0xff]
    %v2145 = vld [vmem:[%s3 + $0x940] sm:$0xff]
    %v2146 = vld [vmem:[%s3 + $0x948] sm:$0xff]
    %v2147 = vld [vmem:[%s3 + $0x950] sm:$0xff]
    %v2148 = vld [vmem:[%s3 + $0x958] sm:$0xff]
    %v2149 = vld [vmem:[%s3 + $0x960] sm:$0xff]
    %v2150 = vld [vmem:[%s3 + $0x968] sm:$0xff]
    %v2151 = vld [vmem:[%s3 + $0x970] sm:$0xff]
    %v2152 = vld [vmem:[%s3 + $0x978] sm:$0xff]
    %v2153 = vld [vmem:[%s3 + $0x980] sm:$0xff]
    %v2154 = vld [vmem:[%s3 + $0x988] sm:$0xff]
    %v2155 = vld [vmem:[%s3 + $0x990] sm:$0xff]
    %v2156 = vld [vmem:[%s3 + $0x998] sm:$0xff]
    %v2157 = vld [vmem:[%s3 + $0x9a0] sm:$0xff]
    %v2158 = vld [vmem:[%s3 + $0x9a8] sm:$0xff]
    %v2159 = vld [vmem:[%s3 + $0x9b0] sm:$0xff]
    %v2160 = vld [vmem:[%s3 + $0x9b8] sm:$0xff]
    %v2161 = vld [vmem:[%s3 + $0x9c0] sm:$0xff]
    %v2162 = vld [vmem:[%s3 + $0x9c8] sm:$0xff]
    %v2163 = vld [vmem:[%s3 + $0x9d0] sm:$0xff]
    %v2164 = vld [vmem:[%s3 + $0x9d8] sm:$0xff]
    %v2165 = vld [vmem:[%s3 + $0x9e0] sm:$0xff]
    %v2166 = vld [vmem:[%s3 + $0x9e8] sm:$0xff]
    %v2167 = vld [vmem:[%s3 + $0x9f0] sm:$0xff]
    %v2168 = vld [vmem:[%s3 + $0x9f8] sm:$0xff]
    %v2169 = vld [vmem:[%s3 + $0xa00] sm:$0xff]
    %v2170 = vld [vmem:[%s3 + $0xa08] sm:$0xff]
    %v2171 = vld [vmem:[%s3 + $0xa10] sm:$0xff]
    %v2172 = vld [vmem:[%s3 + $0xa18] sm:$0xff]
    %v2173 = vld [vmem:[%s3 + $0xa20] sm:$0xff]
    %v2174 = vld [vmem:[%s3 + $0xa28] sm:$0xff]
    %v2175 = vld [vmem:[%s3 + $0xa30] sm:$0xff]
    %v2176 = vld [vmem:[%s3 + $0xa38] sm:$0xff]
    %v2177 = vld [vmem:[%s3 + $0xa40] sm:$0xff]
    %v2178 = vld [vmem:[%s3 + $0xa48] sm:$0xff]
    %v2179 = vld [vmem:[%s3 + $0xa50] sm:$0xff]
    %v2180 = vld [vmem:[%s3 + $0xa58] sm:$0xff]
    %v2181 = vld [vmem:[%s3 + $0xa60] sm:$0xff]
    %v2182 = vld [vmem:[%s3 + $0xa68] sm:$0xff]
    %v2183 = vld [vmem:[%s3 + $0xa70] sm:$0xff]
    %v2184 = vld [vmem:[%s3 + $0xa78] sm:$0xff]
    %v2185 = vld [vmem:[%s3 + $0xa80] sm:$0xff]
    %v2186 = vld [vmem:[%s3 + $0xa88] sm:$0xff]
    %v2187 = vld [vmem:[%s3 + $0xa90] sm:$0xff]
    %v2188 = vld [vmem:[%s3 + $0xa98] sm:$0xff]
    %v2189 = vld [vmem:[%s3 + $0xaa0] sm:$0xff]
    %v2190 = vld [vmem:[%s3 + $0xaa8] sm:$0xff]
    %v2191 = vld [vmem:[%s3 + $0xab0] sm:$0xff]
    %v2192 = vld [vmem:[%s3 + $0xab8] sm:$0xff]
    %v2193 = vld [vmem:[%s3 + $0xac0] sm:$0xff]
    %v2194 = vld [vmem:[%s3 + $0xac8] sm:$0xff]
    %v2195 = vld [vmem:[%s3 + $0xad0] sm:$0xff]
    %v2196 = vld [vmem:[%s3 + $0xad8] sm:$0xff]
    %v2197 = vld [vmem:[%s3 + $0xae0] sm:$0xff]
    %v2198 = vld [vmem:[%s3 + $0xae8] sm:$0xff]
    %v2199 = vld [vmem:[%s3 + $0xaf0] sm:$0xff]
    %v2200 = vld [vmem:[%s3 + $0xaf8] sm:$0xff]
    %v2201 = vld [vmem:[%s3 + $0xb00] sm:$0xff]
    %v2202 = vld [vmem:[%s3 + $0xb08] sm:$0xff]
    %v2203 = vld [vmem:[%s3 + $0xb10] sm:$0xff]
    %v2204 = vld [vmem:[%s3 + $0xb18] sm:$0xff]
    %v2205 = vld [vmem:[%s3 + $0xb20] sm:$0xff]
    %v2206 = vld [vmem:[%s3 + $0xb28] sm:$0xff]
    %v2207 = vld [vmem:[%s3 + $0xb30] sm:$0xff]
    %v2208 = vld [vmem:[%s3 + $0xb38] sm:$0xff]
    %v2209 = vld [vmem:[%s3 + $0xb40] sm:$0xff]
    %v2210 = vld [vmem:[%s3 + $0xb48] sm:$0xff]
    %v2211 = vld [vmem:[%s3 + $0xb50] sm:$0xff]
    %v2212 = vld [vmem:[%s3 + $0xb58] sm:$0xff]
    %v2213 = vld [vmem:[%s3 + $0xb60] sm:$0xff]
    %v2214 = vld [vmem:[%s3 + $0xb68] sm:$0xff]
    %v2215 = vld [vmem:[%s3 + $0xb70] sm:$0xff]
    %v2216 = vld [vmem:[%s3 + $0xb78] sm:$0xff]
    %v2217 = vld [vmem:[%s3 + $0xb80] sm:$0xff]
    %v2218 = vld [vmem:[%s3 + $0xb88] sm:$0xff]
    %v2219 = vld [vmem:[%s3 + $0xb90] sm:$0xff]
    %v2220 = vld [vmem:[%s3 + $0xb98] sm:$0xff]
    %v2221 = vld [vmem:[%s3 + $0xba0] sm:$0xff]
    %v2222 = vld [vmem:[%s3 + $0xba8] sm:$0xff]
    %v2223 = vld [vmem:[%s3 + $0xbb0] sm:$0xff]
    %v2224 = vld [vmem:[%s3 + $0xbb8] sm:$0xff]
    %v2225 = vld [vmem:[%s3 + $0xbc0] sm:$0xff]
    %v2226 = vld [vmem:[%s3 + $0xbc8] sm:$0xff]
    %v2227 = vld [vmem:[%s3 + $0xbd0] sm:$0xff]
    %v2228 = vld [vmem:[%s3 + $0xbd8] sm:$0xff]
    %v2229 = vld [vmem:[%s3 + $0xbe0] sm:$0xff]
    %v2230 = vld [vmem:[%s3 + $0xbe8] sm:$0xff]
    %v2231 = vld [vmem:[%s3 + $0xbf0] sm:$0xff]
    %v2232 = vld [vmem:[%s3 + $0xbf8] sm:$0xff]
    %v2233 = vld [vmem:[%s3 + $0xc00] sm:$0xff]
    %v2234 = vld [vmem:[%s3 + $0xc08] sm:$0xff]
    %v2235 = vld [vmem:[%s3 + $0xc10] sm:$0xff]
    %v2236 = vld [vmem:[%s3 + $0xc18] sm:$0xff]
    %v2237 = vld [vmem:[%s3 + $0xc20] sm:$0xff]
    %v2238 = vld [vmem:[%s3 + $0xc28] sm:$0xff]
    %v2239 = vld [vmem:[%s3 + $0xc30] sm:$0xff]
    %v2240 = vld [vmem:[%s3 + $0xc38] sm:$0xff]
    %v2241 = vld [vmem:[%s3 + $0xc40] sm:$0xff]
    %v2242 = vld [vmem:[%s3 + $0xc48] sm:$0xff]
    %v2243 = vld [vmem:[%s3 + $0xc50] sm:$0xff]
    %v2244 = vld [vmem:[%s3 + $0xc58] sm:$0xff]
    %v2245 = vld [vmem:[%s3 + $0xc60] sm:$0xff]
    %v2246 = vld [vmem:[%s3 + $0xc68] sm:$0xff]
    %v2247 = vld [vmem:[%s3 + $0xc70] sm:$0xff]
    %v2248 = vld [vmem:[%s3 + $0xc78] sm:$0xff]
    %v2249 = vld [vmem:[%s3 + $0xc80] sm:$0xff]
    %v2250 = vld [vmem:[%s3 + $0xc88] sm:$0xff]
    %v2251 = vld [vmem:[%s3 + $0xc90] sm:$0xff]
    %v2252 = vld [vmem:[%s3 + $0xc98] sm:$0xff]
    %v2253 = vld [vmem:[%s3 + $0xca0] sm:$0xff]
    %v2254 = vld [vmem:[%s3 + $0xca8] sm:$0xff]
    %v2255 = vld [vmem:[%s3 + $0xcb0] sm:$0xff]
    %v2256 = vld [vmem:[%s3 + $0xcb8] sm:$0xff]
    %v2257 = vld [vmem:[%s3 + $0xcc0] sm:$0xff]
    %v2258 = vld [vmem:[%s3 + $0xcc8] sm:$0xff]
    %v2259 = vld [vmem:[%s3 + $0xcd0] sm:$0xff]
    %v2260 = vld [vmem:[%s3 + $0xcd8] sm:$0xff]
    %v2261 = vld [vmem:[%s3 + $0xce0] sm:$0xff]
    %v2262 = vld [vmem:[%s3 + $0xce8] sm:$0xff]
    %v2263 = vld [vmem:[%s3 + $0xcf0] sm:$0xff]
    %v2264 = vld [vmem:[%s3 + $0xcf8] sm:$0xff]
    %v2265 = vld [vmem:[%s3 + $0xd00] sm:$0xff]
    %v2266 = vld [vmem:[%s3 + $0xd08] sm:$0xff]
    %v2267 = vld [vmem:[%s3 + $0xd10] sm:$0xff]
    %v2268 = vld [vmem:[%s3 + $0xd18] sm:$0xff]
    %v2269 = vld [vmem:[%s3 + $0xd20] sm:$0xff]
    %v2270 = vld [vmem:[%s3 + $0xd28] sm:$0xff]
    %v2271 = vld [vmem:[%s3 + $0xd30] sm:$0xff]
    %v2272 = vld [vmem:[%s3 + $0xd38] sm:$0xff]
    %v2273 = vld [vmem:[%s3 + $0xd40] sm:$0xff]
    %v2274 = vld [vmem:[%s3 + $0xd48] sm:$0xff]
    %v2275 = vld [vmem:[%s3 + $0xd50] sm:$0xff]
    %v2276 = vld [vmem:[%s3 + $0xd58] sm:$0xff]
    %v2277 = vld [vmem:[%s3 + $0xd60] sm:$0xff]
    %v2278 = vld [vmem:[%s3 + $0xd68] sm:$0xff]
    %v2279 = vld [vmem:[%s3 + $0xd70] sm:$0xff]
    %v2280 = vld [vmem:[%s3 + $0xd78] sm:$0xff]
    %v2281 = vld [vmem:[%s3 + $0xd80] sm:$0xff]
    %v2282 = vld [vmem:[%s3 + $0xd88] sm:$0xff]
    %v2283 = vld [vmem:[%s3 + $0xd90] sm:$0xff]
    %v2284 = vld [vmem:[%s3 + $0xd98] sm:$0xff]
    %v2285 = vld [vmem:[%s3 + $0xda0] sm:$0xff]
    %v2286 = vld [vmem:[%s3 + $0xda8] sm:$0xff]
    %v2287 = vld [vmem:[%s3 + $0xdb0] sm:$0xff]
    %v2288 = vld [vmem:[%s3 + $0xdb8] sm:$0xff]
    %v2289 = vld [vmem:[%s3 + $0xdc0] sm:$0xff]
    %v2290 = vld [vmem:[%s3 + $0xdc8] sm:$0xff]
    %v2291 = vld [vmem:[%s3 + $0xdd0] sm:$0xff]
    %v2292 = vld [vmem:[%s3 + $0xdd8] sm:$0xff]
    %v2293 = vld [vmem:[%s3 + $0xde0] sm:$0xff]
    %v2294 = vld [vmem:[%s3 + $0xde8] sm:$0xff]
    %v2295 = vld [vmem:[%s3 + $0xdf0] sm:$0xff]
    %v2296 = vld [vmem:[%s3 + $0xdf8] sm:$0xff]
    %v2297 = vld [vmem:[%s3 + $0xe00] sm:$0xff]
    %v2298 = vld [vmem:[%s3 + $0xe08] sm:$0xff]
    %v2299 = vld [vmem:[%s3 + $0xe10] sm:$0xff]
    %v2300 = vld [vmem:[%s3 + $0xe18] sm:$0xff]
    %v2301 = vld [vmem:[%s3 + $0xe20] sm:$0xff]
    %v2302 = vld [vmem:[%s3 + $0xe28] sm:$0xff]
    %v2303 = vld [vmem:[%s3 + $0xe30] sm:$0xff]
    %v2304 = vld [vmem:[%s3 + $0xe38] sm:$0xff]
    %v2305 = vld [vmem:[%s3 + $0xe40] sm:$0xff]
    %v2306 = vld [vmem:[%s3 + $0xe48] sm:$0xff]
    %v2307 = vld [vmem:[%s3 + $0xe50] sm:$0xff]
    %v2308 = vld [vmem:[%s3 + $0xe58] sm:$0xff]
    %v2309 = vld [vmem:[%s3 + $0xe60] sm:$0xff]
    %v2310 = vld [vmem:[%s3 + $0xe68] sm:$0xff]
    %v2311 = vld [vmem:[%s3 + $0xe70] sm:$0xff]
    %v2312 = vld [vmem:[%s3 + $0xe78] sm:$0xff]
    %v2313 = vld [vmem:[%s3 + $0xe80] sm:$0xff]
    %v2314 = vld [vmem:[%s3 + $0xe88] sm:$0xff]
    %v2315 = vld [vmem:[%s3 + $0xe90] sm:$0xff]
    %v2316 = vld [vmem:[%s3 + $0xe98] sm:$0xff]
    %v2317 = vld [vmem:[%s3 + $0xea0] sm:$0xff]
    %v2318 = vld [vmem:[%s3 + $0xea8] sm:$0xff]
    %v2319 = vld [vmem:[%s3 + $0xeb0] sm:$0xff]
    %v2320 = vld [vmem:[%s3 + $0xeb8] sm:$0xff]
    %v2321 = vld [vmem:[%s3 + $0xec0] sm:$0xff]
    %v2322 = vld [vmem:[%s3 + $0xec8] sm:$0xff]
    %v2323 = vld [vmem:[%s3 + $0xed0] sm:$0xff]
    %v2324 = vld [vmem:[%s3 + $0xed8] sm:$0xff]
    %v2325 = vld [vmem:[%s3 + $0xee0] sm:$0xff]
    %v2326 = vld [vmem:[%s3 + $0xee8] sm:$0xff]
    %v2327 = vld [vmem:[%s3 + $0xef0] sm:$0xff]
    %v2328 = vld [vmem:[%s3 + $0xef8] sm:$0xff]
    %v2329 = vld [vmem:[%s3 + $0xf00] sm:$0xff]
    %v2330 = vld [vmem:[%s3 + $0xf08] sm:$0xff]
    %v2331 = vld [vmem:[%s3 + $0xf10] sm:$0xff]
    %v2332 = vld [vmem:[%s3 + $0xf18] sm:$0xff]
    %v2333 = vld [vmem:[%s3 + $0xf20] sm:$0xff]
    %v2334 = vld [vmem:[%s3 + $0xf28] sm:$0xff]
    %v2335 = vld [vmem:[%s3 + $0xf30] sm:$0xff]
    %v2336 = vld [vmem:[%s3 + $0xf38] sm:$0xff]
    %v2337 = vld [vmem:[%s3 + $0xf40] sm:$0xff]
    %v2338 = vld [vmem:[%s3 + $0xf48] sm:$0xff]
    %v2339 = vld [vmem:[%s3 + $0xf50] sm:$0xff]
    %v2340 = vld [vmem:[%s3 + $0xf58] sm:$0xff]
    %v2341 = vld [vmem:[%s3 + $0xf60] sm:$0xff]
    %v2342 = vld [vmem:[%s3 + $0xf68] sm:$0xff]
    %v2343 = vld [vmem:[%s3 + $0xf70] sm:$0xff]
    %v2344 = vld [vmem:[%s3 + $0xf78] sm:$0xff]
    %v2345 = vld [vmem:[%s3 + $0xf80] sm:$0xff]
    %v2346 = vld [vmem:[%s3 + $0xf88] sm:$0xff]
    %v2347 = vld [vmem:[%s3 + $0xf90] sm:$0xff]
    %v2348 = vld [vmem:[%s3 + $0xf98] sm:$0xff]
    %v2349 = vld [vmem:[%s3 + $0xfa0] sm:$0xff]
    %v2350 = vld [vmem:[%s3 + $0xfa8] sm:$0xff]
    %v2351 = vld [vmem:[%s3 + $0xfb0] sm:$0xff]
    %v2352 = vld [vmem:[%s3 + $0xfb8] sm:$0xff]
    %v2353 = vld [vmem:[%s3 + $0xfc0] sm:$0xff]
    %v2354 = vld [vmem:[%s3 + $0xfc8] sm:$0xff]
    %v2355 = vld [vmem:[%s3 + $0xfd0] sm:$0xff]
    %v2356 = vld [vmem:[%s3 + $0xfd8] sm:$0xff]
    %v2357 = vld [vmem:[%s3 + $0xfe0] sm:$0xff]
    %v2358 = vld [vmem:[%s3 + $0xfe8] sm:$0xff]
    %v2359 = vld [vmem:[%s3 + $0xff0] sm:$0xff]
    %v2360 = vld [vmem:[%s3 + $0xff8] sm:$0xff]
    %v2361 = vld [vmem:[%s4] sm:$0xff]
    %v2362 = vld [vmem:[%s4 + $0x8] sm:$0xff]
    %v2363 = vld [vmem:[%s4 + $0x10] sm:$0xff]
    %v2364 = vld [vmem:[%s4 + $0x18] sm:$0xff]
    %v2365 = vld [vmem:[%s4 + $0x20] sm:$0xff]
    %v2366 = vld [vmem:[%s4 + $0x28] sm:$0xff]
    %v2367 = vld [vmem:[%s4 + $0x30] sm:$0xff]
    %v2368 = vld [vmem:[%s4 + $0x38] sm:$0xff]
    %v2369 = vld [vmem:[%s4 + $0x40] sm:$0xff]
    %v2370 = vld [vmem:[%s4 + $0x48] sm:$0xff]
    %v2371 = vld [vmem:[%s4 + $0x50] sm:$0xff]
    %v2372 = vld [vmem:[%s4 + $0x58] sm:$0xff]
    %v2373 = vld [vmem:[%s4 + $0x60] sm:$0xff]
    %v2374 = vld [vmem:[%s4 + $0x68] sm:$0xff]
    %v2375 = vld [vmem:[%s4 + $0x70] sm:$0xff]
    %v2376 = vld [vmem:[%s4 + $0x78] sm:$0xff]
    %v2377 = vld [vmem:[%s4 + $0x80] sm:$0xff]
    %v2378 = vld [vmem:[%s4 + $0x88] sm:$0xff]
    %v2379 = vld [vmem:[%s4 + $0x90] sm:$0xff]
    %v2380 = vld [vmem:[%s4 + $0x98] sm:$0xff]
    %v2381 = vld [vmem:[%s4 + $0xa0] sm:$0xff]
    %v2382 = vld [vmem:[%s4 + $0xa8] sm:$0xff]
    %v2383 = vld [vmem:[%s4 + $0xb0] sm:$0xff]
    %v2384 = vld [vmem:[%s4 + $0xb8] sm:$0xff]
    %v2385 = vld [vmem:[%s4 + $0xc0] sm:$0xff]
    %v2386 = vld [vmem:[%s4 + $0xc8] sm:$0xff]
    %v2387 = vld [vmem:[%s4 + $0xd0] sm:$0xff]
    %v2388 = vld [vmem:[%s4 + $0xd8] sm:$0xff]
    %v2389 = vld [vmem:[%s4 + $0xe0] sm:$0xff]
    %v2390 = vld [vmem:[%s4 + $0xe8] sm:$0xff]
    %v2391 = vld [vmem:[%s4 + $0xf0] sm:$0xff]
    %v2392 = vld [vmem:[%s4 + $0xf8] sm:$0xff]
    %v2393 = vld [vmem:[%s4 + $0x100] sm:$0xff]
    %v2394 = vld [vmem:[%s4 + $0x108] sm:$0xff]
    %v2395 = vld [vmem:[%s4 + $0x110] sm:$0xff]
    %v2396 = vld [vmem:[%s4 + $0x118] sm:$0xff]
    %v2397 = vld [vmem:[%s4 + $0x120] sm:$0xff]
    %v2398 = vld [vmem:[%s4 + $0x128] sm:$0xff]
    %v2399 = vld [vmem:[%s4 + $0x130] sm:$0xff]
    %v2400 = vld [vmem:[%s4 + $0x138] sm:$0xff]
    %v2401 = vld [vmem:[%s4 + $0x140] sm:$0xff]
    %v2402 = vld [vmem:[%s4 + $0x148] sm:$0xff]
    %v2403 = vld [vmem:[%s4 + $0x150] sm:$0xff]
    %v2404 = vld [vmem:[%s4 + $0x158] sm:$0xff]
    %v2405 = vld [vmem:[%s4 + $0x160] sm:$0xff]
    %v2406 = vld [vmem:[%s4 + $0x168] sm:$0xff]
    %v2407 = vld [vmem:[%s4 + $0x170] sm:$0xff]
    %v2408 = vld [vmem:[%s4 + $0x178] sm:$0xff]
    %v2409 = vld [vmem:[%s4 + $0x180] sm:$0xff]
    %v2410 = vld [vmem:[%s4 + $0x188] sm:$0xff]
    %v2411 = vld [vmem:[%s4 + $0x190] sm:$0xff]
    %v2412 = vld [vmem:[%s4 + $0x198] sm:$0xff]
    %v2413 = vld [vmem:[%s4 + $0x1a0] sm:$0xff]
    %v2414 = vld [vmem:[%s4 + $0x1a8] sm:$0xff]
    %v2415 = vld [vmem:[%s4 + $0x1b0] sm:$0xff]
    %v2416 = vld [vmem:[%s4 + $0x1b8] sm:$0xff]
    %v2417 = vld [vmem:[%s4 + $0x1c0] sm:$0xff]
    %v2418 = vld [vmem:[%s4 + $0x1c8] sm:$0xff]
    %v2419 = vld [vmem:[%s4 + $0x1d0] sm:$0xff]
    %v2420 = vld [vmem:[%s4 + $0x1d8] sm:$0xff]
    %v2421 = vld [vmem:[%s4 + $0x1e0] sm:$0xff]
    %v2422 = vld [vmem:[%s4 + $0x1e8] sm:$0xff]
    %v2423 = vld [vmem:[%s4 + $0x1f0] sm:$0xff]
    %v2424 = vld [vmem:[%s4 + $0x1f8] sm:$0xff]
    %2426 = vset.pattern.permute.xlu0 0
    %2427 = vperm.xlu0 %2426, %v2361
    %v2428 = vpop.permute.xlu0 %2427
    %2431 = vset.pattern.permute.xlu0 0
    %2432 = vperm.xlu0 %2431, %v2362
    %v2433 = vpop.permute.xlu0 %2432
    %2436 = vset.pattern.permute.xlu0 0
    %2437 = vperm.xlu0 %2436, %v2363
    %v2438 = vpop.permute.xlu0 %2437
    %2441 = vset.pattern.permute.xlu0 0
    %2442 = vperm.xlu0 %2441, %v2364
    %v2443 = vpop.permute.xlu0 %2442
    %2446 = vset.pattern.permute.xlu0 0
    %2447 = vperm.xlu0 %2446, %v2365
    %v2448 = vpop.permute.xlu0 %2447
    %2451 = vset.pattern.permute.xlu0 0
    %2452 = vperm.xlu0 %2451, %v2366
    %v2453 = vpop.permute.xlu0 %2452
    %2456 = vset.pattern.permute.xlu0 0
    %2457 = vperm.xlu0 %2456, %v2367
    %v2458 = vpop.permute.xlu0 %2457
    %2461 = vset.pattern.permute.xlu0 0
    %2462 = vperm.xlu0 %2461, %v2368
    %v2463 = vpop.permute.xlu0 %2462
    %2466 = vset.pattern.permute.xlu0 0
    %2467 = vperm.xlu0 %2466, %v2369
    %v2468 = vpop.permute.xlu0 %2467
    %2471 = vset.pattern.permute.xlu0 0
    %2472 = vperm.xlu0 %2471, %v2370
    %v2473 = vpop.permute.xlu0 %2472
    %2476 = vset.pattern.permute.xlu0 0
    %2477 = vperm.xlu0 %2476, %v2371
    %v2478 = vpop.permute.xlu0 %2477
    %2481 = vset.pattern.permute.xlu0 0
    %2482 = vperm.xlu0 %2481, %v2372
    %v2483 = vpop.permute.xlu0 %2482
    %2486 = vset.pattern.permute.xlu0 0
    %2487 = vperm.xlu0 %2486, %v2373
    %v2488 = vpop.permute.xlu0 %2487
    %2491 = vset.pattern.permute.xlu0 0
    %2492 = vperm.xlu0 %2491, %v2374
    %v2493 = vpop.permute.xlu0 %2492
    %2496 = vset.pattern.permute.xlu0 0
    %2497 = vperm.xlu0 %2496, %v2375
    %v2498 = vpop.permute.xlu0 %2497
    %2501 = vset.pattern.permute.xlu0 0
    %2502 = vperm.xlu0 %2501, %v2376
    %v2503 = vpop.permute.xlu0 %2502
    %2506 = vset.pattern.permute.xlu0 0
    %2507 = vperm.xlu0 %2506, %v2377
    %v2508 = vpop.permute.xlu0 %2507
    %2511 = vset.pattern.permute.xlu0 0
    %2512 = vperm.xlu0 %2511, %v2378
    %v2513 = vpop.permute.xlu0 %2512
    %2516 = vset.pattern.permute.xlu0 0
    %2517 = vperm.xlu0 %2516, %v2379
    %v2518 = vpop.permute.xlu0 %2517
    %2521 = vset.pattern.permute.xlu0 0
    %2522 = vperm.xlu0 %2521, %v2380
    %v2523 = vpop.permute.xlu0 %2522
    %2526 = vset.pattern.permute.xlu0 0
    %2527 = vperm.xlu0 %2526, %v2381
    %v2528 = vpop.permute.xlu0 %2527
    %2531 = vset.pattern.permute.xlu0 0
    %2532 = vperm.xlu0 %2531, %v2382
    %v2533 = vpop.permute.xlu0 %2532
    %2536 = vset.pattern.permute.xlu0 0
    %2537 = vperm.xlu0 %2536, %v2383
    %v2538 = vpop.permute.xlu0 %2537
    %2541 = vset.pattern.permute.xlu0 0
    %2542 = vperm.xlu0 %2541, %v2384
    %v2543 = vpop.permute.xlu0 %2542
    %2546 = vset.pattern.permute.xlu0 0
    %2547 = vperm.xlu0 %2546, %v2385
    %v2548 = vpop.permute.xlu0 %2547
    %2551 = vset.pattern.permute.xlu0 0
    %2552 = vperm.xlu0 %2551, %v2386
    %v2553 = vpop.permute.xlu0 %2552
    %2556 = vset.pattern.permute.xlu0 0
    %2557 = vperm.xlu0 %2556, %v2387
    %v2558 = vpop.permute.xlu0 %2557
    %2561 = vset.pattern.permute.xlu0 0
    %2562 = vperm.xlu0 %2561, %v2388
    %v2563 = vpop.permute.xlu0 %2562
    %2566 = vset.pattern.permute.xlu0 0
    %2567 = vperm.xlu0 %2566, %v2389
    %v2568 = vpop.permute.xlu0 %2567
    %2571 = vset.pattern.permute.xlu0 0
    %2572 = vperm.xlu0 %2571, %v2390
    %v2573 = vpop.permute.xlu0 %2572
    %2576 = vset.pattern.permute.xlu0 0
    %2577 = vperm.xlu0 %2576, %v2391
    %v2578 = vpop.permute.xlu0 %2577
    %2581 = vset.pattern.permute.xlu0 0
    %2582 = vperm.xlu0 %2581, %v2392
    %v2583 = vpop.permute.xlu0 %2582
    %2586 = vset.pattern.permute.xlu0 0
    %2587 = vperm.xlu0 %2586, %v2393
    %v2588 = vpop.permute.xlu0 %2587
    %2591 = vset.pattern.permute.xlu0 0
    %2592 = vperm.xlu0 %2591, %v2394
    %v2593 = vpop.permute.xlu0 %2592
    %2596 = vset.pattern.permute.xlu0 0
    %2597 = vperm.xlu0 %2596, %v2395
    %v2598 = vpop.permute.xlu0 %2597
    %2601 = vset.pattern.permute.xlu0 0
    %2602 = vperm.xlu0 %2601, %v2396
    %v2603 = vpop.permute.xlu0 %2602
    %2606 = vset.pattern.permute.xlu0 0
    %2607 = vperm.xlu0 %2606, %v2397
    %v2608 = vpop.permute.xlu0 %2607
    %2611 = vset.pattern.permute.xlu0 0
    %2612 = vperm.xlu0 %2611, %v2398
    %v2613 = vpop.permute.xlu0 %2612
    %2616 = vset.pattern.permute.xlu0 0
    %2617 = vperm.xlu0 %2616, %v2399
    %v2618 = vpop.permute.xlu0 %2617
    %2621 = vset.pattern.permute.xlu0 0
    %2622 = vperm.xlu0 %2621, %v2400
    %v2623 = vpop.permute.xlu0 %2622
    %2626 = vset.pattern.permute.xlu0 0
    %2627 = vperm.xlu0 %2626, %v2401
    %v2628 = vpop.permute.xlu0 %2627
    %2631 = vset.pattern.permute.xlu0 0
    %2632 = vperm.xlu0 %2631, %v2402
    %v2633 = vpop.permute.xlu0 %2632
    %2636 = vset.pattern.permute.xlu0 0
    %2637 = vperm.xlu0 %2636, %v2403
    %v2638 = vpop.permute.xlu0 %2637
    %2641 = vset.pattern.permute.xlu0 0
    %2642 = vperm.xlu0 %2641, %v2404
    %v2643 = vpop.permute.xlu0 %2642
    %2646 = vset.pattern.permute.xlu0 0
    %2647 = vperm.xlu0 %2646, %v2405
    %v2648 = vpop.permute.xlu0 %2647
    %2651 = vset.pattern.permute.xlu0 0
    %2652 = vperm.xlu0 %2651, %v2406
    %v2653 = vpop.permute.xlu0 %2652
    %2656 = vset.pattern.permute.xlu0 0
    %2657 = vperm.xlu0 %2656, %v2407
    %v2658 = vpop.permute.xlu0 %2657
    %2661 = vset.pattern.permute.xlu0 0
    %2662 = vperm.xlu0 %2661, %v2408
    %v2663 = vpop.permute.xlu0 %2662
    %2666 = vset.pattern.permute.xlu0 0
    %2667 = vperm.xlu0 %2666, %v2409
    %v2668 = vpop.permute.xlu0 %2667
    %2671 = vset.pattern.permute.xlu0 0
    %2672 = vperm.xlu0 %2671, %v2410
    %v2673 = vpop.permute.xlu0 %2672
    %2676 = vset.pattern.permute.xlu0 0
    %2677 = vperm.xlu0 %2676, %v2411
    %v2678 = vpop.permute.xlu0 %2677
    %2681 = vset.pattern.permute.xlu0 0
    %2682 = vperm.xlu0 %2681, %v2412
    %v2683 = vpop.permute.xlu0 %2682
    %2686 = vset.pattern.permute.xlu0 0
    %2687 = vperm.xlu0 %2686, %v2413
    %v2688 = vpop.permute.xlu0 %2687
    %2691 = vset.pattern.permute.xlu0 0
    %2692 = vperm.xlu0 %2691, %v2414
    %v2693 = vpop.permute.xlu0 %2692
    %2696 = vset.pattern.permute.xlu0 0
    %2697 = vperm.xlu0 %2696, %v2415
    %v2698 = vpop.permute.xlu0 %2697
    %2701 = vset.pattern.permute.xlu0 0
    %2702 = vperm.xlu0 %2701, %v2416
    %v2703 = vpop.permute.xlu0 %2702
    %2706 = vset.pattern.permute.xlu0 0
    %2707 = vperm.xlu0 %2706, %v2417
    %v2708 = vpop.permute.xlu0 %2707
    %2711 = vset.pattern.permute.xlu0 0
    %2712 = vperm.xlu0 %2711, %v2418
    %v2713 = vpop.permute.xlu0 %2712
    %2716 = vset.pattern.permute.xlu0 0
    %2717 = vperm.xlu0 %2716, %v2419
    %v2718 = vpop.permute.xlu0 %2717
    %2721 = vset.pattern.permute.xlu0 0
    %2722 = vperm.xlu0 %2721, %v2420
    %v2723 = vpop.permute.xlu0 %2722
    %2726 = vset.pattern.permute.xlu0 0
    %2727 = vperm.xlu0 %2726, %v2421
    %v2728 = vpop.permute.xlu0 %2727
    %2731 = vset.pattern.permute.xlu0 0
    %2732 = vperm.xlu0 %2731, %v2422
    %v2733 = vpop.permute.xlu0 %2732
    %2736 = vset.pattern.permute.xlu0 0
    %2737 = vperm.xlu0 %2736, %v2423
    %v2738 = vpop.permute.xlu0 %2737
    %2741 = vset.pattern.permute.xlu0 0
    %2742 = vperm.xlu0 %2741, %v2424
    %v2743 = vpop.permute.xlu0 %2742
    %2745 = vmatpush.msra.mxu0 %v1736
    %2746 = vmatpush.msra.mxu0 %v1735
    %2747 = vmatpush.msra.mxu0 %v1734
    %2748 = vmatpush.msra.mxu0 %v1733
    %2749 = vmatpush.msra.mxu0 %v1732
    %2750 = vmatpush.msra.mxu0 %v1731
    %2751 = vmatpush.msra.mxu0 %v1730
    %2752 = vmatpush.msra.mxu0 %v1729
    %2753 = vmatpush.msra.mxu0 %v1728
    %2754 = vmatpush.msra.mxu0 %v1727
    %2755 = vmatpush.msra.mxu0 %v1726
    %2756 = vmatpush.msra.mxu0 %v1725
    %2757 = vmatpush.msra.mxu0 %v1724
    %2758 = vmatpush.msra.mxu0 %v1723
    %2759 = vmatpush.msra.mxu0 %v1722
    %2760 = vmatpush.msra.mxu0 %v1721
    %2761 = vmatmul.f32.gmra.mxu0 %v1849
    %v2762 = vpop.f32.mrf.mxu0
    %v2763 = vadd.f32 %v2428, %v2762
    %2764 = vmatmul.f32.gmra.mxu0 %v1857
    %v2765 = vpop.f32.mrf.mxu0
    %v2766 = vadd.f32 %v2433, %v2765
    %2767 = vmatmul.f32.gmra.mxu0 %v1865
    %v2768 = vpop.f32.mrf.mxu0
    %v2769 = vadd.f32 %v2438, %v2768
    %2770 = vmatmul.f32.gmra.mxu0 %v1873
    %v2771 = vpop.f32.mrf.mxu0
    %v2772 = vadd.f32 %v2443, %v2771
    %2773 = vmatmul.f32.gmra.mxu0 %v1881
    %v2774 = vpop.f32.mrf.mxu0
    %v2775 = vadd.f32 %v2448, %v2774
    %2776 = vmatmul.f32.gmra.mxu0 %v1889
    %v2777 = vpop.f32.mrf.mxu0
    %v2778 = vadd.f32 %v2453, %v2777
    %2779 = vmatmul.f32.gmra.mxu0 %v1897
    %v2780 = vpop.f32.mrf.mxu0
    %v2781 = vadd.f32 %v2458, %v2780
    %2782 = vmatmul.f32.gmra.mxu0 %v1905
    %v2783 = vpop.f32.mrf.mxu0
    %v2784 = vadd.f32 %v2463, %v2783
    %2785 = vmatmul.f32.gmra.mxu0 %v1913
    %v2786 = vpop.f32.mrf.mxu0
    %v2787 = vadd.f32 %v2468, %v2786
    %2788 = vmatmul.f32.gmra.mxu0 %v1921
    %v2789 = vpop.f32.mrf.mxu0
    %v2790 = vadd.f32 %v2473, %v2789
    %2791 = vmatmul.f32.gmra.mxu0 %v1929
    %v2792 = vpop.f32.mrf.mxu0
    %v2793 = vadd.f32 %v2478, %v2792
    %2794 = vmatmul.f32.gmra.mxu0 %v1937
    %v2795 = vpop.f32.mrf.mxu0
    %v2796 = vadd.f32 %v2483, %v2795
    %2797 = vmatmul.f32.gmra.mxu0 %v1945
    %v2798 = vpop.f32.mrf.mxu0
    %v2799 = vadd.f32 %v2488, %v2798
    %2800 = vmatmul.f32.gmra.mxu0 %v1953
    %v2801 = vpop.f32.mrf.mxu0
    %v2802 = vadd.f32 %v2493, %v2801
    %2803 = vmatmul.f32.gmra.mxu0 %v1961
    %v2804 = vpop.f32.mrf.mxu0
    %v2805 = vadd.f32 %v2498, %v2804
    %2806 = vmatmul.f32.gmra.mxu0 %v1969
    %v2807 = vpop.f32.mrf.mxu0
    %v2808 = vadd.f32 %v2503, %v2807
    %2809 = vmatmul.f32.gmra.mxu0 %v1977
    %v2810 = vpop.f32.mrf.mxu0
    %v2811 = vadd.f32 %v2508, %v2810
    %2812 = vmatmul.f32.gmra.mxu0 %v1985
    %v2813 = vpop.f32.mrf.mxu0
    %v2814 = vadd.f32 %v2513, %v2813
    %2815 = vmatmul.f32.gmra.mxu0 %v1993
    %v2816 = vpop.f32.mrf.mxu0
    %v2817 = vadd.f32 %v2518, %v2816
    %2818 = vmatmul.f32.gmra.mxu0 %v2001
    %v2819 = vpop.f32.mrf.mxu0
    %v2820 = vadd.f32 %v2523, %v2819
    %2821 = vmatmul.f32.gmra.mxu0 %v2009
    %v2822 = vpop.f32.mrf.mxu0
    %v2823 = vadd.f32 %v2528, %v2822
    %2824 = vmatmul.f32.gmra.mxu0 %v2017
    %v2825 = vpop.f32.mrf.mxu0
    %v2826 = vadd.f32 %v2533, %v2825
    %2827 = vmatmul.f32.gmra.mxu0 %v2025
    %v2828 = vpop.f32.mrf.mxu0
    %v2829 = vadd.f32 %v2538, %v2828
    %2830 = vmatmul.f32.gmra.mxu0 %v2033
    %v2831 = vpop.f32.mrf.mxu0
    %v2832 = vadd.f32 %v2543, %v2831
    %2833 = vmatmul.f32.gmra.mxu0 %v2041
    %v2834 = vpop.f32.mrf.mxu0
    %v2835 = vadd.f32 %v2548, %v2834
    %2836 = vmatmul.f32.gmra.mxu0 %v2049
    %v2837 = vpop.f32.mrf.mxu0
    %v2838 = vadd.f32 %v2553, %v2837
    %2839 = vmatmul.f32.gmra.mxu0 %v2057
    %v2840 = vpop.f32.mrf.mxu0
    %v2841 = vadd.f32 %v2558, %v2840
    %2842 = vmatmul.f32.gmra.mxu0 %v2065
    %v2843 = vpop.f32.mrf.mxu0
    %v2844 = vadd.f32 %v2563, %v2843
    %2845 = vmatmul.f32.gmra.mxu0 %v2073
    %v2846 = vpop.f32.mrf.mxu0
    %v2847 = vadd.f32 %v2568, %v2846
    %2848 = vmatmul.f32.gmra.mxu0 %v2081
    %v2849 = vpop.f32.mrf.mxu0
    %v2850 = vadd.f32 %v2573, %v2849
    %2851 = vmatmul.f32.gmra.mxu0 %v2089
    %v2852 = vpop.f32.mrf.mxu0
    %v2853 = vadd.f32 %v2578, %v2852
    %2854 = vmatmul.f32.gmra.mxu0 %v2097
    %v2855 = vpop.f32.mrf.mxu0
    %v2856 = vadd.f32 %v2583, %v2855
    %2857 = vmatmul.f32.gmra.mxu0 %v2105
    %v2858 = vpop.f32.mrf.mxu0
    %v2859 = vadd.f32 %v2588, %v2858
    %2860 = vmatmul.f32.gmra.mxu0 %v2113
    %v2861 = vpop.f32.mrf.mxu0
    %v2862 = vadd.f32 %v2593, %v2861
    %2863 = vmatmul.f32.gmra.mxu0 %v2121
    %v2864 = vpop.f32.mrf.mxu0
    %v2865 = vadd.f32 %v2598, %v2864
    %2866 = vmatmul.f32.gmra.mxu0 %v2129
    %v2867 = vpop.f32.mrf.mxu0
    %v2868 = vadd.f32 %v2603, %v2867
    %2869 = vmatmul.f32.gmra.mxu0 %v2137
    %v2870 = vpop.f32.mrf.mxu0
    %v2871 = vadd.f32 %v2608, %v2870
    %2872 = vmatmul.f32.gmra.mxu0 %v2145
    %v2873 = vpop.f32.mrf.mxu0
    %v2874 = vadd.f32 %v2613, %v2873
    %2875 = vmatmul.f32.gmra.mxu0 %v2153
    %v2876 = vpop.f32.mrf.mxu0
    %v2877 = vadd.f32 %v2618, %v2876
    %2878 = vmatmul.f32.gmra.mxu0 %v2161
    %v2879 = vpop.f32.mrf.mxu0
    %v2880 = vadd.f32 %v2623, %v2879
    %2881 = vmatmul.f32.gmra.mxu0 %v2169
    %v2882 = vpop.f32.mrf.mxu0
    %v2883 = vadd.f32 %v2628, %v2882
    %2884 = vmatmul.f32.gmra.mxu0 %v2177
    %v2885 = vpop.f32.mrf.mxu0
    %v2886 = vadd.f32 %v2633, %v2885
    %2887 = vmatmul.f32.gmra.mxu0 %v2185
    %v2888 = vpop.f32.mrf.mxu0
    %v2889 = vadd.f32 %v2638, %v2888
    %2890 = vmatmul.f32.gmra.mxu0 %v2193
    %v2891 = vpop.f32.mrf.mxu0
    %v2892 = vadd.f32 %v2643, %v2891
    %2893 = vmatmul.f32.gmra.mxu0 %v2201
    %v2894 = vpop.f32.mrf.mxu0
    %v2895 = vadd.f32 %v2648, %v2894
    %2896 = vmatmul.f32.gmra.mxu0 %v2209
    %v2897 = vpop.f32.mrf.mxu0
    %v2898 = vadd.f32 %v2653, %v2897
    %2899 = vmatmul.f32.gmra.mxu0 %v2217
    %v2900 = vpop.f32.mrf.mxu0
    %v2901 = vadd.f32 %v2658, %v2900
    %2902 = vmatmul.f32.gmra.mxu0 %v2225
    %v2903 = vpop.f32.mrf.mxu0
    %v2904 = vadd.f32 %v2663, %v2903
    %2905 = vmatmul.f32.gmra.mxu0 %v2233
    %v2906 = vpop.f32.mrf.mxu0
    %v2907 = vadd.f32 %v2668, %v2906
    %2908 = vmatmul.f32.gmra.mxu0 %v2241
    %v2909 = vpop.f32.mrf.mxu0
    %v2910 = vadd.f32 %v2673, %v2909
    %2911 = vmatmul.f32.gmra.mxu0 %v2249
    %v2912 = vpop.f32.mrf.mxu0
    %v2913 = vadd.f32 %v2678, %v2912
    %2914 = vmatmul.f32.gmra.mxu0 %v2257
    %v2915 = vpop.f32.mrf.mxu0
    %v2916 = vadd.f32 %v2683, %v2915
    %2917 = vmatmul.f32.gmra.mxu0 %v2265
    %v2918 = vpop.f32.mrf.mxu0
    %v2919 = vadd.f32 %v2688, %v2918
    %2920 = vmatmul.f32.gmra.mxu0 %v2273
    %v2921 = vpop.f32.mrf.mxu0
    %v2922 = vadd.f32 %v2693, %v2921
    %2923 = vmatmul.f32.gmra.mxu0 %v2281
    %v2924 = vpop.f32.mrf.mxu0
    %v2925 = vadd.f32 %v2698, %v2924
    %2926 = vmatmul.f32.gmra.mxu0 %v2289
    %v2927 = vpop.f32.mrf.mxu0
    %v2928 = vadd.f32 %v2703, %v2927
    %2929 = vmatmul.f32.gmra.mxu0 %v2297
    %v2930 = vpop.f32.mrf.mxu0
    %v2931 = vadd.f32 %v2708, %v2930
    %2932 = vmatmul.f32.gmra.mxu0 %v2305
    %v2933 = vpop.f32.mrf.mxu0
    %v2934 = vadd.f32 %v2713, %v2933
    %2935 = vmatmul.f32.gmra.mxu0 %v2313
    %v2936 = vpop.f32.mrf.mxu0
    %v2937 = vadd.f32 %v2718, %v2936
    %2938 = vmatmul.f32.gmra.mxu0 %v2321
    %v2939 = vpop.f32.mrf.mxu0
    %v2940 = vadd.f32 %v2723, %v2939
    %2941 = vmatmul.f32.gmra.mxu0 %v2329
    %v2942 = vpop.f32.mrf.mxu0
    %v2943 = vadd.f32 %v2728, %v2942
    %2944 = vmatmul.f32.gmra.mxu0 %v2337
    %v2945 = vpop.f32.mrf.mxu0
    %v2946 = vadd.f32 %v2733, %v2945
    %2947 = vmatmul.f32.gmra.mxu0 %v2345
    %v2948 = vpop.f32.mrf.mxu0
    %v2949 = vadd.f32 %v2738, %v2948
    %2950 = vmatmul.f32.gmra.mxu0 %v2353
    %v2951 = vpop.f32.mrf.mxu0
    %v2952 = vadd.f32 %v2743, %v2951
    %2953 = vdwg.mxu0
    %2954 = vmatpush.msra.mxu0 %v1752
    %2955 = vmatpush.msra.mxu0 %v1751
    %2956 = vmatpush.msra.mxu0 %v1750
    %2957 = vmatpush.msra.mxu0 %v1749
    %2958 = vmatpush.msra.mxu0 %v1748
    %2959 = vmatpush.msra.mxu0 %v1747
    %2960 = vmatpush.msra.mxu0 %v1746
    %2961 = vmatpush.msra.mxu0 %v1745
    %2962 = vmatpush.msra.mxu0 %v1744
    %2963 = vmatpush.msra.mxu0 %v1743
    %2964 = vmatpush.msra.mxu0 %v1742
    %2965 = vmatpush.msra.mxu0 %v1741
    %2966 = vmatpush.msra.mxu0 %v1740
    %2967 = vmatpush.msra.mxu0 %v1739
    %2968 = vmatpush.msra.mxu0 %v1738
    %2969 = vmatpush.msra.mxu0 %v1737
    %2970 = vmatmul.f32.gmra.mxu0 %v1850
    %v2971 = vpop.f32.mrf.mxu0
    %v2972 = vadd.f32 %v2763, %v2971
    %2973 = vmatmul.f32.gmra.mxu0 %v1858
    %v2974 = vpop.f32.mrf.mxu0
    %v2975 = vadd.f32 %v2766, %v2974
    %2976 = vmatmul.f32.gmra.mxu0 %v1866
    %v2977 = vpop.f32.mrf.mxu0
    %v2978 = vadd.f32 %v2769, %v2977
    %2979 = vmatmul.f32.gmra.mxu0 %v1874
    %v2980 = vpop.f32.mrf.mxu0
    %v2981 = vadd.f32 %v2772, %v2980
    %2982 = vmatmul.f32.gmra.mxu0 %v1882
    %v2983 = vpop.f32.mrf.mxu0
    %v2984 = vadd.f32 %v2775, %v2983
    %2985 = vmatmul.f32.gmra.mxu0 %v1890
    %v2986 = vpop.f32.mrf.mxu0
    %v2987 = vadd.f32 %v2778, %v2986
    %2988 = vmatmul.f32.gmra.mxu0 %v1898
    %v2989 = vpop.f32.mrf.mxu0
    %v2990 = vadd.f32 %v2781, %v2989
    %2991 = vmatmul.f32.gmra.mxu0 %v1906
    %v2992 = vpop.f32.mrf.mxu0
    %v2993 = vadd.f32 %v2784, %v2992
    %2994 = vmatmul.f32.gmra.mxu0 %v1914
    %v2995 = vpop.f32.mrf.mxu0
    %v2996 = vadd.f32 %v2787, %v2995
    %2997 = vmatmul.f32.gmra.mxu0 %v1922
    %v2998 = vpop.f32.mrf.mxu0
    %v2999 = vadd.f32 %v2790, %v2998
    %3000 = vmatmul.f32.gmra.mxu0 %v1930
    %v3001 = vpop.f32.mrf.mxu0
    %v3002 = vadd.f32 %v2793, %v3001
    %3003 = vmatmul.f32.gmra.mxu0 %v1938
    %v3004 = vpop.f32.mrf.mxu0
    %v3005 = vadd.f32 %v2796, %v3004
    %3006 = vmatmul.f32.gmra.mxu0 %v1946
    %v3007 = vpop.f32.mrf.mxu0
    %v3008 = vadd.f32 %v2799, %v3007
    %3009 = vmatmul.f32.gmra.mxu0 %v1954
    %v3010 = vpop.f32.mrf.mxu0
    %v3011 = vadd.f32 %v2802, %v3010
    %3012 = vmatmul.f32.gmra.mxu0 %v1962
    %v3013 = vpop.f32.mrf.mxu0
    %v3014 = vadd.f32 %v2805, %v3013
    %3015 = vmatmul.f32.gmra.mxu0 %v1970
    %v3016 = vpop.f32.mrf.mxu0
    %v3017 = vadd.f32 %v2808, %v3016
    %3018 = vmatmul.f32.gmra.mxu0 %v1978
    %v3019 = vpop.f32.mrf.mxu0
    %v3020 = vadd.f32 %v2811, %v3019
    %3021 = vmatmul.f32.gmra.mxu0 %v1986
    %v3022 = vpop.f32.mrf.mxu0
    %v3023 = vadd.f32 %v2814, %v3022
    %3024 = vmatmul.f32.gmra.mxu0 %v1994
    %v3025 = vpop.f32.mrf.mxu0
    %v3026 = vadd.f32 %v2817, %v3025
    %3027 = vmatmul.f32.gmra.mxu0 %v2002
    %v3028 = vpop.f32.mrf.mxu0
    %v3029 = vadd.f32 %v2820, %v3028
    %3030 = vmatmul.f32.gmra.mxu0 %v2010
    %v3031 = vpop.f32.mrf.mxu0
    %v3032 = vadd.f32 %v2823, %v3031
    %3033 = vmatmul.f32.gmra.mxu0 %v2018
    %v3034 = vpop.f32.mrf.mxu0
    %v3035 = vadd.f32 %v2826, %v3034
    %3036 = vmatmul.f32.gmra.mxu0 %v2026
    %v3037 = vpop.f32.mrf.mxu0
    %v3038 = vadd.f32 %v2829, %v3037
    %3039 = vmatmul.f32.gmra.mxu0 %v2034
    %v3040 = vpop.f32.mrf.mxu0
    %v3041 = vadd.f32 %v2832, %v3040
    %3042 = vmatmul.f32.gmra.mxu0 %v2042
    %v3043 = vpop.f32.mrf.mxu0
    %v3044 = vadd.f32 %v2835, %v3043
    %3045 = vmatmul.f32.gmra.mxu0 %v2050
    %v3046 = vpop.f32.mrf.mxu0
    %v3047 = vadd.f32 %v2838, %v3046
    %3048 = vmatmul.f32.gmra.mxu0 %v2058
    %v3049 = vpop.f32.mrf.mxu0
    %v3050 = vadd.f32 %v2841, %v3049
    %3051 = vmatmul.f32.gmra.mxu0 %v2066
    %v3052 = vpop.f32.mrf.mxu0
    %v3053 = vadd.f32 %v2844, %v3052
    %3054 = vmatmul.f32.gmra.mxu0 %v2074
    %v3055 = vpop.f32.mrf.mxu0
    %v3056 = vadd.f32 %v2847, %v3055
    %3057 = vmatmul.f32.gmra.mxu0 %v2082
    %v3058 = vpop.f32.mrf.mxu0
    %v3059 = vadd.f32 %v2850, %v3058
    %3060 = vmatmul.f32.gmra.mxu0 %v2090
    %v3061 = vpop.f32.mrf.mxu0
    %v3062 = vadd.f32 %v2853, %v3061
    %3063 = vmatmul.f32.gmra.mxu0 %v2098
    %v3064 = vpop.f32.mrf.mxu0
    %v3065 = vadd.f32 %v2856, %v3064
    %3066 = vmatmul.f32.gmra.mxu0 %v2106
    %v3067 = vpop.f32.mrf.mxu0
    %v3068 = vadd.f32 %v2859, %v3067
    %3069 = vmatmul.f32.gmra.mxu0 %v2114
    %v3070 = vpop.f32.mrf.mxu0
    %v3071 = vadd.f32 %v2862, %v3070
    %3072 = vmatmul.f32.gmra.mxu0 %v2122
    %v3073 = vpop.f32.mrf.mxu0
    %v3074 = vadd.f32 %v2865, %v3073
    %3075 = vmatmul.f32.gmra.mxu0 %v2130
    %v3076 = vpop.f32.mrf.mxu0
    %v3077 = vadd.f32 %v2868, %v3076
    %3078 = vmatmul.f32.gmra.mxu0 %v2138
    %v3079 = vpop.f32.mrf.mxu0
    %v3080 = vadd.f32 %v2871, %v3079
    %3081 = vmatmul.f32.gmra.mxu0 %v2146
    %v3082 = vpop.f32.mrf.mxu0
    %v3083 = vadd.f32 %v2874, %v3082
    %3084 = vmatmul.f32.gmra.mxu0 %v2154
    %v3085 = vpop.f32.mrf.mxu0
    %v3086 = vadd.f32 %v2877, %v3085
    %3087 = vmatmul.f32.gmra.mxu0 %v2162
    %v3088 = vpop.f32.mrf.mxu0
    %v3089 = vadd.f32 %v2880, %v3088
    %3090 = vmatmul.f32.gmra.mxu0 %v2170
    %v3091 = vpop.f32.mrf.mxu0
    %v3092 = vadd.f32 %v2883, %v3091
    %3093 = vmatmul.f32.gmra.mxu0 %v2178
    %v3094 = vpop.f32.mrf.mxu0
    %v3095 = vadd.f32 %v2886, %v3094
    %3096 = vmatmul.f32.gmra.mxu0 %v2186
    %v3097 = vpop.f32.mrf.mxu0
    %v3098 = vadd.f32 %v2889, %v3097
    %3099 = vmatmul.f32.gmra.mxu0 %v2194
    %v3100 = vpop.f32.mrf.mxu0
    %v3101 = vadd.f32 %v2892, %v3100
    %3102 = vmatmul.f32.gmra.mxu0 %v2202
    %v3103 = vpop.f32.mrf.mxu0
    %v3104 = vadd.f32 %v2895, %v3103
    %3105 = vmatmul.f32.gmra.mxu0 %v2210
    %v3106 = vpop.f32.mrf.mxu0
    %v3107 = vadd.f32 %v2898, %v3106
    %3108 = vmatmul.f32.gmra.mxu0 %v2218
    %v3109 = vpop.f32.mrf.mxu0
    %v3110 = vadd.f32 %v2901, %v3109
    %3111 = vmatmul.f32.gmra.mxu0 %v2226
    %v3112 = vpop.f32.mrf.mxu0
    %v3113 = vadd.f32 %v2904, %v3112
    %3114 = vmatmul.f32.gmra.mxu0 %v2234
    %v3115 = vpop.f32.mrf.mxu0
    %v3116 = vadd.f32 %v2907, %v3115
    %3117 = vmatmul.f32.gmra.mxu0 %v2242
    %v3118 = vpop.f32.mrf.mxu0
    %v3119 = vadd.f32 %v2910, %v3118
    %3120 = vmatmul.f32.gmra.mxu0 %v2250
    %v3121 = vpop.f32.mrf.mxu0
    %v3122 = vadd.f32 %v2913, %v3121
    %3123 = vmatmul.f32.gmra.mxu0 %v2258
    %v3124 = vpop.f32.mrf.mxu0
    %v3125 = vadd.f32 %v2916, %v3124
    %3126 = vmatmul.f32.gmra.mxu0 %v2266
    %v3127 = vpop.f32.mrf.mxu0
    %v3128 = vadd.f32 %v2919, %v3127
    %3129 = vmatmul.f32.gmra.mxu0 %v2274
    %v3130 = vpop.f32.mrf.mxu0
    %v3131 = vadd.f32 %v2922, %v3130
    %3132 = vmatmul.f32.gmra.mxu0 %v2282
    %v3133 = vpop.f32.mrf.mxu0
    %v3134 = vadd.f32 %v2925, %v3133
    %3135 = vmatmul.f32.gmra.mxu0 %v2290
    %v3136 = vpop.f32.mrf.mxu0
    %v3137 = vadd.f32 %v2928, %v3136
    %3138 = vmatmul.f32.gmra.mxu0 %v2298
    %v3139 = vpop.f32.mrf.mxu0
    %v3140 = vadd.f32 %v2931, %v3139
    %3141 = vmatmul.f32.gmra.mxu0 %v2306
    %v3142 = vpop.f32.mrf.mxu0
    %v3143 = vadd.f32 %v2934, %v3142
    %3144 = vmatmul.f32.gmra.mxu0 %v2314
    %v3145 = vpop.f32.mrf.mxu0
    %v3146 = vadd.f32 %v2937, %v3145
    %3147 = vmatmul.f32.gmra.mxu0 %v2322
    %v3148 = vpop.f32.mrf.mxu0
    %v3149 = vadd.f32 %v2940, %v3148
    %3150 = vmatmul.f32.gmra.mxu0 %v2330
    %v3151 = vpop.f32.mrf.mxu0
    %v3152 = vadd.f32 %v2943, %v3151
    %3153 = vmatmul.f32.gmra.mxu0 %v2338
    %v3154 = vpop.f32.mrf.mxu0
    %v3155 = vadd.f32 %v2946, %v3154
    %3156 = vmatmul.f32.gmra.mxu0 %v2346
    %v3157 = vpop.f32.mrf.mxu0
    %v3158 = vadd.f32 %v2949, %v3157
    %3159 = vmatmul.f32.gmra.mxu0 %v2354
    %v3160 = vpop.f32.mrf.mxu0
    %v3161 = vadd.f32 %v2952, %v3160
    %3162 = vdwg.mxu0
    %3163 = vmatpush.msra.mxu0 %v1768
    %3164 = vmatpush.msra.mxu0 %v1767
    %3165 = vmatpush.msra.mxu0 %v1766
    %3166 = vmatpush.msra.mxu0 %v1765
    %3167 = vmatpush.msra.mxu0 %v1764
    %3168 = vmatpush.msra.mxu0 %v1763
    %3169 = vmatpush.msra.mxu0 %v1762
    %3170 = vmatpush.msra.mxu0 %v1761
    %3171 = vmatpush.msra.mxu0 %v1760
    %3172 = vmatpush.msra.mxu0 %v1759
    %3173 = vmatpush.msra.mxu0 %v1758
    %3174 = vmatpush.msra.mxu0 %v1757
    %3175 = vmatpush.msra.mxu0 %v1756
    %3176 = vmatpush.msra.mxu0 %v1755
    %3177 = vmatpush.msra.mxu0 %v1754
    %3178 = vmatpush.msra.mxu0 %v1753
    %3179 = vmatmul.f32.gmra.mxu0 %v1851
    %v3180 = vpop.f32.mrf.mxu0
    %v3181 = vadd.f32 %v2972, %v3180
    %3182 = vmatmul.f32.gmra.mxu0 %v1859
    %v3183 = vpop.f32.mrf.mxu0
    %v3184 = vadd.f32 %v2975, %v3183
    %3185 = vmatmul.f32.gmra.mxu0 %v1867
    %v3186 = vpop.f32.mrf.mxu0
    %v3187 = vadd.f32 %v2978, %v3186
    %3188 = vmatmul.f32.gmra.mxu0 %v1875
    %v3189 = vpop.f32.mrf.mxu0
    %v3190 = vadd.f32 %v2981, %v3189
    %3191 = vmatmul.f32.gmra.mxu0 %v1883
    %v3192 = vpop.f32.mrf.mxu0
    %v3193 = vadd.f32 %v2984, %v3192
    %3194 = vmatmul.f32.gmra.mxu0 %v1891
    %v3195 = vpop.f32.mrf.mxu0
    %v3196 = vadd.f32 %v2987, %v3195
    %3197 = vmatmul.f32.gmra.mxu0 %v1899
    %v3198 = vpop.f32.mrf.mxu0
    %v3199 = vadd.f32 %v2990, %v3198
    %3200 = vmatmul.f32.gmra.mxu0 %v1907
    %v3201 = vpop.f32.mrf.mxu0
    %v3202 = vadd.f32 %v2993, %v3201
    %3203 = vmatmul.f32.gmra.mxu0 %v1915
    %v3204 = vpop.f32.mrf.mxu0
    %v3205 = vadd.f32 %v2996, %v3204
    %3206 = vmatmul.f32.gmra.mxu0 %v1923
    %v3207 = vpop.f32.mrf.mxu0
    %v3208 = vadd.f32 %v2999, %v3207
    %3209 = vmatmul.f32.gmra.mxu0 %v1931
    %v3210 = vpop.f32.mrf.mxu0
    %v3211 = vadd.f32 %v3002, %v3210
    %3212 = vmatmul.f32.gmra.mxu0 %v1939
    %v3213 = vpop.f32.mrf.mxu0
    %v3214 = vadd.f32 %v3005, %v3213
    %3215 = vmatmul.f32.gmra.mxu0 %v1947
    %v3216 = vpop.f32.mrf.mxu0
    %v3217 = vadd.f32 %v3008, %v3216
    %3218 = vmatmul.f32.gmra.mxu0 %v1955
    %v3219 = vpop.f32.mrf.mxu0
    %v3220 = vadd.f32 %v3011, %v3219
    %3221 = vmatmul.f32.gmra.mxu0 %v1963
    %v3222 = vpop.f32.mrf.mxu0
    %v3223 = vadd.f32 %v3014, %v3222
    %3224 = vmatmul.f32.gmra.mxu0 %v1971
    %v3225 = vpop.f32.mrf.mxu0
    %v3226 = vadd.f32 %v3017, %v3225
    %3227 = vmatmul.f32.gmra.mxu0 %v1979
    %v3228 = vpop.f32.mrf.mxu0
    %v3229 = vadd.f32 %v3020, %v3228
    %3230 = vmatmul.f32.gmra.mxu0 %v1987
    %v3231 = vpop.f32.mrf.mxu0
    %v3232 = vadd.f32 %v3023, %v3231
    %3233 = vmatmul.f32.gmra.mxu0 %v1995
    %v3234 = vpop.f32.mrf.mxu0
    %v3235 = vadd.f32 %v3026, %v3234
    %3236 = vmatmul.f32.gmra.mxu0 %v2003
    %v3237 = vpop.f32.mrf.mxu0
    %v3238 = vadd.f32 %v3029, %v3237
    %3239 = vmatmul.f32.gmra.mxu0 %v2011
    %v3240 = vpop.f32.mrf.mxu0
    %v3241 = vadd.f32 %v3032, %v3240
    %3242 = vmatmul.f32.gmra.mxu0 %v2019
    %v3243 = vpop.f32.mrf.mxu0
    %v3244 = vadd.f32 %v3035, %v3243
    %3245 = vmatmul.f32.gmra.mxu0 %v2027
    %v3246 = vpop.f32.mrf.mxu0
    %v3247 = vadd.f32 %v3038, %v3246
    %3248 = vmatmul.f32.gmra.mxu0 %v2035
    %v3249 = vpop.f32.mrf.mxu0
    %v3250 = vadd.f32 %v3041, %v3249
    %3251 = vmatmul.f32.gmra.mxu0 %v2043
    %v3252 = vpop.f32.mrf.mxu0
    %v3253 = vadd.f32 %v3044, %v3252
    %3254 = vmatmul.f32.gmra.mxu0 %v2051
    %v3255 = vpop.f32.mrf.mxu0
    %v3256 = vadd.f32 %v3047, %v3255
    %3257 = vmatmul.f32.gmra.mxu0 %v2059
    %v3258 = vpop.f32.mrf.mxu0
    %v3259 = vadd.f32 %v3050, %v3258
    %3260 = vmatmul.f32.gmra.mxu0 %v2067
    %v3261 = vpop.f32.mrf.mxu0
    %v3262 = vadd.f32 %v3053, %v3261
    %3263 = vmatmul.f32.gmra.mxu0 %v2075
    %v3264 = vpop.f32.mrf.mxu0
    %v3265 = vadd.f32 %v3056, %v3264
    %3266 = vmatmul.f32.gmra.mxu0 %v2083
    %v3267 = vpop.f32.mrf.mxu0
    %v3268 = vadd.f32 %v3059, %v3267
    %3269 = vmatmul.f32.gmra.mxu0 %v2091
    %v3270 = vpop.f32.mrf.mxu0
    %v3271 = vadd.f32 %v3062, %v3270
    %3272 = vmatmul.f32.gmra.mxu0 %v2099
    %v3273 = vpop.f32.mrf.mxu0
    %v3274 = vadd.f32 %v3065, %v3273
    %3275 = vmatmul.f32.gmra.mxu0 %v2107
    %v3276 = vpop.f32.mrf.mxu0
    %v3277 = vadd.f32 %v3068, %v3276
    %3278 = vmatmul.f32.gmra.mxu0 %v2115
    %v3279 = vpop.f32.mrf.mxu0
    %v3280 = vadd.f32 %v3071, %v3279
    %3281 = vmatmul.f32.gmra.mxu0 %v2123
    %v3282 = vpop.f32.mrf.mxu0
    %v3283 = vadd.f32 %v3074, %v3282
    %3284 = vmatmul.f32.gmra.mxu0 %v2131
    %v3285 = vpop.f32.mrf.mxu0
    %v3286 = vadd.f32 %v3077, %v3285
    %3287 = vmatmul.f32.gmra.mxu0 %v2139
    %v3288 = vpop.f32.mrf.mxu0
    %v3289 = vadd.f32 %v3080, %v3288
    %3290 = vmatmul.f32.gmra.mxu0 %v2147
    %v3291 = vpop.f32.mrf.mxu0
    %v3292 = vadd.f32 %v3083, %v3291
    %3293 = vmatmul.f32.gmra.mxu0 %v2155
    %v3294 = vpop.f32.mrf.mxu0
    %v3295 = vadd.f32 %v3086, %v3294
    %3296 = vmatmul.f32.gmra.mxu0 %v2163
    %v3297 = vpop.f32.mrf.mxu0
    %v3298 = vadd.f32 %v3089, %v3297
    %3299 = vmatmul.f32.gmra.mxu0 %v2171
    %v3300 = vpop.f32.mrf.mxu0
    %v3301 = vadd.f32 %v3092, %v3300
    %3302 = vmatmul.f32.gmra.mxu0 %v2179
    %v3303 = vpop.f32.mrf.mxu0
    %v3304 = vadd.f32 %v3095, %v3303
    %3305 = vmatmul.f32.gmra.mxu0 %v2187
    %v3306 = vpop.f32.mrf.mxu0
    %v3307 = vadd.f32 %v3098, %v3306
    %3308 = vmatmul.f32.gmra.mxu0 %v2195
    %v3309 = vpop.f32.mrf.mxu0
    %v3310 = vadd.f32 %v3101, %v3309
    %3311 = vmatmul.f32.gmra.mxu0 %v2203
    %v3312 = vpop.f32.mrf.mxu0
    %v3313 = vadd.f32 %v3104, %v3312
    %3314 = vmatmul.f32.gmra.mxu0 %v2211
    %v3315 = vpop.f32.mrf.mxu0
    %v3316 = vadd.f32 %v3107, %v3315
    %3317 = vmatmul.f32.gmra.mxu0 %v2219
    %v3318 = vpop.f32.mrf.mxu0
    %v3319 = vadd.f32 %v3110, %v3318
    %3320 = vmatmul.f32.gmra.mxu0 %v2227
    %v3321 = vpop.f32.mrf.mxu0
    %v3322 = vadd.f32 %v3113, %v3321
    %3323 = vmatmul.f32.gmra.mxu0 %v2235
    %v3324 = vpop.f32.mrf.mxu0
    %v3325 = vadd.f32 %v3116, %v3324
    %3326 = vmatmul.f32.gmra.mxu0 %v2243
    %v3327 = vpop.f32.mrf.mxu0
    %v3328 = vadd.f32 %v3119, %v3327
    %3329 = vmatmul.f32.gmra.mxu0 %v2251
    %v3330 = vpop.f32.mrf.mxu0
    %v3331 = vadd.f32 %v3122, %v3330
    %3332 = vmatmul.f32.gmra.mxu0 %v2259
    %v3333 = vpop.f32.mrf.mxu0
    %v3334 = vadd.f32 %v3125, %v3333
    %3335 = vmatmul.f32.gmra.mxu0 %v2267
    %v3336 = vpop.f32.mrf.mxu0
    %v3337 = vadd.f32 %v3128, %v3336
    %3338 = vmatmul.f32.gmra.mxu0 %v2275
    %v3339 = vpop.f32.mrf.mxu0
    %v3340 = vadd.f32 %v3131, %v3339
    %3341 = vmatmul.f32.gmra.mxu0 %v2283
    %v3342 = vpop.f32.mrf.mxu0
    %v3343 = vadd.f32 %v3134, %v3342
    %3344 = vmatmul.f32.gmra.mxu0 %v2291
    %v3345 = vpop.f32.mrf.mxu0
    %v3346 = vadd.f32 %v3137, %v3345
    %3347 = vmatmul.f32.gmra.mxu0 %v2299
    %v3348 = vpop.f32.mrf.mxu0
    %v3349 = vadd.f32 %v3140, %v3348
    %3350 = vmatmul.f32.gmra.mxu0 %v2307
    %v3351 = vpop.f32.mrf.mxu0
    %v3352 = vadd.f32 %v3143, %v3351
    %3353 = vmatmul.f32.gmra.mxu0 %v2315
    %v3354 = vpop.f32.mrf.mxu0
    %v3355 = vadd.f32 %v3146, %v3354
    %3356 = vmatmul.f32.gmra.mxu0 %v2323
    %v3357 = vpop.f32.mrf.mxu0
    %v3358 = vadd.f32 %v3149, %v3357
    %3359 = vmatmul.f32.gmra.mxu0 %v2331
    %v3360 = vpop.f32.mrf.mxu0
    %v3361 = vadd.f32 %v3152, %v3360
    %3362 = vmatmul.f32.gmra.mxu0 %v2339
    %v3363 = vpop.f32.mrf.mxu0
    %v3364 = vadd.f32 %v3155, %v3363
    %3365 = vmatmul.f32.gmra.mxu0 %v2347
    %v3366 = vpop.f32.mrf.mxu0
    %v3367 = vadd.f32 %v3158, %v3366
    %3368 = vmatmul.f32.gmra.mxu0 %v2355
    %v3369 = vpop.f32.mrf.mxu0
    %v3370 = vadd.f32 %v3161, %v3369
    %3371 = vdwg.mxu0
    %3372 = vmatpush.msra.mxu0 %v1784
    %3373 = vmatpush.msra.mxu0 %v1783
    %3374 = vmatpush.msra.mxu0 %v1782
    %3375 = vmatpush.msra.mxu0 %v1781
    %3376 = vmatpush.msra.mxu0 %v1780
    %3377 = vmatpush.msra.mxu0 %v1779
    %3378 = vmatpush.msra.mxu0 %v1778
    %3379 = vmatpush.msra.mxu0 %v1777
    %3380 = vmatpush.msra.mxu0 %v1776
    %3381 = vmatpush.msra.mxu0 %v1775
    %3382 = vmatpush.msra.mxu0 %v1774
    %3383 = vmatpush.msra.mxu0 %v1773
    %3384 = vmatpush.msra.mxu0 %v1772
    %3385 = vmatpush.msra.mxu0 %v1771
    %3386 = vmatpush.msra.mxu0 %v1770
    %3387 = vmatpush.msra.mxu0 %v1769
    %3388 = vmatmul.f32.gmra.mxu0 %v1852
    %v3389 = vpop.f32.mrf.mxu0
    %v3390 = vadd.f32 %v3181, %v3389
    %3391 = vmatmul.f32.gmra.mxu0 %v1860
    %v3392 = vpop.f32.mrf.mxu0
    %v3393 = vadd.f32 %v3184, %v3392
    %3394 = vmatmul.f32.gmra.mxu0 %v1868
    %v3395 = vpop.f32.mrf.mxu0
    %v3396 = vadd.f32 %v3187, %v3395
    %3397 = vmatmul.f32.gmra.mxu0 %v1876
    %v3398 = vpop.f32.mrf.mxu0
    %v3399 = vadd.f32 %v3190, %v3398
    %3400 = vmatmul.f32.gmra.mxu0 %v1884
    %v3401 = vpop.f32.mrf.mxu0
    %v3402 = vadd.f32 %v3193, %v3401
    %3403 = vmatmul.f32.gmra.mxu0 %v1892
    %v3404 = vpop.f32.mrf.mxu0
    %v3405 = vadd.f32 %v3196, %v3404
    %3406 = vmatmul.f32.gmra.mxu0 %v1900
    %v3407 = vpop.f32.mrf.mxu0
    %v3408 = vadd.f32 %v3199, %v3407
    %3409 = vmatmul.f32.gmra.mxu0 %v1908
    %v3410 = vpop.f32.mrf.mxu0
    %v3411 = vadd.f32 %v3202, %v3410
    %3412 = vmatmul.f32.gmra.mxu0 %v1916
    %v3413 = vpop.f32.mrf.mxu0
    %v3414 = vadd.f32 %v3205, %v3413
    %3415 = vmatmul.f32.gmra.mxu0 %v1924
    %v3416 = vpop.f32.mrf.mxu0
    %v3417 = vadd.f32 %v3208, %v3416
    %3418 = vmatmul.f32.gmra.mxu0 %v1932
    %v3419 = vpop.f32.mrf.mxu0
    %v3420 = vadd.f32 %v3211, %v3419
    %3421 = vmatmul.f32.gmra.mxu0 %v1940
    %v3422 = vpop.f32.mrf.mxu0
    %v3423 = vadd.f32 %v3214, %v3422
    %3424 = vmatmul.f32.gmra.mxu0 %v1948
    %v3425 = vpop.f32.mrf.mxu0
    %v3426 = vadd.f32 %v3217, %v3425
    %3427 = vmatmul.f32.gmra.mxu0 %v1956
    %v3428 = vpop.f32.mrf.mxu0
    %v3429 = vadd.f32 %v3220, %v3428
    %3430 = vmatmul.f32.gmra.mxu0 %v1964
    %v3431 = vpop.f32.mrf.mxu0
    %v3432 = vadd.f32 %v3223, %v3431
    %3433 = vmatmul.f32.gmra.mxu0 %v1972
    %v3434 = vpop.f32.mrf.mxu0
    %v3435 = vadd.f32 %v3226, %v3434
    %3436 = vmatmul.f32.gmra.mxu0 %v1980
    %v3437 = vpop.f32.mrf.mxu0
    %v3438 = vadd.f32 %v3229, %v3437
    %3439 = vmatmul.f32.gmra.mxu0 %v1988
    %v3440 = vpop.f32.mrf.mxu0
    %v3441 = vadd.f32 %v3232, %v3440
    %3442 = vmatmul.f32.gmra.mxu0 %v1996
    %v3443 = vpop.f32.mrf.mxu0
    %v3444 = vadd.f32 %v3235, %v3443
    %3445 = vmatmul.f32.gmra.mxu0 %v2004
    %v3446 = vpop.f32.mrf.mxu0
    %v3447 = vadd.f32 %v3238, %v3446
    %3448 = vmatmul.f32.gmra.mxu0 %v2012
    %v3449 = vpop.f32.mrf.mxu0
    %v3450 = vadd.f32 %v3241, %v3449
    %3451 = vmatmul.f32.gmra.mxu0 %v2020
    %v3452 = vpop.f32.mrf.mxu0
    %v3453 = vadd.f32 %v3244, %v3452
    %3454 = vmatmul.f32.gmra.mxu0 %v2028
    %v3455 = vpop.f32.mrf.mxu0
    %v3456 = vadd.f32 %v3247, %v3455
    %3457 = vmatmul.f32.gmra.mxu0 %v2036
    %v3458 = vpop.f32.mrf.mxu0
    %v3459 = vadd.f32 %v3250, %v3458
    %3460 = vmatmul.f32.gmra.mxu0 %v2044
    %v3461 = vpop.f32.mrf.mxu0
    %v3462 = vadd.f32 %v3253, %v3461
    %3463 = vmatmul.f32.gmra.mxu0 %v2052
    %v3464 = vpop.f32.mrf.mxu0
    %v3465 = vadd.f32 %v3256, %v3464
    %3466 = vmatmul.f32.gmra.mxu0 %v2060
    %v3467 = vpop.f32.mrf.mxu0
    %v3468 = vadd.f32 %v3259, %v3467
    %3469 = vmatmul.f32.gmra.mxu0 %v2068
    %v3470 = vpop.f32.mrf.mxu0
    %v3471 = vadd.f32 %v3262, %v3470
    %3472 = vmatmul.f32.gmra.mxu0 %v2076
    %v3473 = vpop.f32.mrf.mxu0
    %v3474 = vadd.f32 %v3265, %v3473
    %3475 = vmatmul.f32.gmra.mxu0 %v2084
    %v3476 = vpop.f32.mrf.mxu0
    %v3477 = vadd.f32 %v3268, %v3476
    %3478 = vmatmul.f32.gmra.mxu0 %v2092
    %v3479 = vpop.f32.mrf.mxu0
    %v3480 = vadd.f32 %v3271, %v3479
    %3481 = vmatmul.f32.gmra.mxu0 %v2100
    %v3482 = vpop.f32.mrf.mxu0
    %v3483 = vadd.f32 %v3274, %v3482
    %3484 = vmatmul.f32.gmra.mxu0 %v2108
    %v3485 = vpop.f32.mrf.mxu0
    %v3486 = vadd.f32 %v3277, %v3485
    %3487 = vmatmul.f32.gmra.mxu0 %v2116
    %v3488 = vpop.f32.mrf.mxu0
    %v3489 = vadd.f32 %v3280, %v3488
    %3490 = vmatmul.f32.gmra.mxu0 %v2124
    %v3491 = vpop.f32.mrf.mxu0
    %v3492 = vadd.f32 %v3283, %v3491
    %3493 = vmatmul.f32.gmra.mxu0 %v2132
    %v3494 = vpop.f32.mrf.mxu0
    %v3495 = vadd.f32 %v3286, %v3494
    %3496 = vmatmul.f32.gmra.mxu0 %v2140
    %v3497 = vpop.f32.mrf.mxu0
    %v3498 = vadd.f32 %v3289, %v3497
    %3499 = vmatmul.f32.gmra.mxu0 %v2148
    %v3500 = vpop.f32.mrf.mxu0
    %v3501 = vadd.f32 %v3292, %v3500
    %3502 = vmatmul.f32.gmra.mxu0 %v2156
    %v3503 = vpop.f32.mrf.mxu0
    %v3504 = vadd.f32 %v3295, %v3503
    %3505 = vmatmul.f32.gmra.mxu0 %v2164
    %v3506 = vpop.f32.mrf.mxu0
    %v3507 = vadd.f32 %v3298, %v3506
    %3508 = vmatmul.f32.gmra.mxu0 %v2172
    %v3509 = vpop.f32.mrf.mxu0
    %v3510 = vadd.f32 %v3301, %v3509
    %3511 = vmatmul.f32.gmra.mxu0 %v2180
    %v3512 = vpop.f32.mrf.mxu0
    %v3513 = vadd.f32 %v3304, %v3512
    %3514 = vmatmul.f32.gmra.mxu0 %v2188
    %v3515 = vpop.f32.mrf.mxu0
    %v3516 = vadd.f32 %v3307, %v3515
    %3517 = vmatmul.f32.gmra.mxu0 %v2196
    %v3518 = vpop.f32.mrf.mxu0
    %v3519 = vadd.f32 %v3310, %v3518
    %3520 = vmatmul.f32.gmra.mxu0 %v2204
    %v3521 = vpop.f32.mrf.mxu0
    %v3522 = vadd.f32 %v3313, %v3521
    %3523 = vmatmul.f32.gmra.mxu0 %v2212
    %v3524 = vpop.f32.mrf.mxu0
    %v3525 = vadd.f32 %v3316, %v3524
    %3526 = vmatmul.f32.gmra.mxu0 %v2220
    %v3527 = vpop.f32.mrf.mxu0
    %v3528 = vadd.f32 %v3319, %v3527
    %3529 = vmatmul.f32.gmra.mxu0 %v2228
    %v3530 = vpop.f32.mrf.mxu0
    %v3531 = vadd.f32 %v3322, %v3530
    %3532 = vmatmul.f32.gmra.mxu0 %v2236
    %v3533 = vpop.f32.mrf.mxu0
    %v3534 = vadd.f32 %v3325, %v3533
    %3535 = vmatmul.f32.gmra.mxu0 %v2244
    %v3536 = vpop.f32.mrf.mxu0
    %v3537 = vadd.f32 %v3328, %v3536
    %3538 = vmatmul.f32.gmra.mxu0 %v2252
    %v3539 = vpop.f32.mrf.mxu0
    %v3540 = vadd.f32 %v3331, %v3539
    %3541 = vmatmul.f32.gmra.mxu0 %v2260
    %v3542 = vpop.f32.mrf.mxu0
    %v3543 = vadd.f32 %v3334, %v3542
    %3544 = vmatmul.f32.gmra.mxu0 %v2268
    %v3545 = vpop.f32.mrf.mxu0
    %v3546 = vadd.f32 %v3337, %v3545
    %3547 = vmatmul.f32.gmra.mxu0 %v2276
    %v3548 = vpop.f32.mrf.mxu0
    %v3549 = vadd.f32 %v3340, %v3548
    %3550 = vmatmul.f32.gmra.mxu0 %v2284
    %v3551 = vpop.f32.mrf.mxu0
    %v3552 = vadd.f32 %v3343, %v3551
    %3553 = vmatmul.f32.gmra.mxu0 %v2292
    %v3554 = vpop.f32.mrf.mxu0
    %v3555 = vadd.f32 %v3346, %v3554
    %3556 = vmatmul.f32.gmra.mxu0 %v2300
    %v3557 = vpop.f32.mrf.mxu0
    %v3558 = vadd.f32 %v3349, %v3557
    %3559 = vmatmul.f32.gmra.mxu0 %v2308
    %v3560 = vpop.f32.mrf.mxu0
    %v3561 = vadd.f32 %v3352, %v3560
    %3562 = vmatmul.f32.gmra.mxu0 %v2316
    %v3563 = vpop.f32.mrf.mxu0
    %v3564 = vadd.f32 %v3355, %v3563
    %3565 = vmatmul.f32.gmra.mxu0 %v2324
    %v3566 = vpop.f32.mrf.mxu0
    %v3567 = vadd.f32 %v3358, %v3566
    %3568 = vmatmul.f32.gmra.mxu0 %v2332
    %v3569 = vpop.f32.mrf.mxu0
    %v3570 = vadd.f32 %v3361, %v3569
    %3571 = vmatmul.f32.gmra.mxu0 %v2340
    %v3572 = vpop.f32.mrf.mxu0
    %v3573 = vadd.f32 %v3364, %v3572
    %3574 = vmatmul.f32.gmra.mxu0 %v2348
    %v3575 = vpop.f32.mrf.mxu0
    %v3576 = vadd.f32 %v3367, %v3575
    %3577 = vmatmul.f32.gmra.mxu0 %v2356
    %v3578 = vpop.f32.mrf.mxu0
    %v3579 = vadd.f32 %v3370, %v3578
    %3580 = vdwg.mxu0
    %3581 = vmatpush.msra.mxu0 %v1800
    %3582 = vmatpush.msra.mxu0 %v1799
    %3583 = vmatpush.msra.mxu0 %v1798
    %3584 = vmatpush.msra.mxu0 %v1797
    %3585 = vmatpush.msra.mxu0 %v1796
    %3586 = vmatpush.msra.mxu0 %v1795
    %3587 = vmatpush.msra.mxu0 %v1794
    %3588 = vmatpush.msra.mxu0 %v1793
    %3589 = vmatpush.msra.mxu0 %v1792
    %3590 = vmatpush.msra.mxu0 %v1791
    %3591 = vmatpush.msra.mxu0 %v1790
    %3592 = vmatpush.msra.mxu0 %v1789
    %3593 = vmatpush.msra.mxu0 %v1788
    %3594 = vmatpush.msra.mxu0 %v1787
    %3595 = vmatpush.msra.mxu0 %v1786
    %3596 = vmatpush.msra.mxu0 %v1785
    %3597 = vmatmul.f32.gmra.mxu0 %v1853
    %v3598 = vpop.f32.mrf.mxu0
    %v3599 = vadd.f32 %v3390, %v3598
    %3600 = vmatmul.f32.gmra.mxu0 %v1861
    %v3601 = vpop.f32.mrf.mxu0
    %v3602 = vadd.f32 %v3393, %v3601
    %3603 = vmatmul.f32.gmra.mxu0 %v1869
    %v3604 = vpop.f32.mrf.mxu0
    %v3605 = vadd.f32 %v3396, %v3604
    %3606 = vmatmul.f32.gmra.mxu0 %v1877
    %v3607 = vpop.f32.mrf.mxu0
    %v3608 = vadd.f32 %v3399, %v3607
    %3609 = vmatmul.f32.gmra.mxu0 %v1885
    %v3610 = vpop.f32.mrf.mxu0
    %v3611 = vadd.f32 %v3402, %v3610
    %3612 = vmatmul.f32.gmra.mxu0 %v1893
    %v3613 = vpop.f32.mrf.mxu0
    %v3614 = vadd.f32 %v3405, %v3613
    %3615 = vmatmul.f32.gmra.mxu0 %v1901
    %v3616 = vpop.f32.mrf.mxu0
    %v3617 = vadd.f32 %v3408, %v3616
    %3618 = vmatmul.f32.gmra.mxu0 %v1909
    %v3619 = vpop.f32.mrf.mxu0
    %v3620 = vadd.f32 %v3411, %v3619
    %3621 = vmatmul.f32.gmra.mxu0 %v1917
    %v3622 = vpop.f32.mrf.mxu0
    %v3623 = vadd.f32 %v3414, %v3622
    %3624 = vmatmul.f32.gmra.mxu0 %v1925
    %v3625 = vpop.f32.mrf.mxu0
    %v3626 = vadd.f32 %v3417, %v3625
    %3627 = vmatmul.f32.gmra.mxu0 %v1933
    %v3628 = vpop.f32.mrf.mxu0
    %v3629 = vadd.f32 %v3420, %v3628
    %3630 = vmatmul.f32.gmra.mxu0 %v1941
    %v3631 = vpop.f32.mrf.mxu0
    %v3632 = vadd.f32 %v3423, %v3631
    %3633 = vmatmul.f32.gmra.mxu0 %v1949
    %v3634 = vpop.f32.mrf.mxu0
    %v3635 = vadd.f32 %v3426, %v3634
    %3636 = vmatmul.f32.gmra.mxu0 %v1957
    %v3637 = vpop.f32.mrf.mxu0
    %v3638 = vadd.f32 %v3429, %v3637
    %3639 = vmatmul.f32.gmra.mxu0 %v1965
    %v3640 = vpop.f32.mrf.mxu0
    %v3641 = vadd.f32 %v3432, %v3640
    %3642 = vmatmul.f32.gmra.mxu0 %v1973
    %v3643 = vpop.f32.mrf.mxu0
    %v3644 = vadd.f32 %v3435, %v3643
    %3645 = vmatmul.f32.gmra.mxu0 %v1981
    %v3646 = vpop.f32.mrf.mxu0
    %v3647 = vadd.f32 %v3438, %v3646
    %3648 = vmatmul.f32.gmra.mxu0 %v1989
    %v3649 = vpop.f32.mrf.mxu0
    %v3650 = vadd.f32 %v3441, %v3649
    %3651 = vmatmul.f32.gmra.mxu0 %v1997
    %v3652 = vpop.f32.mrf.mxu0
    %v3653 = vadd.f32 %v3444, %v3652
    %3654 = vmatmul.f32.gmra.mxu0 %v2005
    %v3655 = vpop.f32.mrf.mxu0
    %v3656 = vadd.f32 %v3447, %v3655
    %3657 = vmatmul.f32.gmra.mxu0 %v2013
    %v3658 = vpop.f32.mrf.mxu0
    %v3659 = vadd.f32 %v3450, %v3658
    %3660 = vmatmul.f32.gmra.mxu0 %v2021
    %v3661 = vpop.f32.mrf.mxu0
    %v3662 = vadd.f32 %v3453, %v3661
    %3663 = vmatmul.f32.gmra.mxu0 %v2029
    %v3664 = vpop.f32.mrf.mxu0
    %v3665 = vadd.f32 %v3456, %v3664
    %3666 = vmatmul.f32.gmra.mxu0 %v2037
    %v3667 = vpop.f32.mrf.mxu0
    %v3668 = vadd.f32 %v3459, %v3667
    %3669 = vmatmul.f32.gmra.mxu0 %v2045
    %v3670 = vpop.f32.mrf.mxu0
    %v3671 = vadd.f32 %v3462, %v3670
    %3672 = vmatmul.f32.gmra.mxu0 %v2053
    %v3673 = vpop.f32.mrf.mxu0
    %v3674 = vadd.f32 %v3465, %v3673
    %3675 = vmatmul.f32.gmra.mxu0 %v2061
    %v3676 = vpop.f32.mrf.mxu0
    %v3677 = vadd.f32 %v3468, %v3676
    %3678 = vmatmul.f32.gmra.mxu0 %v2069
    %v3679 = vpop.f32.mrf.mxu0
    %v3680 = vadd.f32 %v3471, %v3679
    %3681 = vmatmul.f32.gmra.mxu0 %v2077
    %v3682 = vpop.f32.mrf.mxu0
    %v3683 = vadd.f32 %v3474, %v3682
    %3684 = vmatmul.f32.gmra.mxu0 %v2085
    %v3685 = vpop.f32.mrf.mxu0
    %v3686 = vadd.f32 %v3477, %v3685
    %3687 = vmatmul.f32.gmra.mxu0 %v2093
    %v3688 = vpop.f32.mrf.mxu0
    %v3689 = vadd.f32 %v3480, %v3688
    %3690 = vmatmul.f32.gmra.mxu0 %v2101
    %v3691 = vpop.f32.mrf.mxu0
    %v3692 = vadd.f32 %v3483, %v3691
    %3693 = vmatmul.f32.gmra.mxu0 %v2109
    %v3694 = vpop.f32.mrf.mxu0
    %v3695 = vadd.f32 %v3486, %v3694
    %3696 = vmatmul.f32.gmra.mxu0 %v2117
    %v3697 = vpop.f32.mrf.mxu0
    %v3698 = vadd.f32 %v3489, %v3697
    %3699 = vmatmul.f32.gmra.mxu0 %v2125
    %v3700 = vpop.f32.mrf.mxu0
    %v3701 = vadd.f32 %v3492, %v3700
    %3702 = vmatmul.f32.gmra.mxu0 %v2133
    %v3703 = vpop.f32.mrf.mxu0
    %v3704 = vadd.f32 %v3495, %v3703
    %3705 = vmatmul.f32.gmra.mxu0 %v2141
    %v3706 = vpop.f32.mrf.mxu0
    %v3707 = vadd.f32 %v3498, %v3706
    %3708 = vmatmul.f32.gmra.mxu0 %v2149
    %v3709 = vpop.f32.mrf.mxu0
    %v3710 = vadd.f32 %v3501, %v3709
    %3711 = vmatmul.f32.gmra.mxu0 %v2157
    %v3712 = vpop.f32.mrf.mxu0
    %v3713 = vadd.f32 %v3504, %v3712
    %3714 = vmatmul.f32.gmra.mxu0 %v2165
    %v3715 = vpop.f32.mrf.mxu0
    %v3716 = vadd.f32 %v3507, %v3715
    %3717 = vmatmul.f32.gmra.mxu0 %v2173
    %v3718 = vpop.f32.mrf.mxu0
    %v3719 = vadd.f32 %v3510, %v3718
    %3720 = vmatmul.f32.gmra.mxu0 %v2181
    %v3721 = vpop.f32.mrf.mxu0
    %v3722 = vadd.f32 %v3513, %v3721
    %3723 = vmatmul.f32.gmra.mxu0 %v2189
    %v3724 = vpop.f32.mrf.mxu0
    %v3725 = vadd.f32 %v3516, %v3724
    %3726 = vmatmul.f32.gmra.mxu0 %v2197
    %v3727 = vpop.f32.mrf.mxu0
    %v3728 = vadd.f32 %v3519, %v3727
    %3729 = vmatmul.f32.gmra.mxu0 %v2205
    %v3730 = vpop.f32.mrf.mxu0
    %v3731 = vadd.f32 %v3522, %v3730
    %3732 = vmatmul.f32.gmra.mxu0 %v2213
    %v3733 = vpop.f32.mrf.mxu0
    %v3734 = vadd.f32 %v3525, %v3733
    %3735 = vmatmul.f32.gmra.mxu0 %v2221
    %v3736 = vpop.f32.mrf.mxu0
    %v3737 = vadd.f32 %v3528, %v3736
    %3738 = vmatmul.f32.gmra.mxu0 %v2229
    %v3739 = vpop.f32.mrf.mxu0
    %v3740 = vadd.f32 %v3531, %v3739
    %3741 = vmatmul.f32.gmra.mxu0 %v2237
    %v3742 = vpop.f32.mrf.mxu0
    %v3743 = vadd.f32 %v3534, %v3742
    %3744 = vmatmul.f32.gmra.mxu0 %v2245
    %v3745 = vpop.f32.mrf.mxu0
    %v3746 = vadd.f32 %v3537, %v3745
    %3747 = vmatmul.f32.gmra.mxu0 %v2253
    %v3748 = vpop.f32.mrf.mxu0
    %v3749 = vadd.f32 %v3540, %v3748
    %3750 = vmatmul.f32.gmra.mxu0 %v2261
    %v3751 = vpop.f32.mrf.mxu0
    %v3752 = vadd.f32 %v3543, %v3751
    %3753 = vmatmul.f32.gmra.mxu0 %v2269
    %v3754 = vpop.f32.mrf.mxu0
    %v3755 = vadd.f32 %v3546, %v3754
    %3756 = vmatmul.f32.gmra.mxu0 %v2277
    %v3757 = vpop.f32.mrf.mxu0
    %v3758 = vadd.f32 %v3549, %v3757
    %3759 = vmatmul.f32.gmra.mxu0 %v2285
    %v3760 = vpop.f32.mrf.mxu0
    %v3761 = vadd.f32 %v3552, %v3760
    %3762 = vmatmul.f32.gmra.mxu0 %v2293
    %v3763 = vpop.f32.mrf.mxu0
    %v3764 = vadd.f32 %v3555, %v3763
    %3765 = vmatmul.f32.gmra.mxu0 %v2301
    %v3766 = vpop.f32.mrf.mxu0
    %v3767 = vadd.f32 %v3558, %v3766
    %3768 = vmatmul.f32.gmra.mxu0 %v2309
    %v3769 = vpop.f32.mrf.mxu0
    %v3770 = vadd.f32 %v3561, %v3769
    %3771 = vmatmul.f32.gmra.mxu0 %v2317
    %v3772 = vpop.f32.mrf.mxu0
    %v3773 = vadd.f32 %v3564, %v3772
    %3774 = vmatmul.f32.gmra.mxu0 %v2325
    %v3775 = vpop.f32.mrf.mxu0
    %v3776 = vadd.f32 %v3567, %v3775
    %3777 = vmatmul.f32.gmra.mxu0 %v2333
    %v3778 = vpop.f32.mrf.mxu0
    %v3779 = vadd.f32 %v3570, %v3778
    %3780 = vmatmul.f32.gmra.mxu0 %v2341
    %v3781 = vpop.f32.mrf.mxu0
    %v3782 = vadd.f32 %v3573, %v3781
    %3783 = vmatmul.f32.gmra.mxu0 %v2349
    %v3784 = vpop.f32.mrf.mxu0
    %v3785 = vadd.f32 %v3576, %v3784
    %3786 = vmatmul.f32.gmra.mxu0 %v2357
    %v3787 = vpop.f32.mrf.mxu0
    %v3788 = vadd.f32 %v3579, %v3787
    %3789 = vdwg.mxu0
    %3790 = vmatpush.msra.mxu0 %v1816
    %3791 = vmatpush.msra.mxu0 %v1815
    %3792 = vmatpush.msra.mxu0 %v1814
    %3793 = vmatpush.msra.mxu0 %v1813
    %3794 = vmatpush.msra.mxu0 %v1812
    %3795 = vmatpush.msra.mxu0 %v1811
    %3796 = vmatpush.msra.mxu0 %v1810
    %3797 = vmatpush.msra.mxu0 %v1809
    %3798 = vmatpush.msra.mxu0 %v1808
    %3799 = vmatpush.msra.mxu0 %v1807
    %3800 = vmatpush.msra.mxu0 %v1806
    %3801 = vmatpush.msra.mxu0 %v1805
    %3802 = vmatpush.msra.mxu0 %v1804
    %3803 = vmatpush.msra.mxu0 %v1803
    %3804 = vmatpush.msra.mxu0 %v1802
    %3805 = vmatpush.msra.mxu0 %v1801
    %3806 = vmatmul.f32.gmra.mxu0 %v1854
    %v3807 = vpop.f32.mrf.mxu0
    %v3808 = vadd.f32 %v3599, %v3807
    %3809 = vmatmul.f32.gmra.mxu0 %v1862
    %v3810 = vpop.f32.mrf.mxu0
    %v3811 = vadd.f32 %v3602, %v3810
    %3812 = vmatmul.f32.gmra.mxu0 %v1870
    %v3813 = vpop.f32.mrf.mxu0
    %v3814 = vadd.f32 %v3605, %v3813
    %3815 = vmatmul.f32.gmra.mxu0 %v1878
    %v3816 = vpop.f32.mrf.mxu0
    %v3817 = vadd.f32 %v3608, %v3816
    %3818 = vmatmul.f32.gmra.mxu0 %v1886
    %v3819 = vpop.f32.mrf.mxu0
    %v3820 = vadd.f32 %v3611, %v3819
    %3821 = vmatmul.f32.gmra.mxu0 %v1894
    %v3822 = vpop.f32.mrf.mxu0
    %v3823 = vadd.f32 %v3614, %v3822
    %3824 = vmatmul.f32.gmra.mxu0 %v1902
    %v3825 = vpop.f32.mrf.mxu0
    %v3826 = vadd.f32 %v3617, %v3825
    %3827 = vmatmul.f32.gmra.mxu0 %v1910
    %v3828 = vpop.f32.mrf.mxu0
    %v3829 = vadd.f32 %v3620, %v3828
    %3830 = vmatmul.f32.gmra.mxu0 %v1918
    %v3831 = vpop.f32.mrf.mxu0
    %v3832 = vadd.f32 %v3623, %v3831
    %3833 = vmatmul.f32.gmra.mxu0 %v1926
    %v3834 = vpop.f32.mrf.mxu0
    %v3835 = vadd.f32 %v3626, %v3834
    %3836 = vmatmul.f32.gmra.mxu0 %v1934
    %v3837 = vpop.f32.mrf.mxu0
    %v3838 = vadd.f32 %v3629, %v3837
    %3839 = vmatmul.f32.gmra.mxu0 %v1942
    %v3840 = vpop.f32.mrf.mxu0
    %v3841 = vadd.f32 %v3632, %v3840
    %3842 = vmatmul.f32.gmra.mxu0 %v1950
    %v3843 = vpop.f32.mrf.mxu0
    %v3844 = vadd.f32 %v3635, %v3843
    %3845 = vmatmul.f32.gmra.mxu0 %v1958
    %v3846 = vpop.f32.mrf.mxu0
    %v3847 = vadd.f32 %v3638, %v3846
    %3848 = vmatmul.f32.gmra.mxu0 %v1966
    %v3849 = vpop.f32.mrf.mxu0
    %v3850 = vadd.f32 %v3641, %v3849
    %3851 = vmatmul.f32.gmra.mxu0 %v1974
    %v3852 = vpop.f32.mrf.mxu0
    %v3853 = vadd.f32 %v3644, %v3852
    %3854 = vmatmul.f32.gmra.mxu0 %v1982
    %v3855 = vpop.f32.mrf.mxu0
    %v3856 = vadd.f32 %v3647, %v3855
    %3857 = vmatmul.f32.gmra.mxu0 %v1990
    %v3858 = vpop.f32.mrf.mxu0
    %v3859 = vadd.f32 %v3650, %v3858
    %3860 = vmatmul.f32.gmra.mxu0 %v1998
    %v3861 = vpop.f32.mrf.mxu0
    %v3862 = vadd.f32 %v3653, %v3861
    %3863 = vmatmul.f32.gmra.mxu0 %v2006
    %v3864 = vpop.f32.mrf.mxu0
    %v3865 = vadd.f32 %v3656, %v3864
    %3866 = vmatmul.f32.gmra.mxu0 %v2014
    %v3867 = vpop.f32.mrf.mxu0
    %v3868 = vadd.f32 %v3659, %v3867
    %3869 = vmatmul.f32.gmra.mxu0 %v2022
    %v3870 = vpop.f32.mrf.mxu0
    %v3871 = vadd.f32 %v3662, %v3870
    %3872 = vmatmul.f32.gmra.mxu0 %v2030
    %v3873 = vpop.f32.mrf.mxu0
    %v3874 = vadd.f32 %v3665, %v3873
    %3875 = vmatmul.f32.gmra.mxu0 %v2038
    %v3876 = vpop.f32.mrf.mxu0
    %v3877 = vadd.f32 %v3668, %v3876
    %3878 = vmatmul.f32.gmra.mxu0 %v2046
    %v3879 = vpop.f32.mrf.mxu0
    %v3880 = vadd.f32 %v3671, %v3879
    %3881 = vmatmul.f32.gmra.mxu0 %v2054
    %v3882 = vpop.f32.mrf.mxu0
    %v3883 = vadd.f32 %v3674, %v3882
    %3884 = vmatmul.f32.gmra.mxu0 %v2062
    %v3885 = vpop.f32.mrf.mxu0
    %v3886 = vadd.f32 %v3677, %v3885
    %3887 = vmatmul.f32.gmra.mxu0 %v2070
    %v3888 = vpop.f32.mrf.mxu0
    %v3889 = vadd.f32 %v3680, %v3888
    %3890 = vmatmul.f32.gmra.mxu0 %v2078
    %v3891 = vpop.f32.mrf.mxu0
    %v3892 = vadd.f32 %v3683, %v3891
    %3893 = vmatmul.f32.gmra.mxu0 %v2086
    %v3894 = vpop.f32.mrf.mxu0
    %v3895 = vadd.f32 %v3686, %v3894
    %3896 = vmatmul.f32.gmra.mxu0 %v2094
    %v3897 = vpop.f32.mrf.mxu0
    %v3898 = vadd.f32 %v3689, %v3897
    %3899 = vmatmul.f32.gmra.mxu0 %v2102
    %v3900 = vpop.f32.mrf.mxu0
    %v3901 = vadd.f32 %v3692, %v3900
    %3902 = vmatmul.f32.gmra.mxu0 %v2110
    %v3903 = vpop.f32.mrf.mxu0
    %v3904 = vadd.f32 %v3695, %v3903
    %3905 = vmatmul.f32.gmra.mxu0 %v2118
    %v3906 = vpop.f32.mrf.mxu0
    %v3907 = vadd.f32 %v3698, %v3906
    %3908 = vmatmul.f32.gmra.mxu0 %v2126
    %v3909 = vpop.f32.mrf.mxu0
    %v3910 = vadd.f32 %v3701, %v3909
    %3911 = vmatmul.f32.gmra.mxu0 %v2134
    %v3912 = vpop.f32.mrf.mxu0
    %v3913 = vadd.f32 %v3704, %v3912
    %3914 = vmatmul.f32.gmra.mxu0 %v2142
    %v3915 = vpop.f32.mrf.mxu0
    %v3916 = vadd.f32 %v3707, %v3915
    %3917 = vmatmul.f32.gmra.mxu0 %v2150
    %v3918 = vpop.f32.mrf.mxu0
    %v3919 = vadd.f32 %v3710, %v3918
    %3920 = vmatmul.f32.gmra.mxu0 %v2158
    %v3921 = vpop.f32.mrf.mxu0
    %v3922 = vadd.f32 %v3713, %v3921
    %3923 = vmatmul.f32.gmra.mxu0 %v2166
    %v3924 = vpop.f32.mrf.mxu0
    %v3925 = vadd.f32 %v3716, %v3924
    %3926 = vmatmul.f32.gmra.mxu0 %v2174
    %v3927 = vpop.f32.mrf.mxu0
    %v3928 = vadd.f32 %v3719, %v3927
    %3929 = vmatmul.f32.gmra.mxu0 %v2182
    %v3930 = vpop.f32.mrf.mxu0
    %v3931 = vadd.f32 %v3722, %v3930
    %3932 = vmatmul.f32.gmra.mxu0 %v2190
    %v3933 = vpop.f32.mrf.mxu0
    %v3934 = vadd.f32 %v3725, %v3933
    %3935 = vmatmul.f32.gmra.mxu0 %v2198
    %v3936 = vpop.f32.mrf.mxu0
    %v3937 = vadd.f32 %v3728, %v3936
    %3938 = vmatmul.f32.gmra.mxu0 %v2206
    %v3939 = vpop.f32.mrf.mxu0
    %v3940 = vadd.f32 %v3731, %v3939
    %3941 = vmatmul.f32.gmra.mxu0 %v2214
    %v3942 = vpop.f32.mrf.mxu0
    %v3943 = vadd.f32 %v3734, %v3942
    %3944 = vmatmul.f32.gmra.mxu0 %v2222
    %v3945 = vpop.f32.mrf.mxu0
    %v3946 = vadd.f32 %v3737, %v3945
    %3947 = vmatmul.f32.gmra.mxu0 %v2230
    %v3948 = vpop.f32.mrf.mxu0
    %v3949 = vadd.f32 %v3740, %v3948
    %3950 = vmatmul.f32.gmra.mxu0 %v2238
    %v3951 = vpop.f32.mrf.mxu0
    %v3952 = vadd.f32 %v3743, %v3951
    %3953 = vmatmul.f32.gmra.mxu0 %v2246
    %v3954 = vpop.f32.mrf.mxu0
    %v3955 = vadd.f32 %v3746, %v3954
    %3956 = vmatmul.f32.gmra.mxu0 %v2254
    %v3957 = vpop.f32.mrf.mxu0
    %v3958 = vadd.f32 %v3749, %v3957
    %3959 = vmatmul.f32.gmra.mxu0 %v2262
    %v3960 = vpop.f32.mrf.mxu0
    %v3961 = vadd.f32 %v3752, %v3960
    %3962 = vmatmul.f32.gmra.mxu0 %v2270
    %v3963 = vpop.f32.mrf.mxu0
    %v3964 = vadd.f32 %v3755, %v3963
    %3965 = vmatmul.f32.gmra.mxu0 %v2278
    %v3966 = vpop.f32.mrf.mxu0
    %v3967 = vadd.f32 %v3758, %v3966
    %3968 = vmatmul.f32.gmra.mxu0 %v2286
    %v3969 = vpop.f32.mrf.mxu0
    %v3970 = vadd.f32 %v3761, %v3969
    %3971 = vmatmul.f32.gmra.mxu0 %v2294
    %v3972 = vpop.f32.mrf.mxu0
    %v3973 = vadd.f32 %v3764, %v3972
    %3974 = vmatmul.f32.gmra.mxu0 %v2302
    %v3975 = vpop.f32.mrf.mxu0
    %v3976 = vadd.f32 %v3767, %v3975
    %3977 = vmatmul.f32.gmra.mxu0 %v2310
    %v3978 = vpop.f32.mrf.mxu0
    %v3979 = vadd.f32 %v3770, %v3978
    %3980 = vmatmul.f32.gmra.mxu0 %v2318
    %v3981 = vpop.f32.mrf.mxu0
    %v3982 = vadd.f32 %v3773, %v3981
    %3983 = vmatmul.f32.gmra.mxu0 %v2326
    %v3984 = vpop.f32.mrf.mxu0
    %v3985 = vadd.f32 %v3776, %v3984
    %3986 = vmatmul.f32.gmra.mxu0 %v2334
    %v3987 = vpop.f32.mrf.mxu0
    %v3988 = vadd.f32 %v3779, %v3987
    %3989 = vmatmul.f32.gmra.mxu0 %v2342
    %v3990 = vpop.f32.mrf.mxu0
    %v3991 = vadd.f32 %v3782, %v3990
    %3992 = vmatmul.f32.gmra.mxu0 %v2350
    %v3993 = vpop.f32.mrf.mxu0
    %v3994 = vadd.f32 %v3785, %v3993
    %3995 = vmatmul.f32.gmra.mxu0 %v2358
    %v3996 = vpop.f32.mrf.mxu0
    %v3997 = vadd.f32 %v3788, %v3996
    %3998 = vdwg.mxu0
    %3999 = vmatpush.msra.mxu0 %v1832
    %4000 = vmatpush.msra.mxu0 %v1831
    %4001 = vmatpush.msra.mxu0 %v1830
    %4002 = vmatpush.msra.mxu0 %v1829
    %4003 = vmatpush.msra.mxu0 %v1828
    %4004 = vmatpush.msra.mxu0 %v1827
    %4005 = vmatpush.msra.mxu0 %v1826
    %4006 = vmatpush.msra.mxu0 %v1825
    %4007 = vmatpush.msra.mxu0 %v1824
    %4008 = vmatpush.msra.mxu0 %v1823
    %4009 = vmatpush.msra.mxu0 %v1822
    %4010 = vmatpush.msra.mxu0 %v1821
    %4011 = vmatpush.msra.mxu0 %v1820
    %4012 = vmatpush.msra.mxu0 %v1819
    %4013 = vmatpush.msra.mxu0 %v1818
    %4014 = vmatpush.msra.mxu0 %v1817
    %4015 = vmatmul.f32.gmra.mxu0 %v1855
    %v4016 = vpop.f32.mrf.mxu0
    %v4017 = vadd.f32 %v3808, %v4016
    %4018 = vmatmul.f32.gmra.mxu0 %v1863
    %v4019 = vpop.f32.mrf.mxu0
    %v4020 = vadd.f32 %v3811, %v4019
    %4021 = vmatmul.f32.gmra.mxu0 %v1871
    %v4022 = vpop.f32.mrf.mxu0
    %v4023 = vadd.f32 %v3814, %v4022
    %4024 = vmatmul.f32.gmra.mxu0 %v1879
    %v4025 = vpop.f32.mrf.mxu0
    %v4026 = vadd.f32 %v3817, %v4025
    %4027 = vmatmul.f32.gmra.mxu0 %v1887
    %v4028 = vpop.f32.mrf.mxu0
    %v4029 = vadd.f32 %v3820, %v4028
    %4030 = vmatmul.f32.gmra.mxu0 %v1895
    %v4031 = vpop.f32.mrf.mxu0
    %v4032 = vadd.f32 %v3823, %v4031
    %4033 = vmatmul.f32.gmra.mxu0 %v1903
    %v4034 = vpop.f32.mrf.mxu0
    %v4035 = vadd.f32 %v3826, %v4034
    %4036 = vmatmul.f32.gmra.mxu0 %v1911
    %v4037 = vpop.f32.mrf.mxu0
    %v4038 = vadd.f32 %v3829, %v4037
    %4039 = vmatmul.f32.gmra.mxu0 %v1919
    %v4040 = vpop.f32.mrf.mxu0
    %v4041 = vadd.f32 %v3832, %v4040
    %4042 = vmatmul.f32.gmra.mxu0 %v1927
    %v4043 = vpop.f32.mrf.mxu0
    %v4044 = vadd.f32 %v3835, %v4043
    %4045 = vmatmul.f32.gmra.mxu0 %v1935
    %v4046 = vpop.f32.mrf.mxu0
    %v4047 = vadd.f32 %v3838, %v4046
    %4048 = vmatmul.f32.gmra.mxu0 %v1943
    %v4049 = vpop.f32.mrf.mxu0
    %v4050 = vadd.f32 %v3841, %v4049
    %4051 = vmatmul.f32.gmra.mxu0 %v1951
    %v4052 = vpop.f32.mrf.mxu0
    %v4053 = vadd.f32 %v3844, %v4052
    %4054 = vmatmul.f32.gmra.mxu0 %v1959
    %v4055 = vpop.f32.mrf.mxu0
    %v4056 = vadd.f32 %v3847, %v4055
    %4057 = vmatmul.f32.gmra.mxu0 %v1967
    %v4058 = vpop.f32.mrf.mxu0
    %v4059 = vadd.f32 %v3850, %v4058
    %4060 = vmatmul.f32.gmra.mxu0 %v1975
    %v4061 = vpop.f32.mrf.mxu0
    %v4062 = vadd.f32 %v3853, %v4061
    %4063 = vmatmul.f32.gmra.mxu0 %v1983
    %v4064 = vpop.f32.mrf.mxu0
    %v4065 = vadd.f32 %v3856, %v4064
    %4066 = vmatmul.f32.gmra.mxu0 %v1991
    %v4067 = vpop.f32.mrf.mxu0
    %v4068 = vadd.f32 %v3859, %v4067
    %4069 = vmatmul.f32.gmra.mxu0 %v1999
    %v4070 = vpop.f32.mrf.mxu0
    %v4071 = vadd.f32 %v3862, %v4070
    %4072 = vmatmul.f32.gmra.mxu0 %v2007
    %v4073 = vpop.f32.mrf.mxu0
    %v4074 = vadd.f32 %v3865, %v4073
    %4075 = vmatmul.f32.gmra.mxu0 %v2015
    %v4076 = vpop.f32.mrf.mxu0
    %v4077 = vadd.f32 %v3868, %v4076
    %4078 = vmatmul.f32.gmra.mxu0 %v2023
    %v4079 = vpop.f32.mrf.mxu0
    %v4080 = vadd.f32 %v3871, %v4079
    %4081 = vmatmul.f32.gmra.mxu0 %v2031
    %v4082 = vpop.f32.mrf.mxu0
    %v4083 = vadd.f32 %v3874, %v4082
    %4084 = vmatmul.f32.gmra.mxu0 %v2039
    %v4085 = vpop.f32.mrf.mxu0
    %v4086 = vadd.f32 %v3877, %v4085
    %4087 = vmatmul.f32.gmra.mxu0 %v2047
    %v4088 = vpop.f32.mrf.mxu0
    %v4089 = vadd.f32 %v3880, %v4088
    %4090 = vmatmul.f32.gmra.mxu0 %v2055
    %v4091 = vpop.f32.mrf.mxu0
    %v4092 = vadd.f32 %v3883, %v4091
    %4093 = vmatmul.f32.gmra.mxu0 %v2063
    %v4094 = vpop.f32.mrf.mxu0
    %v4095 = vadd.f32 %v3886, %v4094
    %4096 = vmatmul.f32.gmra.mxu0 %v2071
    %v4097 = vpop.f32.mrf.mxu0
    %v4098 = vadd.f32 %v3889, %v4097
    %4099 = vmatmul.f32.gmra.mxu0 %v2079
    %v4100 = vpop.f32.mrf.mxu0
    %v4101 = vadd.f32 %v3892, %v4100
    %4102 = vmatmul.f32.gmra.mxu0 %v2087
    %v4103 = vpop.f32.mrf.mxu0
    %v4104 = vadd.f32 %v3895, %v4103
    %4105 = vmatmul.f32.gmra.mxu0 %v2095
    %v4106 = vpop.f32.mrf.mxu0
    %v4107 = vadd.f32 %v3898, %v4106
    %4108 = vmatmul.f32.gmra.mxu0 %v2103
    %v4109 = vpop.f32.mrf.mxu0
    %v4110 = vadd.f32 %v3901, %v4109
    %4111 = vmatmul.f32.gmra.mxu0 %v2111
    %v4112 = vpop.f32.mrf.mxu0
    %v4113 = vadd.f32 %v3904, %v4112
    %4114 = vmatmul.f32.gmra.mxu0 %v2119
    %v4115 = vpop.f32.mrf.mxu0
    %v4116 = vadd.f32 %v3907, %v4115
    %4117 = vmatmul.f32.gmra.mxu0 %v2127
    %v4118 = vpop.f32.mrf.mxu0
    %v4119 = vadd.f32 %v3910, %v4118
    %4120 = vmatmul.f32.gmra.mxu0 %v2135
    %v4121 = vpop.f32.mrf.mxu0
    %v4122 = vadd.f32 %v3913, %v4121
    %4123 = vmatmul.f32.gmra.mxu0 %v2143
    %v4124 = vpop.f32.mrf.mxu0
    %v4125 = vadd.f32 %v3916, %v4124
    %4126 = vmatmul.f32.gmra.mxu0 %v2151
    %v4127 = vpop.f32.mrf.mxu0
    %v4128 = vadd.f32 %v3919, %v4127
    %4129 = vmatmul.f32.gmra.mxu0 %v2159
    %v4130 = vpop.f32.mrf.mxu0
    %v4131 = vadd.f32 %v3922, %v4130
    %4132 = vmatmul.f32.gmra.mxu0 %v2167
    %v4133 = vpop.f32.mrf.mxu0
    %v4134 = vadd.f32 %v3925, %v4133
    %4135 = vmatmul.f32.gmra.mxu0 %v2175
    %v4136 = vpop.f32.mrf.mxu0
    %v4137 = vadd.f32 %v3928, %v4136
    %4138 = vmatmul.f32.gmra.mxu0 %v2183
    %v4139 = vpop.f32.mrf.mxu0
    %v4140 = vadd.f32 %v3931, %v4139
    %4141 = vmatmul.f32.gmra.mxu0 %v2191
    %v4142 = vpop.f32.mrf.mxu0
    %v4143 = vadd.f32 %v3934, %v4142
    %4144 = vmatmul.f32.gmra.mxu0 %v2199
    %v4145 = vpop.f32.mrf.mxu0
    %v4146 = vadd.f32 %v3937, %v4145
    %4147 = vmatmul.f32.gmra.mxu0 %v2207
    %v4148 = vpop.f32.mrf.mxu0
    %v4149 = vadd.f32 %v3940, %v4148
    %4150 = vmatmul.f32.gmra.mxu0 %v2215
    %v4151 = vpop.f32.mrf.mxu0
    %v4152 = vadd.f32 %v3943, %v4151
    %4153 = vmatmul.f32.gmra.mxu0 %v2223
    %v4154 = vpop.f32.mrf.mxu0
    %v4155 = vadd.f32 %v3946, %v4154
    %4156 = vmatmul.f32.gmra.mxu0 %v2231
    %v4157 = vpop.f32.mrf.mxu0
    %v4158 = vadd.f32 %v3949, %v4157
    %4159 = vmatmul.f32.gmra.mxu0 %v2239
    %v4160 = vpop.f32.mrf.mxu0
    %v4161 = vadd.f32 %v3952, %v4160
    %4162 = vmatmul.f32.gmra.mxu0 %v2247
    %v4163 = vpop.f32.mrf.mxu0
    %v4164 = vadd.f32 %v3955, %v4163
    %4165 = vmatmul.f32.gmra.mxu0 %v2255
    %v4166 = vpop.f32.mrf.mxu0
    %v4167 = vadd.f32 %v3958, %v4166
    %4168 = vmatmul.f32.gmra.mxu0 %v2263
    %v4169 = vpop.f32.mrf.mxu0
    %v4170 = vadd.f32 %v3961, %v4169
    %4171 = vmatmul.f32.gmra.mxu0 %v2271
    %v4172 = vpop.f32.mrf.mxu0
    %v4173 = vadd.f32 %v3964, %v4172
    %4174 = vmatmul.f32.gmra.mxu0 %v2279
    %v4175 = vpop.f32.mrf.mxu0
    %v4176 = vadd.f32 %v3967, %v4175
    %4177 = vmatmul.f32.gmra.mxu0 %v2287
    %v4178 = vpop.f32.mrf.mxu0
    %v4179 = vadd.f32 %v3970, %v4178
    %4180 = vmatmul.f32.gmra.mxu0 %v2295
    %v4181 = vpop.f32.mrf.mxu0
    %v4182 = vadd.f32 %v3973, %v4181
    %4183 = vmatmul.f32.gmra.mxu0 %v2303
    %v4184 = vpop.f32.mrf.mxu0
    %v4185 = vadd.f32 %v3976, %v4184
    %4186 = vmatmul.f32.gmra.mxu0 %v2311
    %v4187 = vpop.f32.mrf.mxu0
    %v4188 = vadd.f32 %v3979, %v4187
    %4189 = vmatmul.f32.gmra.mxu0 %v2319
    %v4190 = vpop.f32.mrf.mxu0
    %v4191 = vadd.f32 %v3982, %v4190
    %4192 = vmatmul.f32.gmra.mxu0 %v2327
    %v4193 = vpop.f32.mrf.mxu0
    %v4194 = vadd.f32 %v3985, %v4193
    %4195 = vmatmul.f32.gmra.mxu0 %v2335
    %v4196 = vpop.f32.mrf.mxu0
    %v4197 = vadd.f32 %v3988, %v4196
    %4198 = vmatmul.f32.gmra.mxu0 %v2343
    %v4199 = vpop.f32.mrf.mxu0
    %v4200 = vadd.f32 %v3991, %v4199
    %4201 = vmatmul.f32.gmra.mxu0 %v2351
    %v4202 = vpop.f32.mrf.mxu0
    %v4203 = vadd.f32 %v3994, %v4202
    %4204 = vmatmul.f32.gmra.mxu0 %v2359
    %v4205 = vpop.f32.mrf.mxu0
    %v4206 = vadd.f32 %v3997, %v4205
    %4207 = vdwg.mxu0
    %4208 = vmatpush.msra.mxu0 %v1848
    %4209 = vmatpush.msra.mxu0 %v1847
    %4210 = vmatpush.msra.mxu0 %v1846
    %4211 = vmatpush.msra.mxu0 %v1845
    %4212 = vmatpush.msra.mxu0 %v1844
    %4213 = vmatpush.msra.mxu0 %v1843
    %4214 = vmatpush.msra.mxu0 %v1842
    %4215 = vmatpush.msra.mxu0 %v1841
    %4216 = vmatpush.msra.mxu0 %v1840
    %4217 = vmatpush.msra.mxu0 %v1839
    %4218 = vmatpush.msra.mxu0 %v1838
    %4219 = vmatpush.msra.mxu0 %v1837
    %4220 = vmatpush.msra.mxu0 %v1836
    %4221 = vmatpush.msra.mxu0 %v1835
    %4222 = vmatpush.msra.mxu0 %v1834
    %4223 = vmatpush.msra.mxu0 %v1833
    %4224 = vmatmul.f32.gmra.mxu0 %v1856
    %v4225 = vpop.f32.mrf.mxu0
    %v4226 = vadd.f32 %v4017, %v4225
    %4227 = vmatmul.f32.gmra.mxu0 %v1864
    %v4228 = vpop.f32.mrf.mxu0
    %v4229 = vadd.f32 %v4020, %v4228
    %4230 = vmatmul.f32.gmra.mxu0 %v1872
    %v4231 = vpop.f32.mrf.mxu0
    %v4232 = vadd.f32 %v4023, %v4231
    %4233 = vmatmul.f32.gmra.mxu0 %v1880
    %v4234 = vpop.f32.mrf.mxu0
    %v4235 = vadd.f32 %v4026, %v4234
    %4236 = vmatmul.f32.gmra.mxu0 %v1888
    %v4237 = vpop.f32.mrf.mxu0
    %v4238 = vadd.f32 %v4029, %v4237
    %4239 = vmatmul.f32.gmra.mxu0 %v1896
    %v4240 = vpop.f32.mrf.mxu0
    %v4241 = vadd.f32 %v4032, %v4240
    %4242 = vmatmul.f32.gmra.mxu0 %v1904
    %v4243 = vpop.f32.mrf.mxu0
    %v4244 = vadd.f32 %v4035, %v4243
    %4245 = vmatmul.f32.gmra.mxu0 %v1912
    %v4246 = vpop.f32.mrf.mxu0
    %v4247 = vadd.f32 %v4038, %v4246
    %4248 = vmatmul.f32.gmra.mxu0 %v1920
    %v4249 = vpop.f32.mrf.mxu0
    %v4250 = vadd.f32 %v4041, %v4249
    %4251 = vmatmul.f32.gmra.mxu0 %v1928
    %v4252 = vpop.f32.mrf.mxu0
    %v4253 = vadd.f32 %v4044, %v4252
    %4254 = vmatmul.f32.gmra.mxu0 %v1936
    %v4255 = vpop.f32.mrf.mxu0
    %v4256 = vadd.f32 %v4047, %v4255
    %4257 = vmatmul.f32.gmra.mxu0 %v1944
    %v4258 = vpop.f32.mrf.mxu0
    %v4259 = vadd.f32 %v4050, %v4258
    %4260 = vmatmul.f32.gmra.mxu0 %v1952
    %v4261 = vpop.f32.mrf.mxu0
    %v4262 = vadd.f32 %v4053, %v4261
    %4263 = vmatmul.f32.gmra.mxu0 %v1960
    %v4264 = vpop.f32.mrf.mxu0
    %v4265 = vadd.f32 %v4056, %v4264
    %4266 = vmatmul.f32.gmra.mxu0 %v1968
    %v4267 = vpop.f32.mrf.mxu0
    %v4268 = vadd.f32 %v4059, %v4267
    %4269 = vmatmul.f32.gmra.mxu0 %v1976
    %v4270 = vpop.f32.mrf.mxu0
    %v4271 = vadd.f32 %v4062, %v4270
    %4272 = vmatmul.f32.gmra.mxu0 %v1984
    %v4273 = vpop.f32.mrf.mxu0
    %v4274 = vadd.f32 %v4065, %v4273
    %4275 = vmatmul.f32.gmra.mxu0 %v1992
    %v4276 = vpop.f32.mrf.mxu0
    %v4277 = vadd.f32 %v4068, %v4276
    %4278 = vmatmul.f32.gmra.mxu0 %v2000
    %v4279 = vpop.f32.mrf.mxu0
    %v4280 = vadd.f32 %v4071, %v4279
    %4281 = vmatmul.f32.gmra.mxu0 %v2008
    %v4282 = vpop.f32.mrf.mxu0
    %v4283 = vadd.f32 %v4074, %v4282
    %4284 = vmatmul.f32.gmra.mxu0 %v2016
    %v4285 = vpop.f32.mrf.mxu0
    %v4286 = vadd.f32 %v4077, %v4285
    %4287 = vmatmul.f32.gmra.mxu0 %v2024
    %v4288 = vpop.f32.mrf.mxu0
    %v4289 = vadd.f32 %v4080, %v4288
    %4290 = vmatmul.f32.gmra.mxu0 %v2032
    %v4291 = vpop.f32.mrf.mxu0
    %v4292 = vadd.f32 %v4083, %v4291
    %4293 = vmatmul.f32.gmra.mxu0 %v2040
    %v4294 = vpop.f32.mrf.mxu0
    %v4295 = vadd.f32 %v4086, %v4294
    %4296 = vmatmul.f32.gmra.mxu0 %v2048
    %v4297 = vpop.f32.mrf.mxu0
    %v4298 = vadd.f32 %v4089, %v4297
    %4299 = vmatmul.f32.gmra.mxu0 %v2056
    %v4300 = vpop.f32.mrf.mxu0
    %v4301 = vadd.f32 %v4092, %v4300
    %4302 = vmatmul.f32.gmra.mxu0 %v2064
    %v4303 = vpop.f32.mrf.mxu0
    %v4304 = vadd.f32 %v4095, %v4303
    %4305 = vmatmul.f32.gmra.mxu0 %v2072
    %v4306 = vpop.f32.mrf.mxu0
    %v4307 = vadd.f32 %v4098, %v4306
    %4308 = vmatmul.f32.gmra.mxu0 %v2080
    %v4309 = vpop.f32.mrf.mxu0
    %v4310 = vadd.f32 %v4101, %v4309
    %4311 = vmatmul.f32.gmra.mxu0 %v2088
    %v4312 = vpop.f32.mrf.mxu0
    %v4313 = vadd.f32 %v4104, %v4312
    %4314 = vmatmul.f32.gmra.mxu0 %v2096
    %v4315 = vpop.f32.mrf.mxu0
    %v4316 = vadd.f32 %v4107, %v4315
    %4317 = vmatmul.f32.gmra.mxu0 %v2104
    %v4318 = vpop.f32.mrf.mxu0
    %v4319 = vadd.f32 %v4110, %v4318
    %4320 = vmatmul.f32.gmra.mxu0 %v2112
    %v4321 = vpop.f32.mrf.mxu0
    %v4322 = vadd.f32 %v4113, %v4321
    %4323 = vmatmul.f32.gmra.mxu0 %v2120
    %v4324 = vpop.f32.mrf.mxu0
    %v4325 = vadd.f32 %v4116, %v4324
    %4326 = vmatmul.f32.gmra.mxu0 %v2128
    %v4327 = vpop.f32.mrf.mxu0
    %v4328 = vadd.f32 %v4119, %v4327
    %4329 = vmatmul.f32.gmra.mxu0 %v2136
    %v4330 = vpop.f32.mrf.mxu0
    %v4331 = vadd.f32 %v4122, %v4330
    %4332 = vmatmul.f32.gmra.mxu0 %v2144
    %v4333 = vpop.f32.mrf.mxu0
    %v4334 = vadd.f32 %v4125, %v4333
    %4335 = vmatmul.f32.gmra.mxu0 %v2152
    %v4336 = vpop.f32.mrf.mxu0
    %v4337 = vadd.f32 %v4128, %v4336
    %4338 = vmatmul.f32.gmra.mxu0 %v2160
    %v4339 = vpop.f32.mrf.mxu0
    %v4340 = vadd.f32 %v4131, %v4339
    %4341 = vmatmul.f32.gmra.mxu0 %v2168
    %v4342 = vpop.f32.mrf.mxu0
    %v4343 = vadd.f32 %v4134, %v4342
    %4344 = vmatmul.f32.gmra.mxu0 %v2176
    %v4345 = vpop.f32.mrf.mxu0
    %v4346 = vadd.f32 %v4137, %v4345
    %4347 = vmatmul.f32.gmra.mxu0 %v2184
    %v4348 = vpop.f32.mrf.mxu0
    %v4349 = vadd.f32 %v4140, %v4348
    %4350 = vmatmul.f32.gmra.mxu0 %v2192
    %v4351 = vpop.f32.mrf.mxu0
    %v4352 = vadd.f32 %v4143, %v4351
    %4353 = vmatmul.f32.gmra.mxu0 %v2200
    %v4354 = vpop.f32.mrf.mxu0
    %v4355 = vadd.f32 %v4146, %v4354
    %4356 = vmatmul.f32.gmra.mxu0 %v2208
    %v4357 = vpop.f32.mrf.mxu0
    %v4358 = vadd.f32 %v4149, %v4357
    %4359 = vmatmul.f32.gmra.mxu0 %v2216
    %v4360 = vpop.f32.mrf.mxu0
    %v4361 = vadd.f32 %v4152, %v4360
    %4362 = vmatmul.f32.gmra.mxu0 %v2224
    %v4363 = vpop.f32.mrf.mxu0
    %v4364 = vadd.f32 %v4155, %v4363
    %4365 = vmatmul.f32.gmra.mxu0 %v2232
    %v4366 = vpop.f32.mrf.mxu0
    %v4367 = vadd.f32 %v4158, %v4366
    %4368 = vmatmul.f32.gmra.mxu0 %v2240
    %v4369 = vpop.f32.mrf.mxu0
    %v4370 = vadd.f32 %v4161, %v4369
    %4371 = vmatmul.f32.gmra.mxu0 %v2248
    %v4372 = vpop.f32.mrf.mxu0
    %v4373 = vadd.f32 %v4164, %v4372
    %4374 = vmatmul.f32.gmra.mxu0 %v2256
    %v4375 = vpop.f32.mrf.mxu0
    %v4376 = vadd.f32 %v4167, %v4375
    %4377 = vmatmul.f32.gmra.mxu0 %v2264
    %v4378 = vpop.f32.mrf.mxu0
    %v4379 = vadd.f32 %v4170, %v4378
    %4380 = vmatmul.f32.gmra.mxu0 %v2272
    %v4381 = vpop.f32.mrf.mxu0
    %v4382 = vadd.f32 %v4173, %v4381
    %4383 = vmatmul.f32.gmra.mxu0 %v2280
    %v4384 = vpop.f32.mrf.mxu0
    %v4385 = vadd.f32 %v4176, %v4384
    %4386 = vmatmul.f32.gmra.mxu0 %v2288
    %v4387 = vpop.f32.mrf.mxu0
    %v4388 = vadd.f32 %v4179, %v4387
    %4389 = vmatmul.f32.gmra.mxu0 %v2296
    %v4390 = vpop.f32.mrf.mxu0
    %v4391 = vadd.f32 %v4182, %v4390
    %4392 = vmatmul.f32.gmra.mxu0 %v2304
    %v4393 = vpop.f32.mrf.mxu0
    %v4394 = vadd.f32 %v4185, %v4393
    %4395 = vmatmul.f32.gmra.mxu0 %v2312
    %v4396 = vpop.f32.mrf.mxu0
    %v4397 = vadd.f32 %v4188, %v4396
    %4398 = vmatmul.f32.gmra.mxu0 %v2320
    %v4399 = vpop.f32.mrf.mxu0
    %v4400 = vadd.f32 %v4191, %v4399
    %4401 = vmatmul.f32.gmra.mxu0 %v2328
    %v4402 = vpop.f32.mrf.mxu0
    %v4403 = vadd.f32 %v4194, %v4402
    %4404 = vmatmul.f32.gmra.mxu0 %v2336
    %v4405 = vpop.f32.mrf.mxu0
    %v4406 = vadd.f32 %v4197, %v4405
    %4407 = vmatmul.f32.gmra.mxu0 %v2344
    %v4408 = vpop.f32.mrf.mxu0
    %v4409 = vadd.f32 %v4200, %v4408
    %4410 = vmatmul.f32.gmra.mxu0 %v2352
    %v4411 = vpop.f32.mrf.mxu0
    %v4412 = vadd.f32 %v4203, %v4411
    %4413 = vmatmul.f32.gmra.mxu0 %v2360
    %v4414 = vpop.f32.mrf.mxu0
    %v4415 = vadd.f32 %v4206, %v4414
    %4416 = vdwg.mxu0
    %v4417 = vmax.f32 %v4226, 0.0
    %v4418 = vmax.f32 %v4229, 0.0
    %v4419 = vmax.f32 %v4232, 0.0
    %v4420 = vmax.f32 %v4235, 0.0
    %v4421 = vmax.f32 %v4238, 0.0
    %v4422 = vmax.f32 %v4241, 0.0
    %v4423 = vmax.f32 %v4244, 0.0
    %v4424 = vmax.f32 %v4247, 0.0
    %v4425 = vmax.f32 %v4250, 0.0
    %v4426 = vmax.f32 %v4253, 0.0
    %v4427 = vmax.f32 %v4256, 0.0
    %v4428 = vmax.f32 %v4259, 0.0
    %v4429 = vmax.f32 %v4262, 0.0
    %v4430 = vmax.f32 %v4265, 0.0
    %v4431 = vmax.f32 %v4268, 0.0
    %v4432 = vmax.f32 %v4271, 0.0
    %v4433 = vmax.f32 %v4274, 0.0
    %v4434 = vmax.f32 %v4277, 0.0
    %v4435 = vmax.f32 %v4280, 0.0
    %v4436 = vmax.f32 %v4283, 0.0
    %v4437 = vmax.f32 %v4286, 0.0
    %v4438 = vmax.f32 %v4289, 0.0
    %v4439 = vmax.f32 %v4292, 0.0
    %v4440 = vmax.f32 %v4295, 0.0
    %v4441 = vmax.f32 %v4298, 0.0
    %v4442 = vmax.f32 %v4301, 0.0
    %v4443 = vmax.f32 %v4304, 0.0
    %v4444 = vmax.f32 %v4307, 0.0
    %v4445 = vmax.f32 %v4310, 0.0
    %v4446 = vmax.f32 %v4313, 0.0
    %v4447 = vmax.f32 %v4316, 0.0
    %v4448 = vmax.f32 %v4319, 0.0
    %v4449 = vmax.f32 %v4322, 0.0
    %v4450 = vmax.f32 %v4325, 0.0
    %v4451 = vmax.f32 %v4328, 0.0
    %v4452 = vmax.f32 %v4331, 0.0
    %v4453 = vmax.f32 %v4334, 0.0
    %v4454 = vmax.f32 %v4337, 0.0
    %v4455 = vmax.f32 %v4340, 0.0
    %v4456 = vmax.f32 %v4343, 0.0
    %v4457 = vmax.f32 %v4346, 0.0
    %v4458 = vmax.f32 %v4349, 0.0
    %v4459 = vmax.f32 %v4352, 0.0
    %v4460 = vmax.f32 %v4355, 0.0
    %v4461 = vmax.f32 %v4358, 0.0
    %v4462 = vmax.f32 %v4361, 0.0
    %v4463 = vmax.f32 %v4364, 0.0
    %v4464 = vmax.f32 %v4367, 0.0
    %v4465 = vmax.f32 %v4370, 0.0
    %v4466 = vmax.f32 %v4373, 0.0
    %v4467 = vmax.f32 %v4376, 0.0
    %v4468 = vmax.f32 %v4379, 0.0
    %v4469 = vmax.f32 %v4382, 0.0
    %v4470 = vmax.f32 %v4385, 0.0
    %v4471 = vmax.f32 %v4388, 0.0
    %v4472 = vmax.f32 %v4391, 0.0
    %v4473 = vmax.f32 %v4394, 0.0
    %v4474 = vmax.f32 %v4397, 0.0
    %v4475 = vmax.f32 %v4400, 0.0
    %v4476 = vmax.f32 %v4403, 0.0
    %v4477 = vmax.f32 %v4406, 0.0
    %v4478 = vmax.f32 %v4409, 0.0
    %v4479 = vmax.f32 %v4412, 0.0
    %v4480 = vmax.f32 %v4415, 0.0
    %v4481 = vld [vmem:[%s5] sm:$0xff]
    %v4482 = vld [vmem:[%s5 + $0x8] sm:$0xff]
    %v4483 = vld [vmem:[%s5 + $0x10] sm:$0xff]
    %v4484 = vld [vmem:[%s5 + $0x18] sm:$0xff]
    %v4485 = vld [vmem:[%s5 + $0x20] sm:$0xff]
    %v4486 = vld [vmem:[%s5 + $0x28] sm:$0xff]
    %v4487 = vld [vmem:[%s5 + $0x30] sm:$0xff]
    %v4488 = vld [vmem:[%s5 + $0x38] sm:$0xff]
    %v4489 = vld [vmem:[%s5 + $0x40] sm:$0xff]
    %v4490 = vld [vmem:[%s5 + $0x48] sm:$0xff]
    %v4491 = vld [vmem:[%s5 + $0x50] sm:$0xff]
    %v4492 = vld [vmem:[%s5 + $0x58] sm:$0xff]
    %v4493 = vld [vmem:[%s5 + $0x60] sm:$0xff]
    %v4494 = vld [vmem:[%s5 + $0x68] sm:$0xff]
    %v4495 = vld [vmem:[%s5 + $0x70] sm:$0xff]
    %v4496 = vld [vmem:[%s5 + $0x78] sm:$0xff]
    %v4497 = vld [vmem:[%s5 + $0x80] sm:$0xff]
    %v4498 = vld [vmem:[%s5 + $0x88] sm:$0xff]
    %v4499 = vld [vmem:[%s5 + $0x90] sm:$0xff]
    %v4500 = vld [vmem:[%s5 + $0x98] sm:$0xff]
    %v4501 = vld [vmem:[%s5 + $0xa0] sm:$0xff]
    %v4502 = vld [vmem:[%s5 + $0xa8] sm:$0xff]
    %v4503 = vld [vmem:[%s5 + $0xb0] sm:$0xff]
    %v4504 = vld [vmem:[%s5 + $0xb8] sm:$0xff]
    %v4505 = vld [vmem:[%s5 + $0xc0] sm:$0xff]
    %v4506 = vld [vmem:[%s5 + $0xc8] sm:$0xff]
    %v4507 = vld [vmem:[%s5 + $0xd0] sm:$0xff]
    %v4508 = vld [vmem:[%s5 + $0xd8] sm:$0xff]
    %v4509 = vld [vmem:[%s5 + $0xe0] sm:$0xff]
    %v4510 = vld [vmem:[%s5 + $0xe8] sm:$0xff]
    %v4511 = vld [vmem:[%s5 + $0xf0] sm:$0xff]
    %v4512 = vld [vmem:[%s5 + $0xf8] sm:$0xff]
    %v4513 = vld [vmem:[%s5 + $0x100] sm:$0xff]
    %v4514 = vld [vmem:[%s5 + $0x108] sm:$0xff]
    %v4515 = vld [vmem:[%s5 + $0x110] sm:$0xff]
    %v4516 = vld [vmem:[%s5 + $0x118] sm:$0xff]
    %v4517 = vld [vmem:[%s5 + $0x120] sm:$0xff]
    %v4518 = vld [vmem:[%s5 + $0x128] sm:$0xff]
    %v4519 = vld [vmem:[%s5 + $0x130] sm:$0xff]
    %v4520 = vld [vmem:[%s5 + $0x138] sm:$0xff]
    %v4521 = vld [vmem:[%s5 + $0x140] sm:$0xff]
    %v4522 = vld [vmem:[%s5 + $0x148] sm:$0xff]
    %v4523 = vld [vmem:[%s5 + $0x150] sm:$0xff]
    %v4524 = vld [vmem:[%s5 + $0x158] sm:$0xff]
    %v4525 = vld [vmem:[%s5 + $0x160] sm:$0xff]
    %v4526 = vld [vmem:[%s5 + $0x168] sm:$0xff]
    %v4527 = vld [vmem:[%s5 + $0x170] sm:$0xff]
    %v4528 = vld [vmem:[%s5 + $0x178] sm:$0xff]
    %v4529 = vld [vmem:[%s5 + $0x180] sm:$0xff]
    %v4530 = vld [vmem:[%s5 + $0x188] sm:$0xff]
    %v4531 = vld [vmem:[%s5 + $0x190] sm:$0xff]
    %v4532 = vld [vmem:[%s5 + $0x198] sm:$0xff]
    %v4533 = vld [vmem:[%s5 + $0x1a0] sm:$0xff]
    %v4534 = vld [vmem:[%s5 + $0x1a8] sm:$0xff]
    %v4535 = vld [vmem:[%s5 + $0x1b0] sm:$0xff]
    %v4536 = vld [vmem:[%s5 + $0x1b8] sm:$0xff]
    %v4537 = vld [vmem:[%s5 + $0x1c0] sm:$0xff]
    %v4538 = vld [vmem:[%s5 + $0x1c8] sm:$0xff]
    %v4539 = vld [vmem:[%s5 + $0x1d0] sm:$0xff]
    %v4540 = vld [vmem:[%s5 + $0x1d8] sm:$0xff]
    %v4541 = vld [vmem:[%s5 + $0x1e0] sm:$0xff]
    %v4542 = vld [vmem:[%s5 + $0x1e8] sm:$0xff]
    %v4543 = vld [vmem:[%s5 + $0x1f0] sm:$0xff]
    %v4544 = vld [vmem:[%s5 + $0x1f8] sm:$0xff]
    %v4545 = vld [vmem:[%s5 + $0x200] sm:$0xff]
    %v4546 = vld [vmem:[%s5 + $0x208] sm:$0xff]
    %v4547 = vld [vmem:[%s5 + $0x210] sm:$0xff]
    %v4548 = vld [vmem:[%s5 + $0x218] sm:$0xff]
    %v4549 = vld [vmem:[%s5 + $0x220] sm:$0xff]
    %v4550 = vld [vmem:[%s5 + $0x228] sm:$0xff]
    %v4551 = vld [vmem:[%s5 + $0x230] sm:$0xff]
    %v4552 = vld [vmem:[%s5 + $0x238] sm:$0xff]
    %v4553 = vld [vmem:[%s5 + $0x240] sm:$0xff]
    %v4554 = vld [vmem:[%s5 + $0x248] sm:$0xff]
    %v4555 = vld [vmem:[%s5 + $0x250] sm:$0xff]
    %v4556 = vld [vmem:[%s5 + $0x258] sm:$0xff]
    %v4557 = vld [vmem:[%s5 + $0x260] sm:$0xff]
    %v4558 = vld [vmem:[%s5 + $0x268] sm:$0xff]
    %v4559 = vld [vmem:[%s5 + $0x270] sm:$0xff]
    %v4560 = vld [vmem:[%s5 + $0x278] sm:$0xff]
    %v4561 = vld [vmem:[%s5 + $0x280] sm:$0xff]
    %v4562 = vld [vmem:[%s5 + $0x288] sm:$0xff]
    %v4563 = vld [vmem:[%s5 + $0x290] sm:$0xff]
    %v4564 = vld [vmem:[%s5 + $0x298] sm:$0xff]
    %v4565 = vld [vmem:[%s5 + $0x2a0] sm:$0xff]
    %v4566 = vld [vmem:[%s5 + $0x2a8] sm:$0xff]
    %v4567 = vld [vmem:[%s5 + $0x2b0] sm:$0xff]
    %v4568 = vld [vmem:[%s5 + $0x2b8] sm:$0xff]
    %v4569 = vld [vmem:[%s5 + $0x2c0] sm:$0xff]
    %v4570 = vld [vmem:[%s5 + $0x2c8] sm:$0xff]
    %v4571 = vld [vmem:[%s5 + $0x2d0] sm:$0xff]
    %v4572 = vld [vmem:[%s5 + $0x2d8] sm:$0xff]
    %v4573 = vld [vmem:[%s5 + $0x2e0] sm:$0xff]
    %v4574 = vld [vmem:[%s5 + $0x2e8] sm:$0xff]
    %v4575 = vld [vmem:[%s5 + $0x2f0] sm:$0xff]
    %v4576 = vld [vmem:[%s5 + $0x2f8] sm:$0xff]
    %v4577 = vld [vmem:[%s5 + $0x300] sm:$0xff]
    %v4578 = vld [vmem:[%s5 + $0x308] sm:$0xff]
    %v4579 = vld [vmem:[%s5 + $0x310] sm:$0xff]
    %v4580 = vld [vmem:[%s5 + $0x318] sm:$0xff]
    %v4581 = vld [vmem:[%s5 + $0x320] sm:$0xff]
    %v4582 = vld [vmem:[%s5 + $0x328] sm:$0xff]
    %v4583 = vld [vmem:[%s5 + $0x330] sm:$0xff]
    %v4584 = vld [vmem:[%s5 + $0x338] sm:$0xff]
    %v4585 = vld [vmem:[%s5 + $0x340] sm:$0xff]
    %v4586 = vld [vmem:[%s5 + $0x348] sm:$0xff]
    %v4587 = vld [vmem:[%s5 + $0x350] sm:$0xff]
    %v4588 = vld [vmem:[%s5 + $0x358] sm:$0xff]
    %v4589 = vld [vmem:[%s5 + $0x360] sm:$0xff]
    %v4590 = vld [vmem:[%s5 + $0x368] sm:$0xff]
    %v4591 = vld [vmem:[%s5 + $0x370] sm:$0xff]
    %v4592 = vld [vmem:[%s5 + $0x378] sm:$0xff]
    %v4593 = vld [vmem:[%s5 + $0x380] sm:$0xff]
    %v4594 = vld [vmem:[%s5 + $0x388] sm:$0xff]
    %v4595 = vld [vmem:[%s5 + $0x390] sm:$0xff]
    %v4596 = vld [vmem:[%s5 + $0x398] sm:$0xff]
    %v4597 = vld [vmem:[%s5 + $0x3a0] sm:$0xff]
    %v4598 = vld [vmem:[%s5 + $0x3a8] sm:$0xff]
    %v4599 = vld [vmem:[%s5 + $0x3b0] sm:$0xff]
    %v4600 = vld [vmem:[%s5 + $0x3b8] sm:$0xff]
    %v4601 = vld [vmem:[%s5 + $0x3c0] sm:$0xff]
    %v4602 = vld [vmem:[%s5 + $0x3c8] sm:$0xff]
    %v4603 = vld [vmem:[%s5 + $0x3d0] sm:$0xff]
    %v4604 = vld [vmem:[%s5 + $0x3d8] sm:$0xff]
    %v4605 = vld [vmem:[%s5 + $0x3e0] sm:$0xff]
    %v4606 = vld [vmem:[%s5 + $0x3e8] sm:$0xff]
    %v4607 = vld [vmem:[%s5 + $0x3f0] sm:$0xff]
    %v4608 = vld [vmem:[%s5 + $0x3f8] sm:$0xff]
    %v4609 = vld [vmem:[%s6] sm:$0xff]
    %v4610 = vld [vmem:[%s6 + $0x8] sm:$0xff]
    %v4611 = vld [vmem:[%s6 + $0x10] sm:$0xff]
    %v4612 = vld [vmem:[%s6 + $0x18] sm:$0xff]
    %v4613 = vld [vmem:[%s6 + $0x20] sm:$0xff]
    %v4614 = vld [vmem:[%s6 + $0x28] sm:$0xff]
    %v4615 = vld [vmem:[%s6 + $0x30] sm:$0xff]
    %v4616 = vld [vmem:[%s6 + $0x38] sm:$0xff]
    %v4617 = vld [vmem:[%s6 + $0x40] sm:$0xff]
    %v4618 = vld [vmem:[%s6 + $0x48] sm:$0xff]
    %v4619 = vld [vmem:[%s6 + $0x50] sm:$0xff]
    %v4620 = vld [vmem:[%s6 + $0x58] sm:$0xff]
    %v4621 = vld [vmem:[%s6 + $0x60] sm:$0xff]
    %v4622 = vld [vmem:[%s6 + $0x68] sm:$0xff]
    %v4623 = vld [vmem:[%s6 + $0x70] sm:$0xff]
    %v4624 = vld [vmem:[%s6 + $0x78] sm:$0xff]
    %v4625 = vld [vmem:[%s6 + $0x80] sm:$0xff]
    %v4626 = vld [vmem:[%s6 + $0x88] sm:$0xff]
    %v4627 = vld [vmem:[%s6 + $0x90] sm:$0xff]
    %v4628 = vld [vmem:[%s6 + $0x98] sm:$0xff]
    %v4629 = vld [vmem:[%s6 + $0xa0] sm:$0xff]
    %v4630 = vld [vmem:[%s6 + $0xa8] sm:$0xff]
    %v4631 = vld [vmem:[%s6 + $0xb0] sm:$0xff]
    %v4632 = vld [vmem:[%s6 + $0xb8] sm:$0xff]
    %v4633 = vld [vmem:[%s6 + $0xc0] sm:$0xff]
    %v4634 = vld [vmem:[%s6 + $0xc8] sm:$0xff]
    %v4635 = vld [vmem:[%s6 + $0xd0] sm:$0xff]
    %v4636 = vld [vmem:[%s6 + $0xd8] sm:$0xff]
    %v4637 = vld [vmem:[%s6 + $0xe0] sm:$0xff]
    %v4638 = vld [vmem:[%s6 + $0xe8] sm:$0xff]
    %v4639 = vld [vmem:[%s6 + $0xf0] sm:$0xff]
    %v4640 = vld [vmem:[%s6 + $0xf8] sm:$0xff]
    %4642 = vset.pattern.permute.xlu0 0
    %4643 = vperm.xlu0 %4642, %v4609
    %v4644 = vpop.permute.xlu0 %4643
    %4647 = vset.pattern.permute.xlu0 0
    %4648 = vperm.xlu0 %4647, %v4610
    %v4649 = vpop.permute.xlu0 %4648
    %4652 = vset.pattern.permute.xlu0 0
    %4653 = vperm.xlu0 %4652, %v4611
    %v4654 = vpop.permute.xlu0 %4653
    %4657 = vset.pattern.permute.xlu0 0
    %4658 = vperm.xlu0 %4657, %v4612
    %v4659 = vpop.permute.xlu0 %4658
    %4662 = vset.pattern.permute.xlu0 0
    %4663 = vperm.xlu0 %4662, %v4613
    %v4664 = vpop.permute.xlu0 %4663
    %4667 = vset.pattern.permute.xlu0 0
    %4668 = vperm.xlu0 %4667, %v4614
    %v4669 = vpop.permute.xlu0 %4668
    %4672 = vset.pattern.permute.xlu0 0
    %4673 = vperm.xlu0 %4672, %v4615
    %v4674 = vpop.permute.xlu0 %4673
    %4677 = vset.pattern.permute.xlu0 0
    %4678 = vperm.xlu0 %4677, %v4616
    %v4679 = vpop.permute.xlu0 %4678
    %4682 = vset.pattern.permute.xlu0 0
    %4683 = vperm.xlu0 %4682, %v4617
    %v4684 = vpop.permute.xlu0 %4683
    %4687 = vset.pattern.permute.xlu0 0
    %4688 = vperm.xlu0 %4687, %v4618
    %v4689 = vpop.permute.xlu0 %4688
    %4692 = vset.pattern.permute.xlu0 0
    %4693 = vperm.xlu0 %4692, %v4619
    %v4694 = vpop.permute.xlu0 %4693
    %4697 = vset.pattern.permute.xlu0 0
    %4698 = vperm.xlu0 %4697, %v4620
    %v4699 = vpop.permute.xlu0 %4698
    %4702 = vset.pattern.permute.xlu0 0
    %4703 = vperm.xlu0 %4702, %v4621
    %v4704 = vpop.permute.xlu0 %4703
    %4707 = vset.pattern.permute.xlu0 0
    %4708 = vperm.xlu0 %4707, %v4622
    %v4709 = vpop.permute.xlu0 %4708
    %4712 = vset.pattern.permute.xlu0 0
    %4713 = vperm.xlu0 %4712, %v4623
    %v4714 = vpop.permute.xlu0 %4713
    %4717 = vset.pattern.permute.xlu0 0
    %4718 = vperm.xlu0 %4717, %v4624
    %v4719 = vpop.permute.xlu0 %4718
    %4722 = vset.pattern.permute.xlu0 0
    %4723 = vperm.xlu0 %4722, %v4625
    %v4724 = vpop.permute.xlu0 %4723
    %4727 = vset.pattern.permute.xlu0 0
    %4728 = vperm.xlu0 %4727, %v4626
    %v4729 = vpop.permute.xlu0 %4728
    %4732 = vset.pattern.permute.xlu0 0
    %4733 = vperm.xlu0 %4732, %v4627
    %v4734 = vpop.permute.xlu0 %4733
    %4737 = vset.pattern.permute.xlu0 0
    %4738 = vperm.xlu0 %4737, %v4628
    %v4739 = vpop.permute.xlu0 %4738
    %4742 = vset.pattern.permute.xlu0 0
    %4743 = vperm.xlu0 %4742, %v4629
    %v4744 = vpop.permute.xlu0 %4743
    %4747 = vset.pattern.permute.xlu0 0
    %4748 = vperm.xlu0 %4747, %v4630
    %v4749 = vpop.permute.xlu0 %4748
    %4752 = vset.pattern.permute.xlu0 0
    %4753 = vperm.xlu0 %4752, %v4631
    %v4754 = vpop.permute.xlu0 %4753
    %4757 = vset.pattern.permute.xlu0 0
    %4758 = vperm.xlu0 %4757, %v4632
    %v4759 = vpop.permute.xlu0 %4758
    %4762 = vset.pattern.permute.xlu0 0
    %4763 = vperm.xlu0 %4762, %v4633
    %v4764 = vpop.permute.xlu0 %4763
    %4767 = vset.pattern.permute.xlu0 0
    %4768 = vperm.xlu0 %4767, %v4634
    %v4769 = vpop.permute.xlu0 %4768
    %4772 = vset.pattern.permute.xlu0 0
    %4773 = vperm.xlu0 %4772, %v4635
    %v4774 = vpop.permute.xlu0 %4773
    %4777 = vset.pattern.permute.xlu0 0
    %4778 = vperm.xlu0 %4777, %v4636
    %v4779 = vpop.permute.xlu0 %4778
    %4782 = vset.pattern.permute.xlu0 0
    %4783 = vperm.xlu0 %4782, %v4637
    %v4784 = vpop.permute.xlu0 %4783
    %4787 = vset.pattern.permute.xlu0 0
    %4788 = vperm.xlu0 %4787, %v4638
    %v4789 = vpop.permute.xlu0 %4788
    %4792 = vset.pattern.permute.xlu0 0
    %4793 = vperm.xlu0 %4792, %v4639
    %v4794 = vpop.permute.xlu0 %4793
    %4797 = vset.pattern.permute.xlu0 0
    %4798 = vperm.xlu0 %4797, %v4640
    %v4799 = vpop.permute.xlu0 %4798
    %4801 = vmatpush.msra.mxu0 %v4432
    %4802 = vmatpush.msra.mxu0 %v4431
    %4803 = vmatpush.msra.mxu0 %v4430
    %4804 = vmatpush.msra.mxu0 %v4429
    %4805 = vmatpush.msra.mxu0 %v4428
    %4806 = vmatpush.msra.mxu0 %v4427
    %4807 = vmatpush.msra.mxu0 %v4426
    %4808 = vmatpush.msra.mxu0 %v4425
    %4809 = vmatpush.msra.mxu0 %v4424
    %4810 = vmatpush.msra.mxu0 %v4423
    %4811 = vmatpush.msra.mxu0 %v4422
    %4812 = vmatpush.msra.mxu0 %v4421
    %4813 = vmatpush.msra.mxu0 %v4420
    %4814 = vmatpush.msra.mxu0 %v4419
    %4815 = vmatpush.msra.mxu0 %v4418
    %4816 = vmatpush.msra.mxu0 %v4417
    %4817 = vmatmul.f32.gmra.mxu0 %v4481
    %v4818 = vpop.f32.mrf.mxu0
    %v4819 = vadd.f32 %v4644, %v4818
    %4820 = vmatmul.f32.gmra.mxu0 %v4485
    %v4821 = vpop.f32.mrf.mxu0
    %v4822 = vadd.f32 %v4649, %v4821
    %4823 = vmatmul.f32.gmra.mxu0 %v4489
    %v4824 = vpop.f32.mrf.mxu0
    %v4825 = vadd.f32 %v4654, %v4824
    %4826 = vmatmul.f32.gmra.mxu0 %v4493
    %v4827 = vpop.f32.mrf.mxu0
    %v4828 = vadd.f32 %v4659, %v4827
    %4829 = vmatmul.f32.gmra.mxu0 %v4497
    %v4830 = vpop.f32.mrf.mxu0
    %v4831 = vadd.f32 %v4664, %v4830
    %4832 = vmatmul.f32.gmra.mxu0 %v4501
    %v4833 = vpop.f32.mrf.mxu0
    %v4834 = vadd.f32 %v4669, %v4833
    %4835 = vmatmul.f32.gmra.mxu0 %v4505
    %v4836 = vpop.f32.mrf.mxu0
    %v4837 = vadd.f32 %v4674, %v4836
    %4838 = vmatmul.f32.gmra.mxu0 %v4509
    %v4839 = vpop.f32.mrf.mxu0
    %v4840 = vadd.f32 %v4679, %v4839
    %4841 = vmatmul.f32.gmra.mxu0 %v4513
    %v4842 = vpop.f32.mrf.mxu0
    %v4843 = vadd.f32 %v4684, %v4842
    %4844 = vmatmul.f32.gmra.mxu0 %v4517
    %v4845 = vpop.f32.mrf.mxu0
    %v4846 = vadd.f32 %v4689, %v4845
    %4847 = vmatmul.f32.gmra.mxu0 %v4521
    %v4848 = vpop.f32.mrf.mxu0
    %v4849 = vadd.f32 %v4694, %v4848
    %4850 = vmatmul.f32.gmra.mxu0 %v4525
    %v4851 = vpop.f32.mrf.mxu0
    %v4852 = vadd.f32 %v4699, %v4851
    %4853 = vmatmul.f32.gmra.mxu0 %v4529
    %v4854 = vpop.f32.mrf.mxu0
    %v4855 = vadd.f32 %v4704, %v4854
    %4856 = vmatmul.f32.gmra.mxu0 %v4533
    %v4857 = vpop.f32.mrf.mxu0
    %v4858 = vadd.f32 %v4709, %v4857
    %4859 = vmatmul.f32.gmra.mxu0 %v4537
    %v4860 = vpop.f32.mrf.mxu0
    %v4861 = vadd.f32 %v4714, %v4860
    %4862 = vmatmul.f32.gmra.mxu0 %v4541
    %v4863 = vpop.f32.mrf.mxu0
    %v4864 = vadd.f32 %v4719, %v4863
    %4865 = vmatmul.f32.gmra.mxu0 %v4545
    %v4866 = vpop.f32.mrf.mxu0
    %v4867 = vadd.f32 %v4724, %v4866
    %4868 = vmatmul.f32.gmra.mxu0 %v4549
    %v4869 = vpop.f32.mrf.mxu0
    %v4870 = vadd.f32 %v4729, %v4869
    %4871 = vmatmul.f32.gmra.mxu0 %v4553
    %v4872 = vpop.f32.mrf.mxu0
    %v4873 = vadd.f32 %v4734, %v4872
    %4874 = vmatmul.f32.gmra.mxu0 %v4557
    %v4875 = vpop.f32.mrf.mxu0
    %v4876 = vadd.f32 %v4739, %v4875
    %4877 = vmatmul.f32.gmra.mxu0 %v4561
    %v4878 = vpop.f32.mrf.mxu0
    %v4879 = vadd.f32 %v4744, %v4878
    %4880 = vmatmul.f32.gmra.mxu0 %v4565
    %v4881 = vpop.f32.mrf.mxu0
    %v4882 = vadd.f32 %v4749, %v4881
    %4883 = vmatmul.f32.gmra.mxu0 %v4569
    %v4884 = vpop.f32.mrf.mxu0
    %v4885 = vadd.f32 %v4754, %v4884
    %4886 = vmatmul.f32.gmra.mxu0 %v4573
    %v4887 = vpop.f32.mrf.mxu0
    %v4888 = vadd.f32 %v4759, %v4887
    %4889 = vmatmul.f32.gmra.mxu0 %v4577
    %v4890 = vpop.f32.mrf.mxu0
    %v4891 = vadd.f32 %v4764, %v4890
    %4892 = vmatmul.f32.gmra.mxu0 %v4581
    %v4893 = vpop.f32.mrf.mxu0
    %v4894 = vadd.f32 %v4769, %v4893
    %4895 = vmatmul.f32.gmra.mxu0 %v4585
    %v4896 = vpop.f32.mrf.mxu0
    %v4897 = vadd.f32 %v4774, %v4896
    %4898 = vmatmul.f32.gmra.mxu0 %v4589
    %v4899 = vpop.f32.mrf.mxu0
    %v4900 = vadd.f32 %v4779, %v4899
    %4901 = vmatmul.f32.gmra.mxu0 %v4593
    %v4902 = vpop.f32.mrf.mxu0
    %v4903 = vadd.f32 %v4784, %v4902
    %4904 = vmatmul.f32.gmra.mxu0 %v4597
    %v4905 = vpop.f32.mrf.mxu0
    %v4906 = vadd.f32 %v4789, %v4905
    %4907 = vmatmul.f32.gmra.mxu0 %v4601
    %v4908 = vpop.f32.mrf.mxu0
    %v4909 = vadd.f32 %v4794, %v4908
    %4910 = vmatmul.f32.gmra.mxu0 %v4605
    %v4911 = vpop.f32.mrf.mxu0
    %v4912 = vadd.f32 %v4799, %v4911
    %4913 = vdwg.mxu0
    %4914 = vmatpush.msra.mxu0 %v4448
    %4915 = vmatpush.msra.mxu0 %v4447
    %4916 = vmatpush.msra.mxu0 %v4446
    %4917 = vmatpush.msra.mxu0 %v4445
    %4918 = vmatpush.msra.mxu0 %v4444
    %4919 = vmatpush.msra.mxu0 %v4443
    %4920 = vmatpush.msra.mxu0 %v4442
    %4921 = vmatpush.msra.mxu0 %v4441
    %4922 = vmatpush.msra.mxu0 %v4440
    %4923 = vmatpush.msra.mxu0 %v4439
    %4924 = vmatpush.msra.mxu0 %v4438
    %4925 = vmatpush.msra.mxu0 %v4437
    %4926 = vmatpush.msra.mxu0 %v4436
    %4927 = vmatpush.msra.mxu0 %v4435
    %4928 = vmatpush.msra.mxu0 %v4434
    %4929 = vmatpush.msra.mxu0 %v4433
    %4930 = vmatmul.f32.gmra.mxu0 %v4482
    %v4931 = vpop.f32.mrf.mxu0
    %v4932 = vadd.f32 %v4819, %v4931
    %4933 = vmatmul.f32.gmra.mxu0 %v4486
    %v4934 = vpop.f32.mrf.mxu0
    %v4935 = vadd.f32 %v4822, %v4934
    %4936 = vmatmul.f32.gmra.mxu0 %v4490
    %v4937 = vpop.f32.mrf.mxu0
    %v4938 = vadd.f32 %v4825, %v4937
    %4939 = vmatmul.f32.gmra.mxu0 %v4494
    %v4940 = vpop.f32.mrf.mxu0
    %v4941 = vadd.f32 %v4828, %v4940
    %4942 = vmatmul.f32.gmra.mxu0 %v4498
    %v4943 = vpop.f32.mrf.mxu0
    %v4944 = vadd.f32 %v4831, %v4943
    %4945 = vmatmul.f32.gmra.mxu0 %v4502
    %v4946 = vpop.f32.mrf.mxu0
    %v4947 = vadd.f32 %v4834, %v4946
    %4948 = vmatmul.f32.gmra.mxu0 %v4506
    %v4949 = vpop.f32.mrf.mxu0
    %v4950 = vadd.f32 %v4837, %v4949
    %4951 = vmatmul.f32.gmra.mxu0 %v4510
    %v4952 = vpop.f32.mrf.mxu0
    %v4953 = vadd.f32 %v4840, %v4952
    %4954 = vmatmul.f32.gmra.mxu0 %v4514
    %v4955 = vpop.f32.mrf.mxu0
    %v4956 = vadd.f32 %v4843, %v4955
    %4957 = vmatmul.f32.gmra.mxu0 %v4518
    %v4958 = vpop.f32.mrf.mxu0
    %v4959 = vadd.f32 %v4846, %v4958
    %4960 = vmatmul.f32.gmra.mxu0 %v4522
    %v4961 = vpop.f32.mrf.mxu0
    %v4962 = vadd.f32 %v4849, %v4961
    %4963 = vmatmul.f32.gmra.mxu0 %v4526
    %v4964 = vpop.f32.mrf.mxu0
    %v4965 = vadd.f32 %v4852, %v4964
    %4966 = vmatmul.f32.gmra.mxu0 %v4530
    %v4967 = vpop.f32.mrf.mxu0
    %v4968 = vadd.f32 %v4855, %v4967
    %4969 = vmatmul.f32.gmra.mxu0 %v4534
    %v4970 = vpop.f32.mrf.mxu0
    %v4971 = vadd.f32 %v4858, %v4970
    %4972 = vmatmul.f32.gmra.mxu0 %v4538
    %v4973 = vpop.f32.mrf.mxu0
    %v4974 = vadd.f32 %v4861, %v4973
    %4975 = vmatmul.f32.gmra.mxu0 %v4542
    %v4976 = vpop.f32.mrf.mxu0
    %v4977 = vadd.f32 %v4864, %v4976
    %4978 = vmatmul.f32.gmra.mxu0 %v4546
    %v4979 = vpop.f32.mrf.mxu0
    %v4980 = vadd.f32 %v4867, %v4979
    %4981 = vmatmul.f32.gmra.mxu0 %v4550
    %v4982 = vpop.f32.mrf.mxu0
    %v4983 = vadd.f32 %v4870, %v4982
    %4984 = vmatmul.f32.gmra.mxu0 %v4554
    %v4985 = vpop.f32.mrf.mxu0
    %v4986 = vadd.f32 %v4873, %v4985
    %4987 = vmatmul.f32.gmra.mxu0 %v4558
    %v4988 = vpop.f32.mrf.mxu0
    %v4989 = vadd.f32 %v4876, %v4988
    %4990 = vmatmul.f32.gmra.mxu0 %v4562
    %v4991 = vpop.f32.mrf.mxu0
    %v4992 = vadd.f32 %v4879, %v4991
    %4993 = vmatmul.f32.gmra.mxu0 %v4566
    %v4994 = vpop.f32.mrf.mxu0
    %v4995 = vadd.f32 %v4882, %v4994
    %4996 = vmatmul.f32.gmra.mxu0 %v4570
    %v4997 = vpop.f32.mrf.mxu0
    %v4998 = vadd.f32 %v4885, %v4997
    %4999 = vmatmul.f32.gmra.mxu0 %v4574
    %v5000 = vpop.f32.mrf.mxu0
    %v5001 = vadd.f32 %v4888, %v5000
    %5002 = vmatmul.f32.gmra.mxu0 %v4578
    %v5003 = vpop.f32.mrf.mxu0
    %v5004 = vadd.f32 %v4891, %v5003
    %5005 = vmatmul.f32.gmra.mxu0 %v4582
    %v5006 = vpop.f32.mrf.mxu0
    %v5007 = vadd.f32 %v4894, %v5006
    %5008 = vmatmul.f32.gmra.mxu0 %v4586
    %v5009 = vpop.f32.mrf.mxu0
    %v5010 = vadd.f32 %v4897, %v5009
    %5011 = vmatmul.f32.gmra.mxu0 %v4590
    %v5012 = vpop.f32.mrf.mxu0
    %v5013 = vadd.f32 %v4900, %v5012
    %5014 = vmatmul.f32.gmra.mxu0 %v4594
    %v5015 = vpop.f32.mrf.mxu0
    %v5016 = vadd.f32 %v4903, %v5015
    %5017 = vmatmul.f32.gmra.mxu0 %v4598
    %v5018 = vpop.f32.mrf.mxu0
    %v5019 = vadd.f32 %v4906, %v5018
    %5020 = vmatmul.f32.gmra.mxu0 %v4602
    %v5021 = vpop.f32.mrf.mxu0
    %v5022 = vadd.f32 %v4909, %v5021
    %5023 = vmatmul.f32.gmra.mxu0 %v4606
    %v5024 = vpop.f32.mrf.mxu0
    %v5025 = vadd.f32 %v4912, %v5024
    %5026 = vdwg.mxu0
    %5027 = vmatpush.msra.mxu0 %v4464
    %5028 = vmatpush.msra.mxu0 %v4463
    %5029 = vmatpush.msra.mxu0 %v4462
    %5030 = vmatpush.msra.mxu0 %v4461
    %5031 = vmatpush.msra.mxu0 %v4460
    %5032 = vmatpush.msra.mxu0 %v4459
    %5033 = vmatpush.msra.mxu0 %v4458
    %5034 = vmatpush.msra.mxu0 %v4457
    %5035 = vmatpush.msra.mxu0 %v4456
    %5036 = vmatpush.msra.mxu0 %v4455
    %5037 = vmatpush.msra.mxu0 %v4454
    %5038 = vmatpush.msra.mxu0 %v4453
    %5039 = vmatpush.msra.mxu0 %v4452
    %5040 = vmatpush.msra.mxu0 %v4451
    %5041 = vmatpush.msra.mxu0 %v4450
    %5042 = vmatpush.msra.mxu0 %v4449
    %5043 = vmatmul.f32.gmra.mxu0 %v4483
    %v5044 = vpop.f32.mrf.mxu0
    %v5045 = vadd.f32 %v4932, %v5044
    %5046 = vmatmul.f32.gmra.mxu0 %v4487
    %v5047 = vpop.f32.mrf.mxu0
    %v5048 = vadd.f32 %v4935, %v5047
    %5049 = vmatmul.f32.gmra.mxu0 %v4491
    %v5050 = vpop.f32.mrf.mxu0
    %v5051 = vadd.f32 %v4938, %v5050
    %5052 = vmatmul.f32.gmra.mxu0 %v4495
    %v5053 = vpop.f32.mrf.mxu0
    %v5054 = vadd.f32 %v4941, %v5053
    %5055 = vmatmul.f32.gmra.mxu0 %v4499
    %v5056 = vpop.f32.mrf.mxu0
    %v5057 = vadd.f32 %v4944, %v5056
    %5058 = vmatmul.f32.gmra.mxu0 %v4503
    %v5059 = vpop.f32.mrf.mxu0
    %v5060 = vadd.f32 %v4947, %v5059
    %5061 = vmatmul.f32.gmra.mxu0 %v4507
    %v5062 = vpop.f32.mrf.mxu0
    %v5063 = vadd.f32 %v4950, %v5062
    %5064 = vmatmul.f32.gmra.mxu0 %v4511
    %v5065 = vpop.f32.mrf.mxu0
    %v5066 = vadd.f32 %v4953, %v5065
    %5067 = vmatmul.f32.gmra.mxu0 %v4515
    %v5068 = vpop.f32.mrf.mxu0
    %v5069 = vadd.f32 %v4956, %v5068
    %5070 = vmatmul.f32.gmra.mxu0 %v4519
    %v5071 = vpop.f32.mrf.mxu0
    %v5072 = vadd.f32 %v4959, %v5071
    %5073 = vmatmul.f32.gmra.mxu0 %v4523
    %v5074 = vpop.f32.mrf.mxu0
    %v5075 = vadd.f32 %v4962, %v5074
    %5076 = vmatmul.f32.gmra.mxu0 %v4527
    %v5077 = vpop.f32.mrf.mxu0
    %v5078 = vadd.f32 %v4965, %v5077
    %5079 = vmatmul.f32.gmra.mxu0 %v4531
    %v5080 = vpop.f32.mrf.mxu0
    %v5081 = vadd.f32 %v4968, %v5080
    %5082 = vmatmul.f32.gmra.mxu0 %v4535
    %v5083 = vpop.f32.mrf.mxu0
    %v5084 = vadd.f32 %v4971, %v5083
    %5085 = vmatmul.f32.gmra.mxu0 %v4539
    %v5086 = vpop.f32.mrf.mxu0
    %v5087 = vadd.f32 %v4974, %v5086
    %5088 = vmatmul.f32.gmra.mxu0 %v4543
    %v5089 = vpop.f32.mrf.mxu0
    %v5090 = vadd.f32 %v4977, %v5089
    %5091 = vmatmul.f32.gmra.mxu0 %v4547
    %v5092 = vpop.f32.mrf.mxu0
    %v5093 = vadd.f32 %v4980, %v5092
    %5094 = vmatmul.f32.gmra.mxu0 %v4551
    %v5095 = vpop.f32.mrf.mxu0
    %v5096 = vadd.f32 %v4983, %v5095
    %5097 = vmatmul.f32.gmra.mxu0 %v4555
    %v5098 = vpop.f32.mrf.mxu0
    %v5099 = vadd.f32 %v4986, %v5098
    %5100 = vmatmul.f32.gmra.mxu0 %v4559
    %v5101 = vpop.f32.mrf.mxu0
    %v5102 = vadd.f32 %v4989, %v5101
    %5103 = vmatmul.f32.gmra.mxu0 %v4563
    %v5104 = vpop.f32.mrf.mxu0
    %v5105 = vadd.f32 %v4992, %v5104
    %5106 = vmatmul.f32.gmra.mxu0 %v4567
    %v5107 = vpop.f32.mrf.mxu0
    %v5108 = vadd.f32 %v4995, %v5107
    %5109 = vmatmul.f32.gmra.mxu0 %v4571
    %v5110 = vpop.f32.mrf.mxu0
    %v5111 = vadd.f32 %v4998, %v5110
    %5112 = vmatmul.f32.gmra.mxu0 %v4575
    %v5113 = vpop.f32.mrf.mxu0
    %v5114 = vadd.f32 %v5001, %v5113
    %5115 = vmatmul.f32.gmra.mxu0 %v4579
    %v5116 = vpop.f32.mrf.mxu0
    %v5117 = vadd.f32 %v5004, %v5116
    %5118 = vmatmul.f32.gmra.mxu0 %v4583
    %v5119 = vpop.f32.mrf.mxu0
    %v5120 = vadd.f32 %v5007, %v5119
    %5121 = vmatmul.f32.gmra.mxu0 %v4587
    %v5122 = vpop.f32.mrf.mxu0
    %v5123 = vadd.f32 %v5010, %v5122
    %5124 = vmatmul.f32.gmra.mxu0 %v4591
    %v5125 = vpop.f32.mrf.mxu0
    %v5126 = vadd.f32 %v5013, %v5125
    %5127 = vmatmul.f32.gmra.mxu0 %v4595
    %v5128 = vpop.f32.mrf.mxu0
    %v5129 = vadd.f32 %v5016, %v5128
    %5130 = vmatmul.f32.gmra.mxu0 %v4599
    %v5131 = vpop.f32.mrf.mxu0
    %v5132 = vadd.f32 %v5019, %v5131
    %5133 = vmatmul.f32.gmra.mxu0 %v4603
    %v5134 = vpop.f32.mrf.mxu0
    %v5135 = vadd.f32 %v5022, %v5134
    %5136 = vmatmul.f32.gmra.mxu0 %v4607
    %v5137 = vpop.f32.mrf.mxu0
    %v5138 = vadd.f32 %v5025, %v5137
    %5139 = vdwg.mxu0
    %5140 = vmatpush.msra.mxu0 %v4480
    %5141 = vmatpush.msra.mxu0 %v4479
    %5142 = vmatpush.msra.mxu0 %v4478
    %5143 = vmatpush.msra.mxu0 %v4477
    %5144 = vmatpush.msra.mxu0 %v4476
    %5145 = vmatpush.msra.mxu0 %v4475
    %5146 = vmatpush.msra.mxu0 %v4474
    %5147 = vmatpush.msra.mxu0 %v4473
    %5148 = vmatpush.msra.mxu0 %v4472
    %5149 = vmatpush.msra.mxu0 %v4471
    %5150 = vmatpush.msra.mxu0 %v4470
    %5151 = vmatpush.msra.mxu0 %v4469
    %5152 = vmatpush.msra.mxu0 %v4468
    %5153 = vmatpush.msra.mxu0 %v4467
    %5154 = vmatpush.msra.mxu0 %v4466
    %5155 = vmatpush.msra.mxu0 %v4465
    %5156 = vmatmul.f32.gmra.mxu0 %v4484
    %v5157 = vpop.f32.mrf.mxu0
    %v5158 = vadd.f32 %v5045, %v5157
    %5159 = vmatmul.f32.gmra.mxu0 %v4488
    %v5160 = vpop.f32.mrf.mxu0
    %v5161 = vadd.f32 %v5048, %v5160
    %5162 = vmatmul.f32.gmra.mxu0 %v4492
    %v5163 = vpop.f32.mrf.mxu0
    %v5164 = vadd.f32 %v5051, %v5163
    %5165 = vmatmul.f32.gmra.mxu0 %v4496
    %v5166 = vpop.f32.mrf.mxu0
    %v5167 = vadd.f32 %v5054, %v5166
    %5168 = vmatmul.f32.gmra.mxu0 %v4500
    %v5169 = vpop.f32.mrf.mxu0
    %v5170 = vadd.f32 %v5057, %v5169
    %5171 = vmatmul.f32.gmra.mxu0 %v4504
    %v5172 = vpop.f32.mrf.mxu0
    %v5173 = vadd.f32 %v5060, %v5172
    %5174 = vmatmul.f32.gmra.mxu0 %v4508
    %v5175 = vpop.f32.mrf.mxu0
    %v5176 = vadd.f32 %v5063, %v5175
    %5177 = vmatmul.f32.gmra.mxu0 %v4512
    %v5178 = vpop.f32.mrf.mxu0
    %v5179 = vadd.f32 %v5066, %v5178
    %5180 = vmatmul.f32.gmra.mxu0 %v4516
    %v5181 = vpop.f32.mrf.mxu0
    %v5182 = vadd.f32 %v5069, %v5181
    %5183 = vmatmul.f32.gmra.mxu0 %v4520
    %v5184 = vpop.f32.mrf.mxu0
    %v5185 = vadd.f32 %v5072, %v5184
    %5186 = vmatmul.f32.gmra.mxu0 %v4524
    %v5187 = vpop.f32.mrf.mxu0
    %v5188 = vadd.f32 %v5075, %v5187
    %5189 = vmatmul.f32.gmra.mxu0 %v4528
    %v5190 = vpop.f32.mrf.mxu0
    %v5191 = vadd.f32 %v5078, %v5190
    %5192 = vmatmul.f32.gmra.mxu0 %v4532
    %v5193 = vpop.f32.mrf.mxu0
    %v5194 = vadd.f32 %v5081, %v5193
    %5195 = vmatmul.f32.gmra.mxu0 %v4536
    %v5196 = vpop.f32.mrf.mxu0
    %v5197 = vadd.f32 %v5084, %v5196
    %5198 = vmatmul.f32.gmra.mxu0 %v4540
    %v5199 = vpop.f32.mrf.mxu0
    %v5200 = vadd.f32 %v5087, %v5199
    %5201 = vmatmul.f32.gmra.mxu0 %v4544
    %v5202 = vpop.f32.mrf.mxu0
    %v5203 = vadd.f32 %v5090, %v5202
    %5204 = vmatmul.f32.gmra.mxu0 %v4548
    %v5205 = vpop.f32.mrf.mxu0
    %v5206 = vadd.f32 %v5093, %v5205
    %5207 = vmatmul.f32.gmra.mxu0 %v4552
    %v5208 = vpop.f32.mrf.mxu0
    %v5209 = vadd.f32 %v5096, %v5208
    %5210 = vmatmul.f32.gmra.mxu0 %v4556
    %v5211 = vpop.f32.mrf.mxu0
    %v5212 = vadd.f32 %v5099, %v5211
    %5213 = vmatmul.f32.gmra.mxu0 %v4560
    %v5214 = vpop.f32.mrf.mxu0
    %v5215 = vadd.f32 %v5102, %v5214
    %5216 = vmatmul.f32.gmra.mxu0 %v4564
    %v5217 = vpop.f32.mrf.mxu0
    %v5218 = vadd.f32 %v5105, %v5217
    %5219 = vmatmul.f32.gmra.mxu0 %v4568
    %v5220 = vpop.f32.mrf.mxu0
    %v5221 = vadd.f32 %v5108, %v5220
    %5222 = vmatmul.f32.gmra.mxu0 %v4572
    %v5223 = vpop.f32.mrf.mxu0
    %v5224 = vadd.f32 %v5111, %v5223
    %5225 = vmatmul.f32.gmra.mxu0 %v4576
    %v5226 = vpop.f32.mrf.mxu0
    %v5227 = vadd.f32 %v5114, %v5226
    %5228 = vmatmul.f32.gmra.mxu0 %v4580
    %v5229 = vpop.f32.mrf.mxu0
    %v5230 = vadd.f32 %v5117, %v5229
    %5231 = vmatmul.f32.gmra.mxu0 %v4584
    %v5232 = vpop.f32.mrf.mxu0
    %v5233 = vadd.f32 %v5120, %v5232
    %5234 = vmatmul.f32.gmra.mxu0 %v4588
    %v5235 = vpop.f32.mrf.mxu0
    %v5236 = vadd.f32 %v5123, %v5235
    %5237 = vmatmul.f32.gmra.mxu0 %v4592
    %v5238 = vpop.f32.mrf.mxu0
    %v5239 = vadd.f32 %v5126, %v5238
    %5240 = vmatmul.f32.gmra.mxu0 %v4596
    %v5241 = vpop.f32.mrf.mxu0
    %v5242 = vadd.f32 %v5129, %v5241
    %5243 = vmatmul.f32.gmra.mxu0 %v4600
    %v5244 = vpop.f32.mrf.mxu0
    %v5245 = vadd.f32 %v5132, %v5244
    %5246 = vmatmul.f32.gmra.mxu0 %v4604
    %v5247 = vpop.f32.mrf.mxu0
    %v5248 = vadd.f32 %v5135, %v5247
    %5249 = vmatmul.f32.gmra.mxu0 %v4608
    %v5250 = vpop.f32.mrf.mxu0
    %v5251 = vadd.f32 %v5138, %v5250
    %5252 = vdwg.mxu0
    %v5253 = vmax.f32 %v5158, 0.0
    %v5254 = vmax.f32 %v5161, 0.0
    %v5255 = vmax.f32 %v5164, 0.0
    %v5256 = vmax.f32 %v5167, 0.0
    %v5257 = vmax.f32 %v5170, 0.0
    %v5258 = vmax.f32 %v5173, 0.0
    %v5259 = vmax.f32 %v5176, 0.0
    %v5260 = vmax.f32 %v5179, 0.0
    %v5261 = vmax.f32 %v5182, 0.0
    %v5262 = vmax.f32 %v5185, 0.0
    %v5263 = vmax.f32 %v5188, 0.0
    %v5264 = vmax.f32 %v5191, 0.0
    %v5265 = vmax.f32 %v5194, 0.0
    %v5266 = vmax.f32 %v5197, 0.0
    %v5267 = vmax.f32 %v5200, 0.0
    %v5268 = vmax.f32 %v5203, 0.0
    %v5269 = vmax.f32 %v5206, 0.0
    %v5270 = vmax.f32 %v5209, 0.0
    %v5271 = vmax.f32 %v5212, 0.0
    %v5272 = vmax.f32 %v5215, 0.0
    %v5273 = vmax.f32 %v5218, 0.0
    %v5274 = vmax.f32 %v5221, 0.0
    %v5275 = vmax.f32 %v5224, 0.0
    %v5276 = vmax.f32 %v5227, 0.0
    %v5277 = vmax.f32 %v5230, 0.0
    %v5278 = vmax.f32 %v5233, 0.0
    %v5279 = vmax.f32 %v5236, 0.0
    %v5280 = vmax.f32 %v5239, 0.0
    %v5281 = vmax.f32 %v5242, 0.0
    %v5282 = vmax.f32 %v5245, 0.0
    %v5283 = vmax.f32 %v5248, 0.0
    %v5284 = vmax.f32 %v5251, 0.0
    %v5285 = vld [vmem:[%s7] sm:$0xff]
    %v5286 = vld [vmem:[%s7 + $0x8] sm:$0xff]
    %v5287 = vld [vmem:[%s7 + $0x10] sm:$0xff]
    %v5288 = vld [vmem:[%s7 + $0x18] sm:$0xff]
    %v5289 = vld [vmem:[%s7 + $0x20] sm:$0xff]
    %v5290 = vld [vmem:[%s7 + $0x28] sm:$0xff]
    %v5291 = vld [vmem:[%s7 + $0x30] sm:$0xff]
    %v5292 = vld [vmem:[%s7 + $0x38] sm:$0xff]
    %v5293 = vld [vmem:[%s7 + $0x40] sm:$0xff]
    %v5294 = vld [vmem:[%s7 + $0x48] sm:$0xff]
    %v5295 = vld [vmem:[%s7 + $0x50] sm:$0xff]
    %v5296 = vld [vmem:[%s7 + $0x58] sm:$0xff]
    %v5297 = vld [vmem:[%s7 + $0x60] sm:$0xff]
    %v5298 = vld [vmem:[%s7 + $0x68] sm:$0xff]
    %v5299 = vld [vmem:[%s7 + $0x70] sm:$0xff]
    %v5300 = vld [vmem:[%s7 + $0x78] sm:$0xff]
    %v5301 = vld [vmem:[%s7 + $0x80] sm:$0xff]
    %v5302 = vld [vmem:[%s7 + $0x88] sm:$0xff]
    %v5303 = vld [vmem:[%s7 + $0x90] sm:$0xff]
    %v5304 = vld [vmem:[%s7 + $0x98] sm:$0xff]
    %v5305 = vld [vmem:[%s7 + $0xa0] sm:$0xff]
    %v5306 = vld [vmem:[%s7 + $0xa8] sm:$0xff]
    %v5307 = vld [vmem:[%s7 + $0xb0] sm:$0xff]
    %v5308 = vld [vmem:[%s7 + $0xb8] sm:$0xff]
    %v5309 = vld [vmem:[%s7 + $0xc0] sm:$0xff]
    %v5310 = vld [vmem:[%s7 + $0xc8] sm:$0xff]
    %v5311 = vld [vmem:[%s7 + $0xd0] sm:$0xff]
    %v5312 = vld [vmem:[%s7 + $0xd8] sm:$0xff]
    %v5313 = vld [vmem:[%s7 + $0xe0] sm:$0xff]
    %v5314 = vld [vmem:[%s7 + $0xe8] sm:$0xff]
    %v5315 = vld [vmem:[%s7 + $0xf0] sm:$0xff]
    %v5316 = vld [vmem:[%s7 + $0xf8] sm:$0xff]
    %5318 = vset.pattern.permute.xlu0 0
    %5319 = vperm.xlu0 %5318, %v5285
    %v5320 = vpop.permute.xlu0 %5319
    %5323 = vset.pattern.permute.xlu0 0
    %5324 = vperm.xlu0 %5323, %v5286
    %v5325 = vpop.permute.xlu0 %5324
    %5328 = vset.pattern.permute.xlu0 0
    %5329 = vperm.xlu0 %5328, %v5287
    %v5330 = vpop.permute.xlu0 %5329
    %5333 = vset.pattern.permute.xlu0 0
    %5334 = vperm.xlu0 %5333, %v5288
    %v5335 = vpop.permute.xlu0 %5334
    %5338 = vset.pattern.permute.xlu0 0
    %5339 = vperm.xlu0 %5338, %v5289
    %v5340 = vpop.permute.xlu0 %5339
    %5343 = vset.pattern.permute.xlu0 0
    %5344 = vperm.xlu0 %5343, %v5290
    %v5345 = vpop.permute.xlu0 %5344
    %5348 = vset.pattern.permute.xlu0 0
    %5349 = vperm.xlu0 %5348, %v5291
    %v5350 = vpop.permute.xlu0 %5349
    %5353 = vset.pattern.permute.xlu0 0
    %5354 = vperm.xlu0 %5353, %v5292
    %v5355 = vpop.permute.xlu0 %5354
    %5358 = vset.pattern.permute.xlu0 0
    %5359 = vperm.xlu0 %5358, %v5293
    %v5360 = vpop.permute.xlu0 %5359
    %5363 = vset.pattern.permute.xlu0 0
    %5364 = vperm.xlu0 %5363, %v5294
    %v5365 = vpop.permute.xlu0 %5364
    %5368 = vset.pattern.permute.xlu0 0
    %5369 = vperm.xlu0 %5368, %v5295
    %v5370 = vpop.permute.xlu0 %5369
    %5373 = vset.pattern.permute.xlu0 0
    %5374 = vperm.xlu0 %5373, %v5296
    %v5375 = vpop.permute.xlu0 %5374
    %5378 = vset.pattern.permute.xlu0 0
    %5379 = vperm.xlu0 %5378, %v5297
    %v5380 = vpop.permute.xlu0 %5379
    %5383 = vset.pattern.permute.xlu0 0
    %5384 = vperm.xlu0 %5383, %v5298
    %v5385 = vpop.permute.xlu0 %5384
    %5388 = vset.pattern.permute.xlu0 0
    %5389 = vperm.xlu0 %5388, %v5299
    %v5390 = vpop.permute.xlu0 %5389
    %5393 = vset.pattern.permute.xlu0 0
    %5394 = vperm.xlu0 %5393, %v5300
    %v5395 = vpop.permute.xlu0 %5394
    %5398 = vset.pattern.permute.xlu0 0
    %5399 = vperm.xlu0 %5398, %v5301
    %v5400 = vpop.permute.xlu0 %5399
    %5403 = vset.pattern.permute.xlu0 0
    %5404 = vperm.xlu0 %5403, %v5302
    %v5405 = vpop.permute.xlu0 %5404
    %5408 = vset.pattern.permute.xlu0 0
    %5409 = vperm.xlu0 %5408, %v5303
    %v5410 = vpop.permute.xlu0 %5409
    %5413 = vset.pattern.permute.xlu0 0
    %5414 = vperm.xlu0 %5413, %v5304
    %v5415 = vpop.permute.xlu0 %5414
    %5418 = vset.pattern.permute.xlu0 0
    %5419 = vperm.xlu0 %5418, %v5305
    %v5420 = vpop.permute.xlu0 %5419
    %5423 = vset.pattern.permute.xlu0 0
    %5424 = vperm.xlu0 %5423, %v5306
    %v5425 = vpop.permute.xlu0 %5424
    %5428 = vset.pattern.permute.xlu0 0
    %5429 = vperm.xlu0 %5428, %v5307
    %v5430 = vpop.permute.xlu0 %5429
    %5433 = vset.pattern.permute.xlu0 0
    %5434 = vperm.xlu0 %5433, %v5308
    %v5435 = vpop.permute.xlu0 %5434
    %5438 = vset.pattern.permute.xlu0 0
    %5439 = vperm.xlu0 %5438, %v5309
    %v5440 = vpop.permute.xlu0 %5439
    %5443 = vset.pattern.permute.xlu0 0
    %5444 = vperm.xlu0 %5443, %v5310
    %v5445 = vpop.permute.xlu0 %5444
    %5448 = vset.pattern.permute.xlu0 0
    %5449 = vperm.xlu0 %5448, %v5311
    %v5450 = vpop.permute.xlu0 %5449
    %5453 = vset.pattern.permute.xlu0 0
    %5454 = vperm.xlu0 %5453, %v5312
    %v5455 = vpop.permute.xlu0 %5454
    %5458 = vset.pattern.permute.xlu0 0
    %5459 = vperm.xlu0 %5458, %v5313
    %v5460 = vpop.permute.xlu0 %5459
    %5463 = vset.pattern.permute.xlu0 0
    %5464 = vperm.xlu0 %5463, %v5314
    %v5465 = vpop.permute.xlu0 %5464
    %5468 = vset.pattern.permute.xlu0 0
    %5469 = vperm.xlu0 %5468, %v5315
    %v5470 = vpop.permute.xlu0 %5469
    %5473 = vset.pattern.permute.xlu0 0
    %5474 = vperm.xlu0 %5473, %v5316
    %v5475 = vpop.permute.xlu0 %5474
    %v5477 = vmul.f32 %v5253, %v5320
    %v5478 = vmul.f32 %v5254, %v5325
    %v5479 = vmul.f32 %v5255, %v5330
    %v5480 = vmul.f32 %v5256, %v5335
    %v5481 = vmul.f32 %v5257, %v5340
    %v5482 = vmul.f32 %v5258, %v5345
    %v5483 = vmul.f32 %v5259, %v5350
    %v5484 = vmul.f32 %v5260, %v5355
    %v5485 = vmul.f32 %v5261, %v5360
    %v5486 = vmul.f32 %v5262, %v5365
    %v5487 = vmul.f32 %v5263, %v5370
    %v5488 = vmul.f32 %v5264, %v5375
    %v5489 = vmul.f32 %v5265, %v5380
    %v5490 = vmul.f32 %v5266, %v5385
    %v5491 = vmul.f32 %v5267, %v5390
    %v5492 = vmul.f32 %v5268, %v5395
    %v5493 = vmul.f32 %v5269, %v5400
    %v5494 = vmul.f32 %v5270, %v5405
    %v5495 = vmul.f32 %v5271, %v5410
    %v5496 = vmul.f32 %v5272, %v5415
    %v5497 = vmul.f32 %v5273, %v5420
    %v5498 = vmul.f32 %v5274, %v5425
    %v5499 = vmul.f32 %v5275, %v5430
    %v5500 = vmul.f32 %v5276, %v5435
    %v5501 = vmul.f32 %v5277, %v5440
    %v5502 = vmul.f32 %v5278, %v5445
    %v5503 = vmul.f32 %v5279, %v5450
    %v5504 = vmul.f32 %v5280, %v5455
    %v5505 = vmul.f32 %v5281, %v5460
    %v5506 = vmul.f32 %v5282, %v5465
    %v5507 = vmul.f32 %v5283, %v5470
    %v5508 = vmul.f32 %v5284, %v5475
    %vm5509 = vcmask 64512
    %v5510 = vsel %vm5509, %v5477, 0.0
    %v5511 = vsel %vm5509, %v5478, 0.0
    %v5512 = vadd.f32 %v5510, %v5511
    %v5513 = vsel %vm5509, %v5479, 0.0
    %v5514 = vadd.f32 %v5512, %v5513
    %v5515 = vsel %vm5509, %v5480, 0.0
    %v5516 = vadd.f32 %v5514, %v5515
    %v5517 = vsel %vm5509, %v5481, 0.0
    %v5518 = vadd.f32 %v5516, %v5517
    %v5519 = vsel %vm5509, %v5482, 0.0
    %v5520 = vadd.f32 %v5518, %v5519
    %v5521 = vsel %vm5509, %v5483, 0.0
    %v5522 = vadd.f32 %v5520, %v5521
    %v5523 = vsel %vm5509, %v5484, 0.0
    %v5524 = vadd.f32 %v5522, %v5523
    %v5525 = vsel %vm5509, %v5485, 0.0
    %v5526 = vadd.f32 %v5524, %v5525
    %v5527 = vsel %vm5509, %v5486, 0.0
    %v5528 = vadd.f32 %v5526, %v5527
    %v5529 = vsel %vm5509, %v5487, 0.0
    %v5530 = vadd.f32 %v5528, %v5529
    %v5531 = vsel %vm5509, %v5488, 0.0
    %v5532 = vadd.f32 %v5530, %v5531
    %v5533 = vsel %vm5509, %v5489, 0.0
    %v5534 = vadd.f32 %v5532, %v5533
    %v5535 = vsel %vm5509, %v5490, 0.0
    %v5536 = vadd.f32 %v5534, %v5535
    %v5537 = vsel %vm5509, %v5491, 0.0
    %v5538 = vadd.f32 %v5536, %v5537
    %v5539 = vsel %vm5509, %v5492, 0.0
    %v5540 = vadd.f32 %v5538, %v5539
    %v5541 = vsel %vm5509, %v5493, 0.0
    %v5542 = vadd.f32 %v5540, %v5541
    %v5543 = vsel %vm5509, %v5494, 0.0
    %v5544 = vadd.f32 %v5542, %v5543
    %v5545 = vsel %vm5509, %v5495, 0.0
    %v5546 = vadd.f32 %v5544, %v5545
    %v5547 = vsel %vm5509, %v5496, 0.0
    %v5548 = vadd.f32 %v5546, %v5547
    %v5549 = vsel %vm5509, %v5497, 0.0
    %v5550 = vadd.f32 %v5548, %v5549
    %v5551 = vsel %vm5509, %v5498, 0.0
    %v5552 = vadd.f32 %v5550, %v5551
    %v5553 = vsel %vm5509, %v5499, 0.0
    %v5554 = vadd.f32 %v5552, %v5553
    %v5555 = vsel %vm5509, %v5500, 0.0
    %v5556 = vadd.f32 %v5554, %v5555
    %v5557 = vsel %vm5509, %v5501, 0.0
    %v5558 = vadd.f32 %v5556, %v5557
    %v5559 = vsel %vm5509, %v5502, 0.0
    %v5560 = vadd.f32 %v5558, %v5559
    %v5561 = vsel %vm5509, %v5503, 0.0
    %v5562 = vadd.f32 %v5560, %v5561
    %v5563 = vsel %vm5509, %v5504, 0.0
    %v5564 = vadd.f32 %v5562, %v5563
    %v5565 = vsel %vm5509, %v5505, 0.0
    %v5566 = vadd.f32 %v5564, %v5565
    %v5567 = vsel %vm5509, %v5506, 0.0
    %v5568 = vadd.f32 %v5566, %v5567
    %v5569 = vsel %vm5509, %v5507, 0.0
    %v5570 = vadd.f32 %v5568, %v5569
    %v5571 = vsel %vm5509, %v5508, 0.0
    %v5572 = vadd.f32 %v5570, %v5571
    %v5573 = vrot.slane %v5572, 4
    %v5574 = vadd.f32 %v5572, %v5573
    %v5575 = vrot.slane %v5574, 2
    %v5576 = vadd.f32 %v5574, %v5575
    %v5577 = vrot.slane %v5576, 1
    %v5578 = vadd.f32 %v5576, %v5577
    %v5579 = vld [vmem:[#allocation2] sm:$0x1]
    %5581 = vset.pattern.permute.xlu0 0
    %5582 = vperm.xlu0 %5581, %v5579
    %v5583 = vpop.permute.xlu0 %5582
    %v5585 = vperm.slane %v5583, 0
    %v5586 = vadd.f32 %v5578, %v5585
    %v5587 = vsub.f32 0.0, %v5586
    %v5588 = vmul.f32 %v5587, 1.442695
    %v5589 = vpow.pop %v5588
    %v5590 = vadd.f32 %v5589, 1.0
    %v5591 = vrcp.pop %v5590
    %v5592 = vmul.f32 %v5590, %v5591
    %v5593 = vsub.f32 1.0, %v5592
    %v5594 = vmul.f32 %v5591, %v5593
    %v5595 = vadd.f32 %v5591, %v5594
    %vm5596 = vweird.f32 %v5590
    %vm5597 = vweird.f32 %v5591
    %vm5598 = vmor %vm5596, %vm5597
    %v5599 = vsel %vm5598, %v5591, %v5595
    %v5600 = vand.u32 2147483647, %v5590
    %vm5601 = vcmp.eq.f32.partialorder %v5600, 8.507059e+37
    %v5602 = vand.u32 %v5590, 2147483648
    %v5603 = vor.u32 1.1754944e-38, %v5602
    %v5604 = vsel %vm5601, %v5603, %v5599
    %v5605 = vmul.f32 1.0, %v5604
    %vm5606 = vcmask 57344
    %5607 = vst.msk [vmem:[#allocation3] sm:$0x1] %vm5606, %v5605
    // Predicated region
    $region38: #{discriminator_forward.1} parent=1 // pred_check
      _
    $region39: #{discriminator_forward.1} parent=1 // pred_check_branch
      %5609 = sbr.rel (0) target = $region41
    $region40: #{discriminator_forward.1} parent=1 // pred_region
      %5611 = vsyncadd [#allocation4], 0
      %s5613 = sshll.u32 [#allocation3], 4
      %s5614 = int_to_ptr.vmem [resolvable:$true] %s5613
      %s5615 = sshll.u32 %s9, 4
      %s5616 = int_to_ptr.hbm [resolvable:$true] %s5615
      %5618 = dma.vmem_to_hbm [thread:$0]  %s5614, 16, %s5616, [#allocation4]
    $region41: #{discriminator_forward.1} parent=1 // pred_fallthru
      _
    // Predicated region
    $region42: #{discriminator_forward.1} parent=1 // pred_check
      _
    $region43: #{discriminator_forward.1} parent=1 // pred_check_branch
      %5620 = sbr.rel (0) target = $region45
    $region44: #{discriminator_forward.1} parent=1 // pred_region
      %5622 = dma.done [#allocation4], 16
    $region45: #{discriminator_forward.1} parent=1 // pred_fallthru
      _
    %5623 = vsyncpa [#allocation4], 1

</llo_original>
